<compile_context>
chip_gen: v7x
topology: tpu7x:2x2x1
jax: 0.10.0
libtpu: 0.0.40
codegen_flags: <defaults>
</compile_context>

<pallas_src>
import jax
import jax.numpy as jnp
from jax.experimental import pallas as pl
from jax.experimental.pallas import tpu as pltpu

B = 2            # batch
S = 8            # text sequence length
IMG_DIM = 2048   # image_embed_dim
TXT_DIM = 512    # text_embed_dim (t5-small hidden size)
E = 512          # common_embed_dim
H = 8            # num_heads (only affects the — exactly cancelled — softmax path)


def _alignment_kernel(img_ref, txt_ref,
                      wimg_ref, bimg_ref, wtxt_ref, btxt_ref,
                      wvo_ref, bvo_ref, wfc_ref, bfc_ref,
                      out_ref):
    f32 = jnp.float32

    # ---- text feature pooling: mean over the sequence axis -----------------
    txt_feat = jnp.mean(txt_ref[...], axis=1)                          # [B, TXT_DIM]
    img_feat = img_ref[...]                                            # [B, IMG_DIM]

    # ---- CrossAttention.image_proj / text_proj (bf16 weights, f32 accumulate) ----
    img_p = jnp.dot(img_feat, wimg_ref[...].astype(f32),
                    preferred_element_type=f32) + bimg_ref[...]        # [B, E]
    txt_p = jnp.dot(txt_feat, wtxt_ref[...].astype(f32),
                    preferred_element_type=f32) + btxt_ref[...]        # [B, E]

    # ---- merged single-token MHA branches (softmax over one key == 1) ------
    # attended_img + attended_txt == (img_p + txt_p) @ (w_v @ w_o) + 2*(b_v @ w_o + b_o)
    combined = jnp.dot(img_p + txt_p, wvo_ref[...].astype(f32),
                       preferred_element_type=f32) + bvo_ref[...]      # [B, E]

    # ---- final fc: Linear(E -> 1) as a VPU multiply + lane reduce ----------
    out_ref[...] = jnp.sum(combined * wfc_ref[...], axis=-1,
                           keepdims=True) + bfc_ref[...]               # [B, 1]


def alignment_forward(image_features, text_hidden, prepped):
    # NOTE: for high-throughput serving, add a batch grid axis with
    # dimension_semantics=("parallel",) and constant index_maps for the weights so
    # they stay VMEM-resident across grid steps; at B=2 a single invocation is used.
    b = image_features.shape[0]
    args = (image_features, text_hidden,
            prepped["w_img"], prepped["b_img"], prepped["w_txt"], prepped["b_txt"],
            prepped["w_vo"], prepped["b_vo"], prepped["w_fc"], prepped["b_fc"])
    return pl.pallas_call(
        _alignment_kernel,
        out_shape=jax.ShapeDtypeStruct((b, 1), jnp.float32),
        in_specs=[pl.BlockSpec(memory_space=pltpu.MemorySpace.VMEM)] * len(args),
        out_specs=pl.BlockSpec(memory_space=pltpu.MemorySpace.VMEM),
        # ~3 MiB bf16 weights + ~6 MiB transient f32 up-casts; 32 MiB is safe on
        # v5e/v6e (128 MiB physical) and within v7x's 64 MiB per-TC VMEM.
        compiler_params=pltpu.CompilerParams(vmem_limit_bytes=32 * 1024 * 1024),
    )(*args)


def build_params(key):
    """Deterministic synthetic weights with the module's shapes (stored as [in, out])."""
    ks = list(jax.random.split(key, 8))

    def linear(k, fan_in, fan_out):
        kw, kb = jax.random.split(k)
        w = jax.random.normal(kw, (fan_in, fan_out), jnp.float32) / jnp.sqrt(
            jnp.float32(fan_in))
        b = jax.random.normal(kb, (1, fan_out), jnp.float32) * 0.01
        return w, b

    p = {}
    p["w_img"], p["b_img"] = linear(ks[0], IMG_DIM, E)   # image_proj: 2048 -> 512
    p["w_txt"], p["b_txt"] = linear(ks[1], TXT_DIM, E)   # text_proj : 512  -> 512
    # MultiheadAttention in_proj (q/k/v) + out_proj, embed_dim=512, shared for both calls.
    # (q/k are created for module fidelity but cancel exactly: softmax over 1 key == 1.)
    p["w_q"], p["b_q"] = linear(ks[2], E, E)
    p["w_k"], p["b_k"] = linear(ks[3], E, E)
    p["w_v"], p["b_v"] = linear(ks[4], E, E)
    p["w_o"], p["b_o"] = linear(ks[5], E, E)
    p["w_fc"], p["b_fc"] = linear(ks[6], E, 1)           # fc: 512 -> 1
    return p


def prepare_params(p):
    """Host-side inference prep: fold w_v @ w_o, merge the two MHA branches' biases,
    and cast the large weight matrices to bfloat16 (halves HBM weight traffic)."""
    w_vo = p["w_v"] @ p["w_o"]                            # [E, E], f32 fold
    b_vo = 2.0 * (p["b_v"] @ p["w_o"] + p["b_o"])         # [1, E]
    return {
        "w_img": p["w_img"].astype(jnp.bfloat16),         # [IMG_DIM, E]
        "b_img": p["b_img"],                              # [1, E] f32
        "w_txt": p["w_txt"].astype(jnp.bfloat16),         # [TXT_DIM, E]
        "b_txt": p["b_txt"],                              # [1, E] f32
        "w_vo":  w_vo.astype(jnp.bfloat16),               # [E, E]
        "b_vo":  b_vo,                                    # [1, E] f32
        "w_fc":  p["w_fc"].reshape(1, E),                 # [1, E] f32 (tiny)
        "b_fc":  p["b_fc"].reshape(1, 1),                 # [1, 1] f32
    }


def reference_forward(image_features, text_hidden, p):
    """Pure-JAX full-precision reference of the module's forward pass.
    (softmax over a single key position == 1, so q/k projections cancel exactly)."""
    txt_feat = text_hidden.mean(axis=1)
    img_p = image_features @ p["w_img"] + p["b_img"]
    txt_p = txt_feat @ p["w_txt"] + p["b_txt"]

    def mha(q_in, kv_in):
        v = kv_in @ p["w_v"] + p["b_v"]
        return v @ p["w_o"] + p["b_o"]

    combined = mha(img_p, txt_p) + mha(txt_p, img_p)
    return combined @ p["w_fc"] + p["b_fc"]


def reference_forward_prepared(image_features, text_hidden, q):
    """Pure-JAX reference using the exact prepared (fused, bf16) weights the kernel sees."""
    txt_feat = text_hidden.mean(axis=1)
    img_p = image_features @ q["w_img"].astype(jnp.float32) + q["b_img"]
    txt_p = txt_feat @ q["w_txt"].astype(jnp.float32) + q["b_txt"]
    combined = (img_p + txt_p) @ q["w_vo"].astype(jnp.float32) + q["b_vo"]
    return jnp.sum(combined * q["w_fc"], axis=-1, keepdims=True) + q["b_fc"]


if __name__ == "__main__":
    root = jax.random.PRNGKey(0)
    k_img, k_txt, k_par = jax.random.split(root, 3)

    image_features = jax.random.normal(k_img, (B, IMG_DIM), jnp.float32)
    text_hidden = jax.random.normal(k_txt, (B, S, TXT_DIM), jnp.float32)
    params = build_params(k_par)
    prepped = prepare_params(params)

    out = alignment_forward(image_features, text_hidden, prepped)
    out = jax.block_until_ready(out)
    assert out.shape == (B, 1)

    # Tight check: kernel vs pure-JAX with the identical (fused, bf16) weights.
    ref_q = reference_forward_prepared(image_features, text_hidden, prepped)
    assert jnp.allclose(out, ref_q, atol=1e-3, rtol=1e-3), (out, ref_q)

    # Semantics check: kernel vs the full f32 module math (slack covers bf16 weight quantization).
    ref = reference_forward(image_features, text_hidden, params)
    assert jnp.allclose(out, ref, atol=3e-2, rtol=3e-2), (out, ref)

    print("KERNEL_OK")
</pallas_src>

<mosaic_0001>
module attributes {stable_mosaic.version = 11 : i64} {
  func.func @_alignment_kernel(%arg0: memref<2x2048xf32, #tpu.memory_space<vmem>>, %arg1: memref<2x8x512xf32, #tpu.memory_space<vmem>>, %arg2: memref<2048x512xbf16, #tpu.memory_space<vmem>>, %arg3: memref<1x512xf32, #tpu.memory_space<vmem>>, %arg4: memref<512x512xbf16, #tpu.memory_space<vmem>>, %arg5: memref<1x512xf32, #tpu.memory_space<vmem>>, %arg6: memref<512x512xbf16, #tpu.memory_space<vmem>>, %arg7: memref<1x512xf32, #tpu.memory_space<vmem>>, %arg8: memref<1x512xf32, #tpu.memory_space<vmem>>, %arg9: memref<1x1xf32, #tpu.memory_space<vmem>>, %arg10: memref<2x1xf32, #tpu.memory_space<vmem>>) attributes {dimension_semantics = [], scalar_prefetch = 0 : i64, scratch_operands = 0 : i64, tpu.core_type = #tpu.core_type<tc>} {
    %c0 = arith.constant 0 : index
    %c0_0 = arith.constant 0 : index
    %c0_1 = arith.constant 0 : index
    %0 = vector.load %arg1[%c0, %c0_0, %c0_1] : memref<2x8x512xf32, #tpu.memory_space<vmem>>, vector<2x8x512xf32>
    %cst = arith.constant dense<0.000000e+00> : vector<2x512xf32>
    %1 = vector.multi_reduction <add>, %0, %cst [1] : vector<2x8x512xf32> to vector<2x512xf32>
    %cst_2 = arith.constant 8.000000e+00 : f32
    %2 = vector.broadcast %cst_2 : f32 to vector<2x512xf32>
    %3 = arith.divf %1, %2 : vector<2x512xf32>
    %c0_3 = arith.constant 0 : index
    %c0_4 = arith.constant 0 : index
    %4 = vector.load %arg0[%c0_3, %c0_4] : memref<2x2048xf32, #tpu.memory_space<vmem>>, vector<2x2048xf32>
    %c0_5 = arith.constant 0 : index
    %c0_6 = arith.constant 0 : index
    %5 = vector.load %arg2[%c0_5, %c0_6] : memref<2048x512xbf16, #tpu.memory_space<vmem>>, vector<2048x512xbf16>
    %6 = arith.extf %5 : vector<2048x512xbf16> to vector<2048x512xf32>
    %cst_7 = arith.constant dense<0.000000e+00> : vector<2x512xf32>
    %7 = tpu.matmul %4, %6, %cst_7 {dimension_numbers = #tpu.dot_dimension_numbers<[1], [0], [0], [1], [0, 0, 1, 1], [], []>} : vector<2x2048xf32>, vector<2048x512xf32>, vector<2x512xf32> -> vector<2x512xf32>
    %c0_8 = arith.constant 0 : index
    %c0_9 = arith.constant 0 : index
    %8 = vector.load %arg3[%c0_8, %c0_9] : memref<1x512xf32, #tpu.memory_space<vmem>>, vector<1x512xf32>
    %9 = vector.broadcast %8 : vector<1x512xf32> to vector<2x512xf32>
    %10 = arith.addf %7, %9 : vector<2x512xf32>
    %c0_10 = arith.constant 0 : index
    %c0_11 = arith.constant 0 : index
    %11 = vector.load %arg4[%c0_10, %c0_11] : memref<512x512xbf16, #tpu.memory_space<vmem>>, vector<512x512xbf16>
    %12 = arith.extf %11 : vector<512x512xbf16> to vector<512x512xf32>
    %cst_12 = arith.constant dense<0.000000e+00> : vector<2x512xf32>
    %13 = tpu.matmul %3, %12, %cst_12 {dimension_numbers = #tpu.dot_dimension_numbers<[1], [0], [0], [1], [0, 0, 1, 1], [], []>} : vector<2x512xf32>, vector<512x512xf32>, vector<2x512xf32> -> vector<2x512xf32>
    %c0_13 = arith.constant 0 : index
    %c0_14 = arith.constant 0 : index
    %14 = vector.load %arg5[%c0_13, %c0_14] : memref<1x512xf32, #tpu.memory_space<vmem>>, vector<1x512xf32>
    %15 = vector.broadcast %14 : vector<1x512xf32> to vector<2x512xf32>
    %16 = arith.addf %13, %15 : vector<2x512xf32>
    %17 = arith.addf %10, %16 : vector<2x512xf32>
    %c0_15 = arith.constant 0 : index
    %c0_16 = arith.constant 0 : index
    %18 = vector.load %arg6[%c0_15, %c0_16] : memref<512x512xbf16, #tpu.memory_space<vmem>>, vector<512x512xbf16>
    %19 = arith.extf %18 : vector<512x512xbf16> to vector<512x512xf32>
    %cst_17 = arith.constant dense<0.000000e+00> : vector<2x512xf32>
    %20 = tpu.matmul %17, %19, %cst_17 {dimension_numbers = #tpu.dot_dimension_numbers<[1], [0], [0], [1], [0, 0, 1, 1], [], []>} : vector<2x512xf32>, vector<512x512xf32>, vector<2x512xf32> -> vector<2x512xf32>
    %c0_18 = arith.constant 0 : index
    %c0_19 = arith.constant 0 : index
    %21 = vector.load %arg7[%c0_18, %c0_19] : memref<1x512xf32, #tpu.memory_space<vmem>>, vector<1x512xf32>
    %22 = vector.broadcast %21 : vector<1x512xf32> to vector<2x512xf32>
    %23 = arith.addf %20, %22 : vector<2x512xf32>
    %c0_20 = arith.constant 0 : index
    %c0_21 = arith.constant 0 : index
    %24 = vector.load %arg8[%c0_20, %c0_21] : memref<1x512xf32, #tpu.memory_space<vmem>>, vector<1x512xf32>
    %25 = vector.broadcast %24 : vector<1x512xf32> to vector<2x512xf32>
    %26 = arith.mulf %23, %25 : vector<2x512xf32>
    %cst_22 = arith.constant dense<0.000000e+00> : vector<2xf32>
    %27 = vector.multi_reduction <add>, %26, %cst_22 [1] : vector<2x512xf32> to vector<2xf32>
    %28 = vector.shape_cast %27 : vector<2xf32> to vector<2x1xf32>
    %c0_23 = arith.constant 0 : index
    %c0_24 = arith.constant 0 : index
    %29 = vector.load %arg9[%c0_23, %c0_24] : memref<1x1xf32, #tpu.memory_space<vmem>>, vector<1x1xf32>
    %30 = vector.broadcast %29 : vector<1x1xf32> to vector<2x1xf32>
    %31 = arith.addf %28, %30 : vector<2x1xf32>
    %c0_25 = arith.constant 0 : index
    %c0_26 = arith.constant 0 : index
    %32 = vector.load %arg10[%c0_25, %c0_26] : memref<2x1xf32, #tpu.memory_space<vmem>>, vector<2x1xf32>
    tpu.vector_store %arg10[%c0_25, %c0_26], %31 {strides = array<i32>} : memref<2x1xf32, #tpu.memory_space<vmem>>, vector<2x1xf32>,
    return
  }
}

</mosaic_0001>

<llo_original>
// kernel: tpu_custom_call.1
$region0: #{tpu_custom_call.1}
  #allocation0 [shape = 'u32[]', space=smem, size = 0x4, offset = 0x4, fixed_abs, tag = 'smem constant byte address 0x4 - core index']
  #allocation1 [shape = 'u32[144,128]{1,0:T(1,128)}', space=vmem, size = 0x12000, scoped, tag = 'internal scratch']
  #allocation2 [shape = 'f32[1,1]{1,0:T(1,128)S(1)}', space=vmem, size = 0x200, scoped, tag = 'scoped memory for tpu_custom_call.1']
  %s0 = inlined_call_operand.hbm [shape: f32[2,2048], index: 0, kind: input, shape index: {}]
  %s1 = inlined_call_operand.hbm [shape: f32[2,8,512], index: 1, kind: input, shape index: {}]
  %s2 = inlined_call_operand.hbm [shape: bf16[2048,512], index: 2, kind: input, shape index: {}]
  %s3 = inlined_call_operand.hbm [shape: f32[1,512], index: 3, kind: input, shape index: {}]
  %s4 = inlined_call_operand.hbm [shape: bf16[512,512], index: 4, kind: input, shape index: {}]
  %s5 = inlined_call_operand.hbm [shape: f32[1,512], index: 5, kind: input, shape index: {}]
  %s6 = inlined_call_operand.hbm [shape: bf16[512,512], index: 6, kind: input, shape index: {}]
  %s7 = inlined_call_operand.hbm [shape: f32[1,512], index: 7, kind: input, shape index: {}]
  %s8 = inlined_call_operand.hbm [shape: f32[1,512], index: 8, kind: input, shape index: {}]
  %s9 = inlined_call_operand.<no memory space> [shape: f32[1,1], index: 9, kind: input, shape index: {}]
  %s10 = inlined_call_operand.vmem [shape: f32[2,1], index: 10, kind: output, shape index: {}]
  %s11 = sld [smem:[#allocation0]]
  $region86: #{tpu_custom_call.1} parent=0
    _
  %s13 = ssub.s32 1, %s11
  %s14 = scalar_select 0, %s13, %s11
  %v15 = vstv %s9
  %16 = vst [vmem:[#allocation2] sm:$0x1] %v15
  $region1: #{tpu_custom_call.1} parent=0
    #allocation3 [shape = 'u8[16384]{0}', space=vmem, size = 0x4000, scoped, tag = 'input window, operand 0, single buffered']
    #allocation4 [shape = 's32[1]{0}', space=sflag, size = 0x4, scoped, tag = 'scoped memory for tpu_custom_call.1']
    #allocation5 [shape = 'u8[32768]{0}', space=vmem, size = 0x8000, scoped, tag = 'input window, operand 1, single buffered']
    #allocation6 [shape = 's32[1]{0}', space=sflag, size = 0x4, scoped, tag = 'scoped memory for tpu_custom_call.1']
    #allocation7 [shape = 'u8[2097152]{0}', space=vmem, size = 0x200000, scoped, tag = 'input window, operand 2, single buffered']
    #allocation8 [shape = 'u8[2048]{0}', space=vmem, size = 0x800, scoped, tag = 'input window, operand 3, single buffered']
    #allocation9 [shape = 's32[1]{0}', space=sflag, size = 0x4, scoped, tag = 'scoped memory for tpu_custom_call.1']
    #allocation10 [shape = 'u8[524288]{0}', space=vmem, size = 0x80000, scoped, tag = 'input window, operand 4, single buffered']
    #allocation11 [shape = 'u8[2048]{0}', space=vmem, size = 0x800, scoped, tag = 'input window, operand 5, single buffered']
    #allocation12 [shape = 's32[1]{0}', space=sflag, size = 0x4, scoped, tag = 'scoped memory for tpu_custom_call.1']
    #allocation13 [shape = 'u8[524288]{0}', space=vmem, size = 0x80000, scoped, tag = 'input window, operand 6, single buffered']
    #allocation14 [shape = 'u8[2048]{0}', space=vmem, size = 0x800, scoped, tag = 'input window, operand 7, single buffered']
    #allocation15 [shape = 's32[1]{0}', space=sflag, size = 0x4, scoped, tag = 'scoped memory for tpu_custom_call.1']
    #allocation16 [shape = 'u8[2048]{0}', space=vmem, size = 0x800, scoped, tag = 'input window, operand 8, single buffered']
    %17 = vsyncpa [#allocation4], 0
    %18 = vsyncpa [#allocation6], 0
    %19 = vsyncpa [#allocation9], 0
    %20 = vsyncpa [#allocation12], 0
    %21 = vsyncpa [#allocation15], 0
    // Predicated region
    $region2: #{tpu_custom_call.1} parent=1 // pred_check
      _
    $region3: #{tpu_custom_call.1} parent=1 // pred_check_branch
      %23 = sbr.rel (0) target = $region5
    $region4: #{tpu_custom_call.1} parent=1 // pred_region
      %s25 = ssub.s32 512, 512
      %26 = vsyncadd [#allocation4], %s25
      %s28 = sshll.u32 [#allocation3], 4
      %s29 = int_to_ptr.vmem [resolvable:$true] %s28
      %31 = dma.hbm_to_vmem [thread:$0]  %s0, 512, %s29, [#allocation4]
    $region5: #{tpu_custom_call.1} parent=1 // pred_fallthru
      _
    // Predicated region
    $region6: #{tpu_custom_call.1} parent=1 // pred_check
      _
    $region7: #{tpu_custom_call.1} parent=1 // pred_check_branch
      %33 = sbr.rel (0) target = $region9
    $region8: #{tpu_custom_call.1} parent=1 // pred_region
      %s35 = ssub.s32 1024, 1024
      %36 = vsyncadd [#allocation6], %s35
      %s37 = sshll.u32 [#allocation5], 4
      %s38 = int_to_ptr.vmem [resolvable:$true] %s37
      %43 = dma.hbm_to_vmem [thread:$0]  %s1, 1024, %s38, [#allocation6], 512, 512, 32
    $region9: #{tpu_custom_call.1} parent=1 // pred_fallthru
      _
    // Predicated region
    $region10: #{tpu_custom_call.1} parent=1 // pred_check
      _
    $region11: #{tpu_custom_call.1} parent=1 // pred_check_branch
      %45 = sbr.rel (0) target = $region13
    $region12: #{tpu_custom_call.1} parent=1 // pred_region
      %s47 = ssub.s32 65536, 65536
      %48 = vsyncadd [#allocation6], %s47
      %s49 = sshll.u32 [#allocation7], 4
      %s50 = int_to_ptr.vmem [resolvable:$true] %s49
      %55 = dma.hbm_to_vmem [thread:$0]  %s2, 65536, %s50, [#allocation6], 256, 256, 16
    $region13: #{tpu_custom_call.1} parent=1 // pred_fallthru
      _
    // Predicated region
    $region14: #{tpu_custom_call.1} parent=1 // pred_check
      _
    $region15: #{tpu_custom_call.1} parent=1 // pred_check_branch
      %57 = sbr.rel (0) target = $region17
    $region16: #{tpu_custom_call.1} parent=1 // pred_region
      %s59 = ssub.s32 64, 64
      %60 = vsyncadd [#allocation9], %s59
      %s62 = sshll.u32 [#allocation8], 4
      %s63 = int_to_ptr.vmem [resolvable:$true] %s62
      %65 = dma.hbm_to_vmem [thread:$0]  %s3, 64, %s63, [#allocation9]
    $region17: #{tpu_custom_call.1} parent=1 // pred_fallthru
      _
    // Predicated region
    $region18: #{tpu_custom_call.1} parent=1 // pred_check
      _
    $region19: #{tpu_custom_call.1} parent=1 // pred_check_branch
      %67 = sbr.rel (0) target = $region21
    $region20: #{tpu_custom_call.1} parent=1 // pred_region
      %s69 = ssub.s32 16384, 16384
      %70 = vsyncadd [#allocation9], %s69
      %s71 = sshll.u32 [#allocation10], 4
      %s72 = int_to_ptr.vmem [resolvable:$true] %s71
      %77 = dma.hbm_to_vmem [thread:$0]  %s4, 16384, %s72, [#allocation9], 256, 256, 16
    $region21: #{tpu_custom_call.1} parent=1 // pred_fallthru
      _
    // Predicated region
    $region22: #{tpu_custom_call.1} parent=1 // pred_check
      _
    $region23: #{tpu_custom_call.1} parent=1 // pred_check_branch
      %79 = sbr.rel (0) target = $region25
    $region24: #{tpu_custom_call.1} parent=1 // pred_region
      %s81 = ssub.s32 64, 64
      %82 = vsyncadd [#allocation12], %s81
      %s84 = sshll.u32 [#allocation11], 4
      %s85 = int_to_ptr.vmem [resolvable:$true] %s84
      %87 = dma.hbm_to_vmem [thread:$0]  %s5, 64, %s85, [#allocation12]
    $region25: #{tpu_custom_call.1} parent=1 // pred_fallthru
      _
    // Predicated region
    $region26: #{tpu_custom_call.1} parent=1 // pred_check
      _
    $region27: #{tpu_custom_call.1} parent=1 // pred_check_branch
      %89 = sbr.rel (0) target = $region29
    $region28: #{tpu_custom_call.1} parent=1 // pred_region
      %s91 = ssub.s32 16384, 16384
      %92 = vsyncadd [#allocation12], %s91
      %s93 = sshll.u32 [#allocation13], 4
      %s94 = int_to_ptr.vmem [resolvable:$true] %s93
      %99 = dma.hbm_to_vmem [thread:$0]  %s6, 16384, %s94, [#allocation12], 256, 256, 16
    $region29: #{tpu_custom_call.1} parent=1 // pred_fallthru
      _
    // Predicated region
    $region30: #{tpu_custom_call.1} parent=1 // pred_check
      _
    $region31: #{tpu_custom_call.1} parent=1 // pred_check_branch
      %101 = sbr.rel (0) target = $region33
    $region32: #{tpu_custom_call.1} parent=1 // pred_region
      %s103 = ssub.s32 64, 64
      %104 = vsyncadd [#allocation15], %s103
      %s106 = sshll.u32 [#allocation14], 4
      %s107 = int_to_ptr.vmem [resolvable:$true] %s106
      %109 = dma.hbm_to_vmem [thread:$0]  %s7, 64, %s107, [#allocation15]
    $region33: #{tpu_custom_call.1} parent=1 // pred_fallthru
      _
    // Predicated region
    $region34: #{tpu_custom_call.1} parent=1 // pred_check
      _
    $region35: #{tpu_custom_call.1} parent=1 // pred_check_branch
      %111 = sbr.rel (0) target = $region37
    $region36: #{tpu_custom_call.1} parent=1 // pred_region
      %s113 = ssub.s32 64, 64
      %114 = vsyncadd [#allocation15], %s113
      %s116 = sshll.u32 [#allocation16], 4
      %s117 = int_to_ptr.vmem [resolvable:$true] %s116
      %119 = dma.hbm_to_vmem [thread:$0]  %s8, 64, %s117, [#allocation15]
    $region37: #{tpu_custom_call.1} parent=1 // pred_fallthru
      _
    // Predicated region
    $region38: #{tpu_custom_call.1} parent=1 // pred_check
      _
    $region39: #{tpu_custom_call.1} parent=1 // pred_check_branch
      %121 = sbr.rel (0) target = $region41
    $region40: #{tpu_custom_call.1} parent=1 // pred_region
      _
    $region41: #{tpu_custom_call.1} parent=1 // pred_fallthru
      _
    // Predicated region
    $region42: #{tpu_custom_call.1} parent=1 // pred_check
      _
    $region43: #{tpu_custom_call.1} parent=1 // pred_check_branch
      %123 = sbr.rel (0) target = $region45
    $region44: #{tpu_custom_call.1} parent=1 // pred_region
      %124 = dma.done [#allocation4], 512
    $region45: #{tpu_custom_call.1} parent=1 // pred_fallthru
      _
    // Predicated region
    $region46: #{tpu_custom_call.1} parent=1 // pred_check
      _
    $region47: #{tpu_custom_call.1} parent=1 // pred_check_branch
      %126 = sbr.rel (0) target = $region49
    $region48: #{tpu_custom_call.1} parent=1 // pred_region
      %127 = dma.done [#allocation6], 1024
    $region49: #{tpu_custom_call.1} parent=1 // pred_fallthru
      _
    // Predicated region
    $region50: #{tpu_custom_call.1} parent=1 // pred_check
      _
    $region51: #{tpu_custom_call.1} parent=1 // pred_check_branch
      %129 = sbr.rel (0) target = $region53
    $region52: #{tpu_custom_call.1} parent=1 // pred_region
      %130 = dma.done [#allocation6], 65536
    $region53: #{tpu_custom_call.1} parent=1 // pred_fallthru
      _
    // Predicated region
    $region54: #{tpu_custom_call.1} parent=1 // pred_check
      _
    $region55: #{tpu_custom_call.1} parent=1 // pred_check_branch
      %132 = sbr.rel (0) target = $region57
    $region56: #{tpu_custom_call.1} parent=1 // pred_region
      %133 = dma.done [#allocation9], 64
    $region57: #{tpu_custom_call.1} parent=1 // pred_fallthru
      _
    // Predicated region
    $region58: #{tpu_custom_call.1} parent=1 // pred_check
      _
    $region59: #{tpu_custom_call.1} parent=1 // pred_check_branch
      %135 = sbr.rel (0) target = $region61
    $region60: #{tpu_custom_call.1} parent=1 // pred_region
      %136 = dma.done [#allocation9], 16384
    $region61: #{tpu_custom_call.1} parent=1 // pred_fallthru
      _
    // Predicated region
    $region62: #{tpu_custom_call.1} parent=1 // pred_check
      _
    $region63: #{tpu_custom_call.1} parent=1 // pred_check_branch
      %138 = sbr.rel (0) target = $region65
    $region64: #{tpu_custom_call.1} parent=1 // pred_region
      %139 = dma.done [#allocation12], 64
    $region65: #{tpu_custom_call.1} parent=1 // pred_fallthru
      _
    // Predicated region
    $region66: #{tpu_custom_call.1} parent=1 // pred_check
      _
    $region67: #{tpu_custom_call.1} parent=1 // pred_check_branch
      %141 = sbr.rel (0) target = $region69
    $region68: #{tpu_custom_call.1} parent=1 // pred_region
      %142 = dma.done [#allocation12], 16384
    $region69: #{tpu_custom_call.1} parent=1 // pred_fallthru
      _
    // Predicated region
    $region70: #{tpu_custom_call.1} parent=1 // pred_check
      _
    $region71: #{tpu_custom_call.1} parent=1 // pred_check_branch
      %144 = sbr.rel (0) target = $region73
    $region72: #{tpu_custom_call.1} parent=1 // pred_region
      %145 = dma.done [#allocation15], 64
    $region73: #{tpu_custom_call.1} parent=1 // pred_fallthru
      _
    // Predicated region
    $region74: #{tpu_custom_call.1} parent=1 // pred_check
      _
    $region75: #{tpu_custom_call.1} parent=1 // pred_check_branch
      %147 = sbr.rel (0) target = $region77
    $region76: #{tpu_custom_call.1} parent=1 // pred_region
      %148 = dma.done [#allocation15], 64
    $region77: #{tpu_custom_call.1} parent=1 // pred_fallthru
      _
    %v149 = vld [vmem:[#allocation5] sm:$0xff]
    %v150 = vld [vmem:[#allocation5 + $0x8] sm:$0xff]
    %v151 = vld [vmem:[#allocation5 + $0x10] sm:$0xff]
    %v152 = vld [vmem:[#allocation5 + $0x18] sm:$0xff]
    %v153 = vld [vmem:[#allocation5 + $0x20] sm:$0xff]
    %v154 = vld [vmem:[#allocation5 + $0x28] sm:$0xff]
    %v155 = vld [vmem:[#allocation5 + $0x30] sm:$0xff]
    %v156 = vld [vmem:[#allocation5 + $0x38] sm:$0xff]
    %v157 = vrot.slane %v149, 4
    %v158 = vadd.f32 %v149, %v157
    %v159 = vrot.slane %v158, 2
    %v160 = vadd.f32 %v158, %v159
    %v161 = vrot.slane %v160, 1
    %v162 = vadd.f32 %v160, %v161
    %v163 = vrot.slane %v150, 4
    %v164 = vadd.f32 %v150, %v163
    %v165 = vrot.slane %v164, 2
    %v166 = vadd.f32 %v164, %v165
    %v167 = vrot.slane %v166, 1
    %v168 = vadd.f32 %v166, %v167
    %v169 = vrot.slane %v151, 4
    %v170 = vadd.f32 %v151, %v169
    %v171 = vrot.slane %v170, 2
    %v172 = vadd.f32 %v170, %v171
    %v173 = vrot.slane %v172, 1
    %v174 = vadd.f32 %v172, %v173
    %v175 = vrot.slane %v152, 4
    %v176 = vadd.f32 %v152, %v175
    %v177 = vrot.slane %v176, 2
    %v178 = vadd.f32 %v176, %v177
    %v179 = vrot.slane %v178, 1
    %v180 = vadd.f32 %v178, %v179
    %v181 = vrot.slane %v153, 4
    %v182 = vadd.f32 %v153, %v181
    %v183 = vrot.slane %v182, 2
    %v184 = vadd.f32 %v182, %v183
    %v185 = vrot.slane %v184, 1
    %v186 = vadd.f32 %v184, %v185
    %v187 = vrot.slane %v154, 4
    %v188 = vadd.f32 %v154, %v187
    %v189 = vrot.slane %v188, 2
    %v190 = vadd.f32 %v188, %v189
    %v191 = vrot.slane %v190, 1
    %v192 = vadd.f32 %v190, %v191
    %v193 = vrot.slane %v155, 4
    %v194 = vadd.f32 %v155, %v193
    %v195 = vrot.slane %v194, 2
    %v196 = vadd.f32 %v194, %v195
    %v197 = vrot.slane %v196, 1
    %v198 = vadd.f32 %v196, %v197
    %v199 = vrot.slane %v156, 4
    %v200 = vadd.f32 %v156, %v199
    %v201 = vrot.slane %v200, 2
    %v202 = vadd.f32 %v200, %v201
    %v203 = vrot.slane %v202, 1
    %v204 = vadd.f32 %v202, %v203
    %v205 = vrcp.pop 8.0
    %v206 = vmul.f32 %v162, %v205
    %v207 = vmul.f32 %v168, %v205
    %v208 = vmul.f32 %v174, %v205
    %v209 = vmul.f32 %v180, %v205
    %v210 = vmul.f32 %v186, %v205
    %v211 = vmul.f32 %v192, %v205
    %v212 = vmul.f32 %v198, %v205
    %v213 = vmul.f32 %v204, %v205
    %v214 = vld [vmem:[#allocation3] sm:$0xff]
    %v215 = vld [vmem:[#allocation3 + $0x8] sm:$0xff]
    %v216 = vld [vmem:[#allocation3 + $0x10] sm:$0xff]
    %v217 = vld [vmem:[#allocation3 + $0x18] sm:$0xff]
    %v218 = vld [vmem:[#allocation7] sm:$0xff]
    %v219 = vld [vmem:[#allocation7 + $0x8] sm:$0xff]
    %v220 = vld [vmem:[#allocation7 + $0x10] sm:$0xff]
    %v221 = vld [vmem:[#allocation7 + $0x18] sm:$0xff]
    %v222 = vld [vmem:[#allocation7 + $0x20] sm:$0xff]
    %v223 = vld [vmem:[#allocation7 + $0x28] sm:$0xff]
    %v224 = vld [vmem:[#allocation7 + $0x30] sm:$0xff]
    %v225 = vld [vmem:[#allocation7 + $0x38] sm:$0xff]
    %v226 = vld [vmem:[#allocation7 + $0x40] sm:$0xff]
    %v227 = vld [vmem:[#allocation7 + $0x48] sm:$0xff]
    %v228 = vld [vmem:[#allocation7 + $0x50] sm:$0xff]
    %v229 = vld [vmem:[#allocation7 + $0x58] sm:$0xff]
    %v230 = vld [vmem:[#allocation7 + $0x60] sm:$0xff]
    %v231 = vld [vmem:[#allocation7 + $0x68] sm:$0xff]
    %v232 = vld [vmem:[#allocation7 + $0x70] sm:$0xff]
    %v233 = vld [vmem:[#allocation7 + $0x78] sm:$0xff]
    %v234 = vld [vmem:[#allocation7 + $0x80] sm:$0xff]
    %v235 = vld [vmem:[#allocation7 + $0x88] sm:$0xff]
    %v236 = vld [vmem:[#allocation7 + $0x90] sm:$0xff]
    %v237 = vld [vmem:[#allocation7 + $0x98] sm:$0xff]
    %v238 = vld [vmem:[#allocation7 + $0xa0] sm:$0xff]
    %v239 = vld [vmem:[#allocation7 + $0xa8] sm:$0xff]
    %v240 = vld [vmem:[#allocation7 + $0xb0] sm:$0xff]
    %v241 = vld [vmem:[#allocation7 + $0xb8] sm:$0xff]
    %v242 = vld [vmem:[#allocation7 + $0xc0] sm:$0xff]
    %v243 = vld [vmem:[#allocation7 + $0xc8] sm:$0xff]
    %v244 = vld [vmem:[#allocation7 + $0xd0] sm:$0xff]
    %v245 = vld [vmem:[#allocation7 + $0xd8] sm:$0xff]
    %v246 = vld [vmem:[#allocation7 + $0xe0] sm:$0xff]
    %v247 = vld [vmem:[#allocation7 + $0xe8] sm:$0xff]
    %v248 = vld [vmem:[#allocation7 + $0xf0] sm:$0xff]
    %v249 = vld [vmem:[#allocation7 + $0xf8] sm:$0xff]
    %v250 = vld [vmem:[#allocation7 + $0x100] sm:$0xff]
    %v251 = vld [vmem:[#allocation7 + $0x108] sm:$0xff]
    %v252 = vld [vmem:[#allocation7 + $0x110] sm:$0xff]
    %v253 = vld [vmem:[#allocation7 + $0x118] sm:$0xff]
    %v254 = vld [vmem:[#allocation7 + $0x120] sm:$0xff]
    %v255 = vld [vmem:[#allocation7 + $0x128] sm:$0xff]
    %v256 = vld [vmem:[#allocation7 + $0x130] sm:$0xff]
    %v257 = vld [vmem:[#allocation7 + $0x138] sm:$0xff]
    %v258 = vld [vmem:[#allocation7 + $0x140] sm:$0xff]
    %v259 = vld [vmem:[#allocation7 + $0x148] sm:$0xff]
    %v260 = vld [vmem:[#allocation7 + $0x150] sm:$0xff]
    %v261 = vld [vmem:[#allocation7 + $0x158] sm:$0xff]
    %v262 = vld [vmem:[#allocation7 + $0x160] sm:$0xff]
    %v263 = vld [vmem:[#allocation7 + $0x168] sm:$0xff]
    %v264 = vld [vmem:[#allocation7 + $0x170] sm:$0xff]
    %v265 = vld [vmem:[#allocation7 + $0x178] sm:$0xff]
    %v266 = vld [vmem:[#allocation7 + $0x180] sm:$0xff]
    %v267 = vld [vmem:[#allocation7 + $0x188] sm:$0xff]
    %v268 = vld [vmem:[#allocation7 + $0x190] sm:$0xff]
    %v269 = vld [vmem:[#allocation7 + $0x198] sm:$0xff]
    %v270 = vld [vmem:[#allocation7 + $0x1a0] sm:$0xff]
    %v271 = vld [vmem:[#allocation7 + $0x1a8] sm:$0xff]
    %v272 = vld [vmem:[#allocation7 + $0x1b0] sm:$0xff]
    %v273 = vld [vmem:[#allocation7 + $0x1b8] sm:$0xff]
    %v274 = vld [vmem:[#allocation7 + $0x1c0] sm:$0xff]
    %v275 = vld [vmem:[#allocation7 + $0x1c8] sm:$0xff]
    %v276 = vld [vmem:[#allocation7 + $0x1d0] sm:$0xff]
    %v277 = vld [vmem:[#allocation7 + $0x1d8] sm:$0xff]
    %v278 = vld [vmem:[#allocation7 + $0x1e0] sm:$0xff]
    %v279 = vld [vmem:[#allocation7 + $0x1e8] sm:$0xff]
    %v280 = vld [vmem:[#allocation7 + $0x1f0] sm:$0xff]
    %v281 = vld [vmem:[#allocation7 + $0x1f8] sm:$0xff]
    %v282 = vld [vmem:[#allocation7 + $0x200] sm:$0xff]
    %v283 = vld [vmem:[#allocation7 + $0x208] sm:$0xff]
    %v284 = vld [vmem:[#allocation7 + $0x210] sm:$0xff]
    %v285 = vld [vmem:[#allocation7 + $0x218] sm:$0xff]
    %v286 = vld [vmem:[#allocation7 + $0x220] sm:$0xff]
    %v287 = vld [vmem:[#allocation7 + $0x228] sm:$0xff]
    %v288 = vld [vmem:[#allocation7 + $0x230] sm:$0xff]
    %v289 = vld [vmem:[#allocation7 + $0x238] sm:$0xff]
    %v290 = vld [vmem:[#allocation7 + $0x240] sm:$0xff]
    %v291 = vld [vmem:[#allocation7 + $0x248] sm:$0xff]
    %v292 = vld [vmem:[#allocation7 + $0x250] sm:$0xff]
    %v293 = vld [vmem:[#allocation7 + $0x258] sm:$0xff]
    %v294 = vld [vmem:[#allocation7 + $0x260] sm:$0xff]
    %v295 = vld [vmem:[#allocation7 + $0x268] sm:$0xff]
    %v296 = vld [vmem:[#allocation7 + $0x270] sm:$0xff]
    %v297 = vld [vmem:[#allocation7 + $0x278] sm:$0xff]
    %v298 = vld [vmem:[#allocation7 + $0x280] sm:$0xff]
    %v299 = vld [vmem:[#allocation7 + $0x288] sm:$0xff]
    %v300 = vld [vmem:[#allocation7 + $0x290] sm:$0xff]
    %v301 = vld [vmem:[#allocation7 + $0x298] sm:$0xff]
    %v302 = vld [vmem:[#allocation7 + $0x2a0] sm:$0xff]
    %v303 = vld [vmem:[#allocation7 + $0x2a8] sm:$0xff]
    %v304 = vld [vmem:[#allocation7 + $0x2b0] sm:$0xff]
    %v305 = vld [vmem:[#allocation7 + $0x2b8] sm:$0xff]
    %v306 = vld [vmem:[#allocation7 + $0x2c0] sm:$0xff]
    %v307 = vld [vmem:[#allocation7 + $0x2c8] sm:$0xff]
    %v308 = vld [vmem:[#allocation7 + $0x2d0] sm:$0xff]
    %v309 = vld [vmem:[#allocation7 + $0x2d8] sm:$0xff]
    %v310 = vld [vmem:[#allocation7 + $0x2e0] sm:$0xff]
    %v311 = vld [vmem:[#allocation7 + $0x2e8] sm:$0xff]
    %v312 = vld [vmem:[#allocation7 + $0x2f0] sm:$0xff]
    %v313 = vld [vmem:[#allocation7 + $0x2f8] sm:$0xff]
    %v314 = vld [vmem:[#allocation7 + $0x300] sm:$0xff]
    %v315 = vld [vmem:[#allocation7 + $0x308] sm:$0xff]
    %v316 = vld [vmem:[#allocation7 + $0x310] sm:$0xff]
    %v317 = vld [vmem:[#allocation7 + $0x318] sm:$0xff]
    %v318 = vld [vmem:[#allocation7 + $0x320] sm:$0xff]
    %v319 = vld [vmem:[#allocation7 + $0x328] sm:$0xff]
    %v320 = vld [vmem:[#allocation7 + $0x330] sm:$0xff]
    %v321 = vld [vmem:[#allocation7 + $0x338] sm:$0xff]
    %v322 = vld [vmem:[#allocation7 + $0x340] sm:$0xff]
    %v323 = vld [vmem:[#allocation7 + $0x348] sm:$0xff]
    %v324 = vld [vmem:[#allocation7 + $0x350] sm:$0xff]
    %v325 = vld [vmem:[#allocation7 + $0x358] sm:$0xff]
    %v326 = vld [vmem:[#allocation7 + $0x360] sm:$0xff]
    %v327 = vld [vmem:[#allocation7 + $0x368] sm:$0xff]
    %v328 = vld [vmem:[#allocation7 + $0x370] sm:$0xff]
    %v329 = vld [vmem:[#allocation7 + $0x378] sm:$0xff]
    %v330 = vld [vmem:[#allocation7 + $0x380] sm:$0xff]
    %v331 = vld [vmem:[#allocation7 + $0x388] sm:$0xff]
    %v332 = vld [vmem:[#allocation7 + $0x390] sm:$0xff]
    %v333 = vld [vmem:[#allocation7 + $0x398] sm:$0xff]
    %v334 = vld [vmem:[#allocation7 + $0x3a0] sm:$0xff]
    %v335 = vld [vmem:[#allocation7 + $0x3a8] sm:$0xff]
    %v336 = vld [vmem:[#allocation7 + $0x3b0] sm:$0xff]
    %v337 = vld [vmem:[#allocation7 + $0x3b8] sm:$0xff]
    %v338 = vld [vmem:[#allocation7 + $0x3c0] sm:$0xff]
    %v339 = vld [vmem:[#allocation7 + $0x3c8] sm:$0xff]
    %v340 = vld [vmem:[#allocation7 + $0x3d0] sm:$0xff]
    %v341 = vld [vmem:[#allocation7 + $0x3d8] sm:$0xff]
    %v342 = vld [vmem:[#allocation7 + $0x3e0] sm:$0xff]
    %v343 = vld [vmem:[#allocation7 + $0x3e8] sm:$0xff]
    %v344 = vld [vmem:[#allocation7 + $0x3f0] sm:$0xff]
    %v345 = vld [vmem:[#allocation7 + $0x3f8] sm:$0xff]
    %v346 = vld [vmem:[#allocation7 + $0x400] sm:$0xff]
    %v347 = vld [vmem:[#allocation7 + $0x408] sm:$0xff]
    %v348 = vld [vmem:[#allocation7 + $0x410] sm:$0xff]
    %v349 = vld [vmem:[#allocation7 + $0x418] sm:$0xff]
    %v350 = vld [vmem:[#allocation7 + $0x420] sm:$0xff]
    %v351 = vld [vmem:[#allocation7 + $0x428] sm:$0xff]
    %v352 = vld [vmem:[#allocation7 + $0x430] sm:$0xff]
    %v353 = vld [vmem:[#allocation7 + $0x438] sm:$0xff]
    %v354 = vld [vmem:[#allocation7 + $0x440] sm:$0xff]
    %v355 = vld [vmem:[#allocation7 + $0x448] sm:$0xff]
    %v356 = vld [vmem:[#allocation7 + $0x450] sm:$0xff]
    %v357 = vld [vmem:[#allocation7 + $0x458] sm:$0xff]
    %v358 = vld [vmem:[#allocation7 + $0x460] sm:$0xff]
    %v359 = vld [vmem:[#allocation7 + $0x468] sm:$0xff]
    %v360 = vld [vmem:[#allocation7 + $0x470] sm:$0xff]
    %v361 = vld [vmem:[#allocation7 + $0x478] sm:$0xff]
    %v362 = vld [vmem:[#allocation7 + $0x480] sm:$0xff]
    %v363 = vld [vmem:[#allocation7 + $0x488] sm:$0xff]
    %v364 = vld [vmem:[#allocation7 + $0x490] sm:$0xff]
    %v365 = vld [vmem:[#allocation7 + $0x498] sm:$0xff]
    %v366 = vld [vmem:[#allocation7 + $0x4a0] sm:$0xff]
    %v367 = vld [vmem:[#allocation7 + $0x4a8] sm:$0xff]
    %v368 = vld [vmem:[#allocation7 + $0x4b0] sm:$0xff]
    %v369 = vld [vmem:[#allocation7 + $0x4b8] sm:$0xff]
    %v370 = vld [vmem:[#allocation7 + $0x4c0] sm:$0xff]
    %v371 = vld [vmem:[#allocation7 + $0x4c8] sm:$0xff]
    %v372 = vld [vmem:[#allocation7 + $0x4d0] sm:$0xff]
    %v373 = vld [vmem:[#allocation7 + $0x4d8] sm:$0xff]
    %v374 = vld [vmem:[#allocation7 + $0x4e0] sm:$0xff]
    %v375 = vld [vmem:[#allocation7 + $0x4e8] sm:$0xff]
    %v376 = vld [vmem:[#allocation7 + $0x4f0] sm:$0xff]
    %v377 = vld [vmem:[#allocation7 + $0x4f8] sm:$0xff]
    %v378 = vld [vmem:[#allocation7 + $0x500] sm:$0xff]
    %v379 = vld [vmem:[#allocation7 + $0x508] sm:$0xff]
    %v380 = vld [vmem:[#allocation7 + $0x510] sm:$0xff]
    %v381 = vld [vmem:[#allocation7 + $0x518] sm:$0xff]
    %v382 = vld [vmem:[#allocation7 + $0x520] sm:$0xff]
    %v383 = vld [vmem:[#allocation7 + $0x528] sm:$0xff]
    %v384 = vld [vmem:[#allocation7 + $0x530] sm:$0xff]
    %v385 = vld [vmem:[#allocation7 + $0x538] sm:$0xff]
    %v386 = vld [vmem:[#allocation7 + $0x540] sm:$0xff]
    %v387 = vld [vmem:[#allocation7 + $0x548] sm:$0xff]
    %v388 = vld [vmem:[#allocation7 + $0x550] sm:$0xff]
    %v389 = vld [vmem:[#allocation7 + $0x558] sm:$0xff]
    %v390 = vld [vmem:[#allocation7 + $0x560] sm:$0xff]
    %v391 = vld [vmem:[#allocation7 + $0x568] sm:$0xff]
    %v392 = vld [vmem:[#allocation7 + $0x570] sm:$0xff]
    %v393 = vld [vmem:[#allocation7 + $0x578] sm:$0xff]
    %v394 = vld [vmem:[#allocation7 + $0x580] sm:$0xff]
    %v395 = vld [vmem:[#allocation7 + $0x588] sm:$0xff]
    %v396 = vld [vmem:[#allocation7 + $0x590] sm:$0xff]
    %v397 = vld [vmem:[#allocation7 + $0x598] sm:$0xff]
    %v398 = vld [vmem:[#allocation7 + $0x5a0] sm:$0xff]
    %v399 = vld [vmem:[#allocation7 + $0x5a8] sm:$0xff]
    %v400 = vld [vmem:[#allocation7 + $0x5b0] sm:$0xff]
    %v401 = vld [vmem:[#allocation7 + $0x5b8] sm:$0xff]
    %v402 = vld [vmem:[#allocation7 + $0x5c0] sm:$0xff]
    %v403 = vld [vmem:[#allocation7 + $0x5c8] sm:$0xff]
    %v404 = vld [vmem:[#allocation7 + $0x5d0] sm:$0xff]
    %v405 = vld [vmem:[#allocation7 + $0x5d8] sm:$0xff]
    %v406 = vld [vmem:[#allocation7 + $0x5e0] sm:$0xff]
    %v407 = vld [vmem:[#allocation7 + $0x5e8] sm:$0xff]
    %v408 = vld [vmem:[#allocation7 + $0x5f0] sm:$0xff]
    %v409 = vld [vmem:[#allocation7 + $0x5f8] sm:$0xff]
    %v410 = vld [vmem:[#allocation7 + $0x600] sm:$0xff]
    %v411 = vld [vmem:[#allocation7 + $0x608] sm:$0xff]
    %v412 = vld [vmem:[#allocation7 + $0x610] sm:$0xff]
    %v413 = vld [vmem:[#allocation7 + $0x618] sm:$0xff]
    %v414 = vld [vmem:[#allocation7 + $0x620] sm:$0xff]
    %v415 = vld [vmem:[#allocation7 + $0x628] sm:$0xff]
    %v416 = vld [vmem:[#allocation7 + $0x630] sm:$0xff]
    %v417 = vld [vmem:[#allocation7 + $0x638] sm:$0xff]
    %v418 = vld [vmem:[#allocation7 + $0x640] sm:$0xff]
    %v419 = vld [vmem:[#allocation7 + $0x648] sm:$0xff]
    %v420 = vld [vmem:[#allocation7 + $0x650] sm:$0xff]
    %v421 = vld [vmem:[#allocation7 + $0x658] sm:$0xff]
    %v422 = vld [vmem:[#allocation7 + $0x660] sm:$0xff]
    %v423 = vld [vmem:[#allocation7 + $0x668] sm:$0xff]
    %v424 = vld [vmem:[#allocation7 + $0x670] sm:$0xff]
    %v425 = vld [vmem:[#allocation7 + $0x678] sm:$0xff]
    %v426 = vld [vmem:[#allocation7 + $0x680] sm:$0xff]
    %v427 = vld [vmem:[#allocation7 + $0x688] sm:$0xff]
    %v428 = vld [vmem:[#allocation7 + $0x690] sm:$0xff]
    %v429 = vld [vmem:[#allocation7 + $0x698] sm:$0xff]
    %v430 = vld [vmem:[#allocation7 + $0x6a0] sm:$0xff]
    %v431 = vld [vmem:[#allocation7 + $0x6a8] sm:$0xff]
    %v432 = vld [vmem:[#allocation7 + $0x6b0] sm:$0xff]
    %v433 = vld [vmem:[#allocation7 + $0x6b8] sm:$0xff]
    %v434 = vld [vmem:[#allocation7 + $0x6c0] sm:$0xff]
    %v435 = vld [vmem:[#allocation7 + $0x6c8] sm:$0xff]
    %v436 = vld [vmem:[#allocation7 + $0x6d0] sm:$0xff]
    %v437 = vld [vmem:[#allocation7 + $0x6d8] sm:$0xff]
    %v438 = vld [vmem:[#allocation7 + $0x6e0] sm:$0xff]
    %v439 = vld [vmem:[#allocation7 + $0x6e8] sm:$0xff]
    %v440 = vld [vmem:[#allocation7 + $0x6f0] sm:$0xff]
    %v441 = vld [vmem:[#allocation7 + $0x6f8] sm:$0xff]
    %v442 = vld [vmem:[#allocation7 + $0x700] sm:$0xff]
    %v443 = vld [vmem:[#allocation7 + $0x708] sm:$0xff]
    %v444 = vld [vmem:[#allocation7 + $0x710] sm:$0xff]
    %v445 = vld [vmem:[#allocation7 + $0x718] sm:$0xff]
    %v446 = vld [vmem:[#allocation7 + $0x720] sm:$0xff]
    %v447 = vld [vmem:[#allocation7 + $0x728] sm:$0xff]
    %v448 = vld [vmem:[#allocation7 + $0x730] sm:$0xff]
    %v449 = vld [vmem:[#allocation7 + $0x738] sm:$0xff]
    %v450 = vld [vmem:[#allocation7 + $0x740] sm:$0xff]
    %v451 = vld [vmem:[#allocation7 + $0x748] sm:$0xff]
    %v452 = vld [vmem:[#allocation7 + $0x750] sm:$0xff]
    %v453 = vld [vmem:[#allocation7 + $0x758] sm:$0xff]
    %v454 = vld [vmem:[#allocation7 + $0x760] sm:$0xff]
    %v455 = vld [vmem:[#allocation7 + $0x768] sm:$0xff]
    %v456 = vld [vmem:[#allocation7 + $0x770] sm:$0xff]
    %v457 = vld [vmem:[#allocation7 + $0x778] sm:$0xff]
    %v458 = vld [vmem:[#allocation7 + $0x780] sm:$0xff]
    %v459 = vld [vmem:[#allocation7 + $0x788] sm:$0xff]
    %v460 = vld [vmem:[#allocation7 + $0x790] sm:$0xff]
    %v461 = vld [vmem:[#allocation7 + $0x798] sm:$0xff]
    %v462 = vld [vmem:[#allocation7 + $0x7a0] sm:$0xff]
    %v463 = vld [vmem:[#allocation7 + $0x7a8] sm:$0xff]
    %v464 = vld [vmem:[#allocation7 + $0x7b0] sm:$0xff]
    %v465 = vld [vmem:[#allocation7 + $0x7b8] sm:$0xff]
    %v466 = vld [vmem:[#allocation7 + $0x7c0] sm:$0xff]
    %v467 = vld [vmem:[#allocation7 + $0x7c8] sm:$0xff]
    %v468 = vld [vmem:[#allocation7 + $0x7d0] sm:$0xff]
    %v469 = vld [vmem:[#allocation7 + $0x7d8] sm:$0xff]
    %v470 = vld [vmem:[#allocation7 + $0x7e0] sm:$0xff]
    %v471 = vld [vmem:[#allocation7 + $0x7e8] sm:$0xff]
    %v472 = vld [vmem:[#allocation7 + $0x7f0] sm:$0xff]
    %v473 = vld [vmem:[#allocation7 + $0x7f8] sm:$0xff]
    %v474 = vld [vmem:[#allocation7 + $0x800] sm:$0xff]
    %v475 = vld [vmem:[#allocation7 + $0x808] sm:$0xff]
    %v476 = vld [vmem:[#allocation7 + $0x810] sm:$0xff]
    %v477 = vld [vmem:[#allocation7 + $0x818] sm:$0xff]
    %v478 = vld [vmem:[#allocation7 + $0x820] sm:$0xff]
    %v479 = vld [vmem:[#allocation7 + $0x828] sm:$0xff]
    %v480 = vld [vmem:[#allocation7 + $0x830] sm:$0xff]
    %v481 = vld [vmem:[#allocation7 + $0x838] sm:$0xff]
    %v482 = vld [vmem:[#allocation7 + $0x840] sm:$0xff]
    %v483 = vld [vmem:[#allocation7 + $0x848] sm:$0xff]
    %v484 = vld [vmem:[#allocation7 + $0x850] sm:$0xff]
    %v485 = vld [vmem:[#allocation7 + $0x858] sm:$0xff]
    %v486 = vld [vmem:[#allocation7 + $0x860] sm:$0xff]
    %v487 = vld [vmem:[#allocation7 + $0x868] sm:$0xff]
    %v488 = vld [vmem:[#allocation7 + $0x870] sm:$0xff]
    %v489 = vld [vmem:[#allocation7 + $0x878] sm:$0xff]
    %v490 = vld [vmem:[#allocation7 + $0x880] sm:$0xff]
    %v491 = vld [vmem:[#allocation7 + $0x888] sm:$0xff]
    %v492 = vld [vmem:[#allocation7 + $0x890] sm:$0xff]
    %v493 = vld [vmem:[#allocation7 + $0x898] sm:$0xff]
    %v494 = vld [vmem:[#allocation7 + $0x8a0] sm:$0xff]
    %v495 = vld [vmem:[#allocation7 + $0x8a8] sm:$0xff]
    %v496 = vld [vmem:[#allocation7 + $0x8b0] sm:$0xff]
    %v497 = vld [vmem:[#allocation7 + $0x8b8] sm:$0xff]
    %v498 = vld [vmem:[#allocation7 + $0x8c0] sm:$0xff]
    %v499 = vld [vmem:[#allocation7 + $0x8c8] sm:$0xff]
    %v500 = vld [vmem:[#allocation7 + $0x8d0] sm:$0xff]
    %v501 = vld [vmem:[#allocation7 + $0x8d8] sm:$0xff]
    %v502 = vld [vmem:[#allocation7 + $0x8e0] sm:$0xff]
    %v503 = vld [vmem:[#allocation7 + $0x8e8] sm:$0xff]
    %v504 = vld [vmem:[#allocation7 + $0x8f0] sm:$0xff]
    %v505 = vld [vmem:[#allocation7 + $0x8f8] sm:$0xff]
    %v506 = vld [vmem:[#allocation7 + $0x900] sm:$0xff]
    %v507 = vld [vmem:[#allocation7 + $0x908] sm:$0xff]
    %v508 = vld [vmem:[#allocation7 + $0x910] sm:$0xff]
    %v509 = vld [vmem:[#allocation7 + $0x918] sm:$0xff]
    %v510 = vld [vmem:[#allocation7 + $0x920] sm:$0xff]
    %v511 = vld [vmem:[#allocation7 + $0x928] sm:$0xff]
    %v512 = vld [vmem:[#allocation7 + $0x930] sm:$0xff]
    %v513 = vld [vmem:[#allocation7 + $0x938] sm:$0xff]
    %v514 = vld [vmem:[#allocation7 + $0x940] sm:$0xff]
    %v515 = vld [vmem:[#allocation7 + $0x948] sm:$0xff]
    %v516 = vld [vmem:[#allocation7 + $0x950] sm:$0xff]
    %v517 = vld [vmem:[#allocation7 + $0x958] sm:$0xff]
    %v518 = vld [vmem:[#allocation7 + $0x960] sm:$0xff]
    %v519 = vld [vmem:[#allocation7 + $0x968] sm:$0xff]
    %v520 = vld [vmem:[#allocation7 + $0x970] sm:$0xff]
    %v521 = vld [vmem:[#allocation7 + $0x978] sm:$0xff]
    %v522 = vld [vmem:[#allocation7 + $0x980] sm:$0xff]
    %v523 = vld [vmem:[#allocation7 + $0x988] sm:$0xff]
    %v524 = vld [vmem:[#allocation7 + $0x990] sm:$0xff]
    %v525 = vld [vmem:[#allocation7 + $0x998] sm:$0xff]
    %v526 = vld [vmem:[#allocation7 + $0x9a0] sm:$0xff]
    %v527 = vld [vmem:[#allocation7 + $0x9a8] sm:$0xff]
    %v528 = vld [vmem:[#allocation7 + $0x9b0] sm:$0xff]
    %v529 = vld [vmem:[#allocation7 + $0x9b8] sm:$0xff]
    %v530 = vld [vmem:[#allocation7 + $0x9c0] sm:$0xff]
    %v531 = vld [vmem:[#allocation7 + $0x9c8] sm:$0xff]
    %v532 = vld [vmem:[#allocation7 + $0x9d0] sm:$0xff]
    %v533 = vld [vmem:[#allocation7 + $0x9d8] sm:$0xff]
    %v534 = vld [vmem:[#allocation7 + $0x9e0] sm:$0xff]
    %v535 = vld [vmem:[#allocation7 + $0x9e8] sm:$0xff]
    %v536 = vld [vmem:[#allocation7 + $0x9f0] sm:$0xff]
    %v537 = vld [vmem:[#allocation7 + $0x9f8] sm:$0xff]
    %v538 = vld [vmem:[#allocation7 + $0xa00] sm:$0xff]
    %v539 = vld [vmem:[#allocation7 + $0xa08] sm:$0xff]
    %v540 = vld [vmem:[#allocation7 + $0xa10] sm:$0xff]
    %v541 = vld [vmem:[#allocation7 + $0xa18] sm:$0xff]
    %v542 = vld [vmem:[#allocation7 + $0xa20] sm:$0xff]
    %v543 = vld [vmem:[#allocation7 + $0xa28] sm:$0xff]
    %v544 = vld [vmem:[#allocation7 + $0xa30] sm:$0xff]
    %v545 = vld [vmem:[#allocation7 + $0xa38] sm:$0xff]
    %v546 = vld [vmem:[#allocation7 + $0xa40] sm:$0xff]
    %v547 = vld [vmem:[#allocation7 + $0xa48] sm:$0xff]
    %v548 = vld [vmem:[#allocation7 + $0xa50] sm:$0xff]
    %v549 = vld [vmem:[#allocation7 + $0xa58] sm:$0xff]
    %v550 = vld [vmem:[#allocation7 + $0xa60] sm:$0xff]
    %v551 = vld [vmem:[#allocation7 + $0xa68] sm:$0xff]
    %v552 = vld [vmem:[#allocation7 + $0xa70] sm:$0xff]
    %v553 = vld [vmem:[#allocation7 + $0xa78] sm:$0xff]
    %v554 = vld [vmem:[#allocation7 + $0xa80] sm:$0xff]
    %v555 = vld [vmem:[#allocation7 + $0xa88] sm:$0xff]
    %v556 = vld [vmem:[#allocation7 + $0xa90] sm:$0xff]
    %v557 = vld [vmem:[#allocation7 + $0xa98] sm:$0xff]
    %v558 = vld [vmem:[#allocation7 + $0xaa0] sm:$0xff]
    %v559 = vld [vmem:[#allocation7 + $0xaa8] sm:$0xff]
    %v560 = vld [vmem:[#allocation7 + $0xab0] sm:$0xff]
    %v561 = vld [vmem:[#allocation7 + $0xab8] sm:$0xff]
    %v562 = vld [vmem:[#allocation7 + $0xac0] sm:$0xff]
    %v563 = vld [vmem:[#allocation7 + $0xac8] sm:$0xff]
    %v564 = vld [vmem:[#allocation7 + $0xad0] sm:$0xff]
    %v565 = vld [vmem:[#allocation7 + $0xad8] sm:$0xff]
    %v566 = vld [vmem:[#allocation7 + $0xae0] sm:$0xff]
    %v567 = vld [vmem:[#allocation7 + $0xae8] sm:$0xff]
    %v568 = vld [vmem:[#allocation7 + $0xaf0] sm:$0xff]
    %v569 = vld [vmem:[#allocation7 + $0xaf8] sm:$0xff]
    %v570 = vld [vmem:[#allocation7 + $0xb00] sm:$0xff]
    %v571 = vld [vmem:[#allocation7 + $0xb08] sm:$0xff]
    %v572 = vld [vmem:[#allocation7 + $0xb10] sm:$0xff]
    %v573 = vld [vmem:[#allocation7 + $0xb18] sm:$0xff]
    %v574 = vld [vmem:[#allocation7 + $0xb20] sm:$0xff]
    %v575 = vld [vmem:[#allocation7 + $0xb28] sm:$0xff]
    %v576 = vld [vmem:[#allocation7 + $0xb30] sm:$0xff]
    %v577 = vld [vmem:[#allocation7 + $0xb38] sm:$0xff]
    %v578 = vld [vmem:[#allocation7 + $0xb40] sm:$0xff]
    %v579 = vld [vmem:[#allocation7 + $0xb48] sm:$0xff]
    %v580 = vld [vmem:[#allocation7 + $0xb50] sm:$0xff]
    %v581 = vld [vmem:[#allocation7 + $0xb58] sm:$0xff]
    %v582 = vld [vmem:[#allocation7 + $0xb60] sm:$0xff]
    %v583 = vld [vmem:[#allocation7 + $0xb68] sm:$0xff]
    %v584 = vld [vmem:[#allocation7 + $0xb70] sm:$0xff]
    %v585 = vld [vmem:[#allocation7 + $0xb78] sm:$0xff]
    %v586 = vld [vmem:[#allocation7 + $0xb80] sm:$0xff]
    %v587 = vld [vmem:[#allocation7 + $0xb88] sm:$0xff]
    %v588 = vld [vmem:[#allocation7 + $0xb90] sm:$0xff]
    %v589 = vld [vmem:[#allocation7 + $0xb98] sm:$0xff]
    %v590 = vld [vmem:[#allocation7 + $0xba0] sm:$0xff]
    %v591 = vld [vmem:[#allocation7 + $0xba8] sm:$0xff]
    %v592 = vld [vmem:[#allocation7 + $0xbb0] sm:$0xff]
    %v593 = vld [vmem:[#allocation7 + $0xbb8] sm:$0xff]
    %v594 = vld [vmem:[#allocation7 + $0xbc0] sm:$0xff]
    %v595 = vld [vmem:[#allocation7 + $0xbc8] sm:$0xff]
    %v596 = vld [vmem:[#allocation7 + $0xbd0] sm:$0xff]
    %v597 = vld [vmem:[#allocation7 + $0xbd8] sm:$0xff]
    %v598 = vld [vmem:[#allocation7 + $0xbe0] sm:$0xff]
    %v599 = vld [vmem:[#allocation7 + $0xbe8] sm:$0xff]
    %v600 = vld [vmem:[#allocation7 + $0xbf0] sm:$0xff]
    %v601 = vld [vmem:[#allocation7 + $0xbf8] sm:$0xff]
    %v602 = vld [vmem:[#allocation7 + $0xc00] sm:$0xff]
    %v603 = vld [vmem:[#allocation7 + $0xc08] sm:$0xff]
    %v604 = vld [vmem:[#allocation7 + $0xc10] sm:$0xff]
    %v605 = vld [vmem:[#allocation7 + $0xc18] sm:$0xff]
    %v606 = vld [vmem:[#allocation7 + $0xc20] sm:$0xff]
    %v607 = vld [vmem:[#allocation7 + $0xc28] sm:$0xff]
    %v608 = vld [vmem:[#allocation7 + $0xc30] sm:$0xff]
    %v609 = vld [vmem:[#allocation7 + $0xc38] sm:$0xff]
    %v610 = vld [vmem:[#allocation7 + $0xc40] sm:$0xff]
    %v611 = vld [vmem:[#allocation7 + $0xc48] sm:$0xff]
    %v612 = vld [vmem:[#allocation7 + $0xc50] sm:$0xff]
    %v613 = vld [vmem:[#allocation7 + $0xc58] sm:$0xff]
    %v614 = vld [vmem:[#allocation7 + $0xc60] sm:$0xff]
    %v615 = vld [vmem:[#allocation7 + $0xc68] sm:$0xff]
    %v616 = vld [vmem:[#allocation7 + $0xc70] sm:$0xff]
    %v617 = vld [vmem:[#allocation7 + $0xc78] sm:$0xff]
    %v618 = vld [vmem:[#allocation7 + $0xc80] sm:$0xff]
    %v619 = vld [vmem:[#allocation7 + $0xc88] sm:$0xff]
    %v620 = vld [vmem:[#allocation7 + $0xc90] sm:$0xff]
    %v621 = vld [vmem:[#allocation7 + $0xc98] sm:$0xff]
    %v622 = vld [vmem:[#allocation7 + $0xca0] sm:$0xff]
    %v623 = vld [vmem:[#allocation7 + $0xca8] sm:$0xff]
    %v624 = vld [vmem:[#allocation7 + $0xcb0] sm:$0xff]
    %v625 = vld [vmem:[#allocation7 + $0xcb8] sm:$0xff]
    %v626 = vld [vmem:[#allocation7 + $0xcc0] sm:$0xff]
    %v627 = vld [vmem:[#allocation7 + $0xcc8] sm:$0xff]
    %v628 = vld [vmem:[#allocation7 + $0xcd0] sm:$0xff]
    %v629 = vld [vmem:[#allocation7 + $0xcd8] sm:$0xff]
    %v630 = vld [vmem:[#allocation7 + $0xce0] sm:$0xff]
    %v631 = vld [vmem:[#allocation7 + $0xce8] sm:$0xff]
    %v632 = vld [vmem:[#allocation7 + $0xcf0] sm:$0xff]
    %v633 = vld [vmem:[#allocation7 + $0xcf8] sm:$0xff]
    %v634 = vld [vmem:[#allocation7 + $0xd00] sm:$0xff]
    %v635 = vld [vmem:[#allocation7 + $0xd08] sm:$0xff]
    %v636 = vld [vmem:[#allocation7 + $0xd10] sm:$0xff]
    %v637 = vld [vmem:[#allocation7 + $0xd18] sm:$0xff]
    %v638 = vld [vmem:[#allocation7 + $0xd20] sm:$0xff]
    %v639 = vld [vmem:[#allocation7 + $0xd28] sm:$0xff]
    %v640 = vld [vmem:[#allocation7 + $0xd30] sm:$0xff]
    %v641 = vld [vmem:[#allocation7 + $0xd38] sm:$0xff]
    %v642 = vld [vmem:[#allocation7 + $0xd40] sm:$0xff]
    %v643 = vld [vmem:[#allocation7 + $0xd48] sm:$0xff]
    %v644 = vld [vmem:[#allocation7 + $0xd50] sm:$0xff]
    %v645 = vld [vmem:[#allocation7 + $0xd58] sm:$0xff]
    %v646 = vld [vmem:[#allocation7 + $0xd60] sm:$0xff]
    %v647 = vld [vmem:[#allocation7 + $0xd68] sm:$0xff]
    %v648 = vld [vmem:[#allocation7 + $0xd70] sm:$0xff]
    %v649 = vld [vmem:[#allocation7 + $0xd78] sm:$0xff]
    %v650 = vld [vmem:[#allocation7 + $0xd80] sm:$0xff]
    %v651 = vld [vmem:[#allocation7 + $0xd88] sm:$0xff]
    %v652 = vld [vmem:[#allocation7 + $0xd90] sm:$0xff]
    %v653 = vld [vmem:[#allocation7 + $0xd98] sm:$0xff]
    %v654 = vld [vmem:[#allocation7 + $0xda0] sm:$0xff]
    %v655 = vld [vmem:[#allocation7 + $0xda8] sm:$0xff]
    %v656 = vld [vmem:[#allocation7 + $0xdb0] sm:$0xff]
    %v657 = vld [vmem:[#allocation7 + $0xdb8] sm:$0xff]
    %v658 = vld [vmem:[#allocation7 + $0xdc0] sm:$0xff]
    %v659 = vld [vmem:[#allocation7 + $0xdc8] sm:$0xff]
    %v660 = vld [vmem:[#allocation7 + $0xdd0] sm:$0xff]
    %v661 = vld [vmem:[#allocation7 + $0xdd8] sm:$0xff]
    %v662 = vld [vmem:[#allocation7 + $0xde0] sm:$0xff]
    %v663 = vld [vmem:[#allocation7 + $0xde8] sm:$0xff]
    %v664 = vld [vmem:[#allocation7 + $0xdf0] sm:$0xff]
    %v665 = vld [vmem:[#allocation7 + $0xdf8] sm:$0xff]
    %v666 = vld [vmem:[#allocation7 + $0xe00] sm:$0xff]
    %v667 = vld [vmem:[#allocation7 + $0xe08] sm:$0xff]
    %v668 = vld [vmem:[#allocation7 + $0xe10] sm:$0xff]
    %v669 = vld [vmem:[#allocation7 + $0xe18] sm:$0xff]
    %v670 = vld [vmem:[#allocation7 + $0xe20] sm:$0xff]
    %v671 = vld [vmem:[#allocation7 + $0xe28] sm:$0xff]
    %v672 = vld [vmem:[#allocation7 + $0xe30] sm:$0xff]
    %v673 = vld [vmem:[#allocation7 + $0xe38] sm:$0xff]
    %v674 = vld [vmem:[#allocation7 + $0xe40] sm:$0xff]
    %v675 = vld [vmem:[#allocation7 + $0xe48] sm:$0xff]
    %v676 = vld [vmem:[#allocation7 + $0xe50] sm:$0xff]
    %v677 = vld [vmem:[#allocation7 + $0xe58] sm:$0xff]
    %v678 = vld [vmem:[#allocation7 + $0xe60] sm:$0xff]
    %v679 = vld [vmem:[#allocation7 + $0xe68] sm:$0xff]
    %v680 = vld [vmem:[#allocation7 + $0xe70] sm:$0xff]
    %v681 = vld [vmem:[#allocation7 + $0xe78] sm:$0xff]
    %v682 = vld [vmem:[#allocation7 + $0xe80] sm:$0xff]
    %v683 = vld [vmem:[#allocation7 + $0xe88] sm:$0xff]
    %v684 = vld [vmem:[#allocation7 + $0xe90] sm:$0xff]
    %v685 = vld [vmem:[#allocation7 + $0xe98] sm:$0xff]
    %v686 = vld [vmem:[#allocation7 + $0xea0] sm:$0xff]
    %v687 = vld [vmem:[#allocation7 + $0xea8] sm:$0xff]
    %v688 = vld [vmem:[#allocation7 + $0xeb0] sm:$0xff]
    %v689 = vld [vmem:[#allocation7 + $0xeb8] sm:$0xff]
    %v690 = vld [vmem:[#allocation7 + $0xec0] sm:$0xff]
    %v691 = vld [vmem:[#allocation7 + $0xec8] sm:$0xff]
    %v692 = vld [vmem:[#allocation7 + $0xed0] sm:$0xff]
    %v693 = vld [vmem:[#allocation7 + $0xed8] sm:$0xff]
    %v694 = vld [vmem:[#allocation7 + $0xee0] sm:$0xff]
    %v695 = vld [vmem:[#allocation7 + $0xee8] sm:$0xff]
    %v696 = vld [vmem:[#allocation7 + $0xef0] sm:$0xff]
    %v697 = vld [vmem:[#allocation7 + $0xef8] sm:$0xff]
    %v698 = vld [vmem:[#allocation7 + $0xf00] sm:$0xff]
    %v699 = vld [vmem:[#allocation7 + $0xf08] sm:$0xff]
    %v700 = vld [vmem:[#allocation7 + $0xf10] sm:$0xff]
    %v701 = vld [vmem:[#allocation7 + $0xf18] sm:$0xff]
    %v702 = vld [vmem:[#allocation7 + $0xf20] sm:$0xff]
    %v703 = vld [vmem:[#allocation7 + $0xf28] sm:$0xff]
    %v704 = vld [vmem:[#allocation7 + $0xf30] sm:$0xff]
    %v705 = vld [vmem:[#allocation7 + $0xf38] sm:$0xff]
    %v706 = vld [vmem:[#allocation7 + $0xf40] sm:$0xff]
    %v707 = vld [vmem:[#allocation7 + $0xf48] sm:$0xff]
    %v708 = vld [vmem:[#allocation7 + $0xf50] sm:$0xff]
    %v709 = vld [vmem:[#allocation7 + $0xf58] sm:$0xff]
    %v710 = vld [vmem:[#allocation7 + $0xf60] sm:$0xff]
    %v711 = vld [vmem:[#allocation7 + $0xf68] sm:$0xff]
    %v712 = vld [vmem:[#allocation7 + $0xf70] sm:$0xff]
    %v713 = vld [vmem:[#allocation7 + $0xf78] sm:$0xff]
    %v714 = vld [vmem:[#allocation7 + $0xf80] sm:$0xff]
    %v715 = vld [vmem:[#allocation7 + $0xf88] sm:$0xff]
    %v716 = vld [vmem:[#allocation7 + $0xf90] sm:$0xff]
    %v717 = vld [vmem:[#allocation7 + $0xf98] sm:$0xff]
    %v718 = vld [vmem:[#allocation7 + $0xfa0] sm:$0xff]
    %v719 = vld [vmem:[#allocation7 + $0xfa8] sm:$0xff]
    %v720 = vld [vmem:[#allocation7 + $0xfb0] sm:$0xff]
    %v721 = vld [vmem:[#allocation7 + $0xfb8] sm:$0xff]
    %v722 = vld [vmem:[#allocation7 + $0xfc0] sm:$0xff]
    %v723 = vld [vmem:[#allocation7 + $0xfc8] sm:$0xff]
    %v724 = vld [vmem:[#allocation7 + $0xfd0] sm:$0xff]
    %v725 = vld [vmem:[#allocation7 + $0xfd8] sm:$0xff]
    %v726 = vld [vmem:[#allocation7 + $0xfe0] sm:$0xff]
    %v727 = vld [vmem:[#allocation7 + $0xfe8] sm:$0xff]
    %v728 = vld [vmem:[#allocation7 + $0xff0] sm:$0xff]
    %v729 = vld [vmem:[#allocation7 + $0xff8] sm:$0xff]
    %v730 = vunpack.c.l.bf16 %v218
    %v731 = vunpack.c.h.bf16 %v218
    %v732 = vunpack.c.l.bf16 %v219
    %v733 = vunpack.c.h.bf16 %v219
    %v734 = vunpack.c.l.bf16 %v220
    %v735 = vunpack.c.h.bf16 %v220
    %v736 = vunpack.c.l.bf16 %v221
    %v737 = vunpack.c.h.bf16 %v221
    %v738 = vunpack.c.l.bf16 %v222
    %v739 = vunpack.c.h.bf16 %v222
    %v740 = vunpack.c.l.bf16 %v223
    %v741 = vunpack.c.h.bf16 %v223
    %v742 = vunpack.c.l.bf16 %v224
    %v743 = vunpack.c.h.bf16 %v224
    %v744 = vunpack.c.l.bf16 %v225
    %v745 = vunpack.c.h.bf16 %v225
    %v746 = vunpack.c.l.bf16 %v226
    %v747 = vunpack.c.h.bf16 %v226
    %v748 = vunpack.c.l.bf16 %v227
    %v749 = vunpack.c.h.bf16 %v227
    %v750 = vunpack.c.l.bf16 %v228
    %v751 = vunpack.c.h.bf16 %v228
    %v752 = vunpack.c.l.bf16 %v229
    %v753 = vunpack.c.h.bf16 %v229
    %v754 = vunpack.c.l.bf16 %v230
    %v755 = vunpack.c.h.bf16 %v230
    %v756 = vunpack.c.l.bf16 %v231
    %v757 = vunpack.c.h.bf16 %v231
    %v758 = vunpack.c.l.bf16 %v232
    %v759 = vunpack.c.h.bf16 %v232
    %v760 = vunpack.c.l.bf16 %v233
    %v761 = vunpack.c.h.bf16 %v233
    %v762 = vunpack.c.l.bf16 %v234
    %v763 = vunpack.c.h.bf16 %v234
    %v764 = vunpack.c.l.bf16 %v235
    %v765 = vunpack.c.h.bf16 %v235
    %v766 = vunpack.c.l.bf16 %v236
    %v767 = vunpack.c.h.bf16 %v236
    %v768 = vunpack.c.l.bf16 %v237
    %v769 = vunpack.c.h.bf16 %v237
    %v770 = vunpack.c.l.bf16 %v238
    %v771 = vunpack.c.h.bf16 %v238
    %v772 = vunpack.c.l.bf16 %v239
    %v773 = vunpack.c.h.bf16 %v239
    %v774 = vunpack.c.l.bf16 %v240
    %v775 = vunpack.c.h.bf16 %v240
    %v776 = vunpack.c.l.bf16 %v241
    %v777 = vunpack.c.h.bf16 %v241
    %v778 = vunpack.c.l.bf16 %v242
    %v779 = vunpack.c.h.bf16 %v242
    %v780 = vunpack.c.l.bf16 %v243
    %v781 = vunpack.c.h.bf16 %v243
    %v782 = vunpack.c.l.bf16 %v244
    %v783 = vunpack.c.h.bf16 %v244
    %v784 = vunpack.c.l.bf16 %v245
    %v785 = vunpack.c.h.bf16 %v245
    %v786 = vunpack.c.l.bf16 %v246
    %v787 = vunpack.c.h.bf16 %v246
    %v788 = vunpack.c.l.bf16 %v247
    %v789 = vunpack.c.h.bf16 %v247
    %v790 = vunpack.c.l.bf16 %v248
    %v791 = vunpack.c.h.bf16 %v248
    %v792 = vunpack.c.l.bf16 %v249
    %v793 = vunpack.c.h.bf16 %v249
    %v794 = vunpack.c.l.bf16 %v250
    %v795 = vunpack.c.h.bf16 %v250
    %v796 = vunpack.c.l.bf16 %v251
    %v797 = vunpack.c.h.bf16 %v251
    %v798 = vunpack.c.l.bf16 %v252
    %v799 = vunpack.c.h.bf16 %v252
    %v800 = vunpack.c.l.bf16 %v253
    %v801 = vunpack.c.h.bf16 %v253
    %v802 = vunpack.c.l.bf16 %v254
    %v803 = vunpack.c.h.bf16 %v254
    %v804 = vunpack.c.l.bf16 %v255
    %v805 = vunpack.c.h.bf16 %v255
    %v806 = vunpack.c.l.bf16 %v256
    %v807 = vunpack.c.h.bf16 %v256
    %v808 = vunpack.c.l.bf16 %v257
    %v809 = vunpack.c.h.bf16 %v257
    %v810 = vunpack.c.l.bf16 %v258
    %v811 = vunpack.c.h.bf16 %v258
    %v812 = vunpack.c.l.bf16 %v259
    %v813 = vunpack.c.h.bf16 %v259
    %v814 = vunpack.c.l.bf16 %v260
    %v815 = vunpack.c.h.bf16 %v260
    %v816 = vunpack.c.l.bf16 %v261
    %v817 = vunpack.c.h.bf16 %v261
    %v818 = vunpack.c.l.bf16 %v262
    %v819 = vunpack.c.h.bf16 %v262
    %v820 = vunpack.c.l.bf16 %v263
    %v821 = vunpack.c.h.bf16 %v263
    %v822 = vunpack.c.l.bf16 %v264
    %v823 = vunpack.c.h.bf16 %v264
    %v824 = vunpack.c.l.bf16 %v265
    %v825 = vunpack.c.h.bf16 %v265
    %v826 = vunpack.c.l.bf16 %v266
    %v827 = vunpack.c.h.bf16 %v266
    %v828 = vunpack.c.l.bf16 %v267
    %v829 = vunpack.c.h.bf16 %v267
    %v830 = vunpack.c.l.bf16 %v268
    %v831 = vunpack.c.h.bf16 %v268
    %v832 = vunpack.c.l.bf16 %v269
    %v833 = vunpack.c.h.bf16 %v269
    %v834 = vunpack.c.l.bf16 %v270
    %v835 = vunpack.c.h.bf16 %v270
    %v836 = vunpack.c.l.bf16 %v271
    %v837 = vunpack.c.h.bf16 %v271
    %v838 = vunpack.c.l.bf16 %v272
    %v839 = vunpack.c.h.bf16 %v272
    %v840 = vunpack.c.l.bf16 %v273
    %v841 = vunpack.c.h.bf16 %v273
    %v842 = vunpack.c.l.bf16 %v274
    %v843 = vunpack.c.h.bf16 %v274
    %v844 = vunpack.c.l.bf16 %v275
    %v845 = vunpack.c.h.bf16 %v275
    %v846 = vunpack.c.l.bf16 %v276
    %v847 = vunpack.c.h.bf16 %v276
    %v848 = vunpack.c.l.bf16 %v277
    %v849 = vunpack.c.h.bf16 %v277
    %v850 = vunpack.c.l.bf16 %v278
    %v851 = vunpack.c.h.bf16 %v278
    %v852 = vunpack.c.l.bf16 %v279
    %v853 = vunpack.c.h.bf16 %v279
    %v854 = vunpack.c.l.bf16 %v280
    %v855 = vunpack.c.h.bf16 %v280
    %v856 = vunpack.c.l.bf16 %v281
    %v857 = vunpack.c.h.bf16 %v281
    %v858 = vunpack.c.l.bf16 %v282
    %v859 = vunpack.c.h.bf16 %v282
    %v860 = vunpack.c.l.bf16 %v283
    %v861 = vunpack.c.h.bf16 %v283
    %v862 = vunpack.c.l.bf16 %v284
    %v863 = vunpack.c.h.bf16 %v284
    %v864 = vunpack.c.l.bf16 %v285
    %v865 = vunpack.c.h.bf16 %v285
    %v866 = vunpack.c.l.bf16 %v286
    %v867 = vunpack.c.h.bf16 %v286
    %v868 = vunpack.c.l.bf16 %v287
    %v869 = vunpack.c.h.bf16 %v287
    %v870 = vunpack.c.l.bf16 %v288
    %v871 = vunpack.c.h.bf16 %v288
    %v872 = vunpack.c.l.bf16 %v289
    %v873 = vunpack.c.h.bf16 %v289
    %v874 = vunpack.c.l.bf16 %v290
    %v875 = vunpack.c.h.bf16 %v290
    %v876 = vunpack.c.l.bf16 %v291
    %v877 = vunpack.c.h.bf16 %v291
    %v878 = vunpack.c.l.bf16 %v292
    %v879 = vunpack.c.h.bf16 %v292
    %v880 = vunpack.c.l.bf16 %v293
    %v881 = vunpack.c.h.bf16 %v293
    %v882 = vunpack.c.l.bf16 %v294
    %v883 = vunpack.c.h.bf16 %v294
    %v884 = vunpack.c.l.bf16 %v295
    %v885 = vunpack.c.h.bf16 %v295
    %v886 = vunpack.c.l.bf16 %v296
    %v887 = vunpack.c.h.bf16 %v296
    %v888 = vunpack.c.l.bf16 %v297
    %v889 = vunpack.c.h.bf16 %v297
    %v890 = vunpack.c.l.bf16 %v298
    %v891 = vunpack.c.h.bf16 %v298
    %v892 = vunpack.c.l.bf16 %v299
    %v893 = vunpack.c.h.bf16 %v299
    %v894 = vunpack.c.l.bf16 %v300
    %v895 = vunpack.c.h.bf16 %v300
    %v896 = vunpack.c.l.bf16 %v301
    %v897 = vunpack.c.h.bf16 %v301
    %v898 = vunpack.c.l.bf16 %v302
    %v899 = vunpack.c.h.bf16 %v302
    %v900 = vunpack.c.l.bf16 %v303
    %v901 = vunpack.c.h.bf16 %v303
    %v902 = vunpack.c.l.bf16 %v304
    %v903 = vunpack.c.h.bf16 %v304
    %v904 = vunpack.c.l.bf16 %v305
    %v905 = vunpack.c.h.bf16 %v305
    %v906 = vunpack.c.l.bf16 %v306
    %v907 = vunpack.c.h.bf16 %v306
    %v908 = vunpack.c.l.bf16 %v307
    %v909 = vunpack.c.h.bf16 %v307
    %v910 = vunpack.c.l.bf16 %v308
    %v911 = vunpack.c.h.bf16 %v308
    %v912 = vunpack.c.l.bf16 %v309
    %v913 = vunpack.c.h.bf16 %v309
    %v914 = vunpack.c.l.bf16 %v310
    %v915 = vunpack.c.h.bf16 %v310
    %v916 = vunpack.c.l.bf16 %v311
    %v917 = vunpack.c.h.bf16 %v311
    %v918 = vunpack.c.l.bf16 %v312
    %v919 = vunpack.c.h.bf16 %v312
    %v920 = vunpack.c.l.bf16 %v313
    %v921 = vunpack.c.h.bf16 %v313
    %v922 = vunpack.c.l.bf16 %v314
    %v923 = vunpack.c.h.bf16 %v314
    %v924 = vunpack.c.l.bf16 %v315
    %v925 = vunpack.c.h.bf16 %v315
    %v926 = vunpack.c.l.bf16 %v316
    %v927 = vunpack.c.h.bf16 %v316
    %v928 = vunpack.c.l.bf16 %v317
    %v929 = vunpack.c.h.bf16 %v317
    %v930 = vunpack.c.l.bf16 %v318
    %v931 = vunpack.c.h.bf16 %v318
    %v932 = vunpack.c.l.bf16 %v319
    %v933 = vunpack.c.h.bf16 %v319
    %v934 = vunpack.c.l.bf16 %v320
    %v935 = vunpack.c.h.bf16 %v320
    %v936 = vunpack.c.l.bf16 %v321
    %v937 = vunpack.c.h.bf16 %v321
    %v938 = vunpack.c.l.bf16 %v322
    %v939 = vunpack.c.h.bf16 %v322
    %v940 = vunpack.c.l.bf16 %v323
    %v941 = vunpack.c.h.bf16 %v323
    %v942 = vunpack.c.l.bf16 %v324
    %v943 = vunpack.c.h.bf16 %v324
    %v944 = vunpack.c.l.bf16 %v325
    %v945 = vunpack.c.h.bf16 %v325
    %v946 = vunpack.c.l.bf16 %v326
    %v947 = vunpack.c.h.bf16 %v326
    %v948 = vunpack.c.l.bf16 %v327
    %v949 = vunpack.c.h.bf16 %v327
    %v950 = vunpack.c.l.bf16 %v328
    %v951 = vunpack.c.h.bf16 %v328
    %v952 = vunpack.c.l.bf16 %v329
    %v953 = vunpack.c.h.bf16 %v329
    %v954 = vunpack.c.l.bf16 %v330
    %v955 = vunpack.c.h.bf16 %v330
    %v956 = vunpack.c.l.bf16 %v331
    %v957 = vunpack.c.h.bf16 %v331
    %v958 = vunpack.c.l.bf16 %v332
    %v959 = vunpack.c.h.bf16 %v332
    %v960 = vunpack.c.l.bf16 %v333
    %v961 = vunpack.c.h.bf16 %v333
    %v962 = vunpack.c.l.bf16 %v334
    %v963 = vunpack.c.h.bf16 %v334
    %v964 = vunpack.c.l.bf16 %v335
    %v965 = vunpack.c.h.bf16 %v335
    %v966 = vunpack.c.l.bf16 %v336
    %v967 = vunpack.c.h.bf16 %v336
    %v968 = vunpack.c.l.bf16 %v337
    %v969 = vunpack.c.h.bf16 %v337
    %v970 = vunpack.c.l.bf16 %v338
    %v971 = vunpack.c.h.bf16 %v338
    %v972 = vunpack.c.l.bf16 %v339
    %v973 = vunpack.c.h.bf16 %v339
    %v974 = vunpack.c.l.bf16 %v340
    %v975 = vunpack.c.h.bf16 %v340
    %v976 = vunpack.c.l.bf16 %v341
    %v977 = vunpack.c.h.bf16 %v341
    %v978 = vunpack.c.l.bf16 %v342
    %v979 = vunpack.c.h.bf16 %v342
    %v980 = vunpack.c.l.bf16 %v343
    %v981 = vunpack.c.h.bf16 %v343
    %v982 = vunpack.c.l.bf16 %v344
    %v983 = vunpack.c.h.bf16 %v344
    %v984 = vunpack.c.l.bf16 %v345
    %v985 = vunpack.c.h.bf16 %v345
    %v986 = vunpack.c.l.bf16 %v346
    %v987 = vunpack.c.h.bf16 %v346
    %v988 = vunpack.c.l.bf16 %v347
    %v989 = vunpack.c.h.bf16 %v347
    %v990 = vunpack.c.l.bf16 %v348
    %v991 = vunpack.c.h.bf16 %v348
    %v992 = vunpack.c.l.bf16 %v349
    %v993 = vunpack.c.h.bf16 %v349
    %v994 = vunpack.c.l.bf16 %v350
    %v995 = vunpack.c.h.bf16 %v350
    %v996 = vunpack.c.l.bf16 %v351
    %v997 = vunpack.c.h.bf16 %v351
    %v998 = vunpack.c.l.bf16 %v352
    %v999 = vunpack.c.h.bf16 %v352
    %v1000 = vunpack.c.l.bf16 %v353
    %v1001 = vunpack.c.h.bf16 %v353
    %v1002 = vunpack.c.l.bf16 %v354
    %v1003 = vunpack.c.h.bf16 %v354
    %v1004 = vunpack.c.l.bf16 %v355
    %v1005 = vunpack.c.h.bf16 %v355
    %v1006 = vunpack.c.l.bf16 %v356
    %v1007 = vunpack.c.h.bf16 %v356
    %v1008 = vunpack.c.l.bf16 %v357
    %v1009 = vunpack.c.h.bf16 %v357
    %v1010 = vunpack.c.l.bf16 %v358
    %v1011 = vunpack.c.h.bf16 %v358
    %v1012 = vunpack.c.l.bf16 %v359
    %v1013 = vunpack.c.h.bf16 %v359
    %v1014 = vunpack.c.l.bf16 %v360
    %v1015 = vunpack.c.h.bf16 %v360
    %v1016 = vunpack.c.l.bf16 %v361
    %v1017 = vunpack.c.h.bf16 %v361
    %v1018 = vunpack.c.l.bf16 %v362
    %v1019 = vunpack.c.h.bf16 %v362
    %v1020 = vunpack.c.l.bf16 %v363
    %v1021 = vunpack.c.h.bf16 %v363
    %v1022 = vunpack.c.l.bf16 %v364
    %v1023 = vunpack.c.h.bf16 %v364
    %v1024 = vunpack.c.l.bf16 %v365
    %v1025 = vunpack.c.h.bf16 %v365
    %v1026 = vunpack.c.l.bf16 %v366
    %v1027 = vunpack.c.h.bf16 %v366
    %v1028 = vunpack.c.l.bf16 %v367
    %v1029 = vunpack.c.h.bf16 %v367
    %v1030 = vunpack.c.l.bf16 %v368
    %v1031 = vunpack.c.h.bf16 %v368
    %v1032 = vunpack.c.l.bf16 %v369
    %v1033 = vunpack.c.h.bf16 %v369
    %v1034 = vunpack.c.l.bf16 %v370
    %v1035 = vunpack.c.h.bf16 %v370
    %v1036 = vunpack.c.l.bf16 %v371
    %v1037 = vunpack.c.h.bf16 %v371
    %v1038 = vunpack.c.l.bf16 %v372
    %v1039 = vunpack.c.h.bf16 %v372
    %v1040 = vunpack.c.l.bf16 %v373
    %v1041 = vunpack.c.h.bf16 %v373
    %v1042 = vunpack.c.l.bf16 %v374
    %v1043 = vunpack.c.h.bf16 %v374
    %v1044 = vunpack.c.l.bf16 %v375
    %v1045 = vunpack.c.h.bf16 %v375
    %v1046 = vunpack.c.l.bf16 %v376
    %v1047 = vunpack.c.h.bf16 %v376
    %v1048 = vunpack.c.l.bf16 %v377
    %v1049 = vunpack.c.h.bf16 %v377
    %v1050 = vunpack.c.l.bf16 %v378
    %v1051 = vunpack.c.h.bf16 %v378
    %v1052 = vunpack.c.l.bf16 %v379
    %v1053 = vunpack.c.h.bf16 %v379
    %v1054 = vunpack.c.l.bf16 %v380
    %v1055 = vunpack.c.h.bf16 %v380
    %v1056 = vunpack.c.l.bf16 %v381
    %v1057 = vunpack.c.h.bf16 %v381
    %v1058 = vunpack.c.l.bf16 %v382
    %v1059 = vunpack.c.h.bf16 %v382
    %v1060 = vunpack.c.l.bf16 %v383
    %v1061 = vunpack.c.h.bf16 %v383
    %v1062 = vunpack.c.l.bf16 %v384
    %v1063 = vunpack.c.h.bf16 %v384
    %v1064 = vunpack.c.l.bf16 %v385
    %v1065 = vunpack.c.h.bf16 %v385
    %v1066 = vunpack.c.l.bf16 %v386
    %v1067 = vunpack.c.h.bf16 %v386
    %v1068 = vunpack.c.l.bf16 %v387
    %v1069 = vunpack.c.h.bf16 %v387
    %v1070 = vunpack.c.l.bf16 %v388
    %v1071 = vunpack.c.h.bf16 %v388
    %v1072 = vunpack.c.l.bf16 %v389
    %v1073 = vunpack.c.h.bf16 %v389
    %v1074 = vunpack.c.l.bf16 %v390
    %v1075 = vunpack.c.h.bf16 %v390
    %v1076 = vunpack.c.l.bf16 %v391
    %v1077 = vunpack.c.h.bf16 %v391
    %v1078 = vunpack.c.l.bf16 %v392
    %v1079 = vunpack.c.h.bf16 %v392
    %v1080 = vunpack.c.l.bf16 %v393
    %v1081 = vunpack.c.h.bf16 %v393
    %v1082 = vunpack.c.l.bf16 %v394
    %v1083 = vunpack.c.h.bf16 %v394
    %v1084 = vunpack.c.l.bf16 %v395
    %v1085 = vunpack.c.h.bf16 %v395
    %v1086 = vunpack.c.l.bf16 %v396
    %v1087 = vunpack.c.h.bf16 %v396
    %v1088 = vunpack.c.l.bf16 %v397
    %v1089 = vunpack.c.h.bf16 %v397
    %v1090 = vunpack.c.l.bf16 %v398
    %v1091 = vunpack.c.h.bf16 %v398
    %v1092 = vunpack.c.l.bf16 %v399
    %v1093 = vunpack.c.h.bf16 %v399
    %v1094 = vunpack.c.l.bf16 %v400
    %v1095 = vunpack.c.h.bf16 %v400
    %v1096 = vunpack.c.l.bf16 %v401
    %v1097 = vunpack.c.h.bf16 %v401
    %v1098 = vunpack.c.l.bf16 %v402
    %v1099 = vunpack.c.h.bf16 %v402
    %v1100 = vunpack.c.l.bf16 %v403
    %v1101 = vunpack.c.h.bf16 %v403
    %v1102 = vunpack.c.l.bf16 %v404
    %v1103 = vunpack.c.h.bf16 %v404
    %v1104 = vunpack.c.l.bf16 %v405
    %v1105 = vunpack.c.h.bf16 %v405
    %v1106 = vunpack.c.l.bf16 %v406
    %v1107 = vunpack.c.h.bf16 %v406
    %v1108 = vunpack.c.l.bf16 %v407
    %v1109 = vunpack.c.h.bf16 %v407
    %v1110 = vunpack.c.l.bf16 %v408
    %v1111 = vunpack.c.h.bf16 %v408
    %v1112 = vunpack.c.l.bf16 %v409
    %v1113 = vunpack.c.h.bf16 %v409
    %v1114 = vunpack.c.l.bf16 %v410
    %v1115 = vunpack.c.h.bf16 %v410
    %v1116 = vunpack.c.l.bf16 %v411
    %v1117 = vunpack.c.h.bf16 %v411
    %v1118 = vunpack.c.l.bf16 %v412
    %v1119 = vunpack.c.h.bf16 %v412
    %v1120 = vunpack.c.l.bf16 %v413
    %v1121 = vunpack.c.h.bf16 %v413
    %v1122 = vunpack.c.l.bf16 %v414
    %v1123 = vunpack.c.h.bf16 %v414
    %v1124 = vunpack.c.l.bf16 %v415
    %v1125 = vunpack.c.h.bf16 %v415
    %v1126 = vunpack.c.l.bf16 %v416
    %v1127 = vunpack.c.h.bf16 %v416
    %v1128 = vunpack.c.l.bf16 %v417
    %v1129 = vunpack.c.h.bf16 %v417
    %v1130 = vunpack.c.l.bf16 %v418
    %v1131 = vunpack.c.h.bf16 %v418
    %v1132 = vunpack.c.l.bf16 %v419
    %v1133 = vunpack.c.h.bf16 %v419
    %v1134 = vunpack.c.l.bf16 %v420
    %v1135 = vunpack.c.h.bf16 %v420
    %v1136 = vunpack.c.l.bf16 %v421
    %v1137 = vunpack.c.h.bf16 %v421
    %v1138 = vunpack.c.l.bf16 %v422
    %v1139 = vunpack.c.h.bf16 %v422
    %v1140 = vunpack.c.l.bf16 %v423
    %v1141 = vunpack.c.h.bf16 %v423
    %v1142 = vunpack.c.l.bf16 %v424
    %v1143 = vunpack.c.h.bf16 %v424
    %v1144 = vunpack.c.l.bf16 %v425
    %v1145 = vunpack.c.h.bf16 %v425
    %v1146 = vunpack.c.l.bf16 %v426
    %v1147 = vunpack.c.h.bf16 %v426
    %v1148 = vunpack.c.l.bf16 %v427
    %v1149 = vunpack.c.h.bf16 %v427
    %v1150 = vunpack.c.l.bf16 %v428
    %v1151 = vunpack.c.h.bf16 %v428
    %v1152 = vunpack.c.l.bf16 %v429
    %v1153 = vunpack.c.h.bf16 %v429
    %v1154 = vunpack.c.l.bf16 %v430
    %v1155 = vunpack.c.h.bf16 %v430
    %v1156 = vunpack.c.l.bf16 %v431
    %v1157 = vunpack.c.h.bf16 %v431
    %v1158 = vunpack.c.l.bf16 %v432
    %v1159 = vunpack.c.h.bf16 %v432
    %v1160 = vunpack.c.l.bf16 %v433
    %v1161 = vunpack.c.h.bf16 %v433
    %v1162 = vunpack.c.l.bf16 %v434
    %v1163 = vunpack.c.h.bf16 %v434
    %v1164 = vunpack.c.l.bf16 %v435
    %v1165 = vunpack.c.h.bf16 %v435
    %v1166 = vunpack.c.l.bf16 %v436
    %v1167 = vunpack.c.h.bf16 %v436
    %v1168 = vunpack.c.l.bf16 %v437
    %v1169 = vunpack.c.h.bf16 %v437
    %v1170 = vunpack.c.l.bf16 %v438
    %v1171 = vunpack.c.h.bf16 %v438
    %v1172 = vunpack.c.l.bf16 %v439
    %v1173 = vunpack.c.h.bf16 %v439
    %v1174 = vunpack.c.l.bf16 %v440
    %v1175 = vunpack.c.h.bf16 %v440
    %v1176 = vunpack.c.l.bf16 %v441
    %v1177 = vunpack.c.h.bf16 %v441
    %v1178 = vunpack.c.l.bf16 %v442
    %v1179 = vunpack.c.h.bf16 %v442
    %v1180 = vunpack.c.l.bf16 %v443
    %v1181 = vunpack.c.h.bf16 %v443
    %v1182 = vunpack.c.l.bf16 %v444
    %v1183 = vunpack.c.h.bf16 %v444
    %v1184 = vunpack.c.l.bf16 %v445
    %v1185 = vunpack.c.h.bf16 %v445
    %v1186 = vunpack.c.l.bf16 %v446
    %v1187 = vunpack.c.h.bf16 %v446
    %v1188 = vunpack.c.l.bf16 %v447
    %v1189 = vunpack.c.h.bf16 %v447
    %v1190 = vunpack.c.l.bf16 %v448
    %v1191 = vunpack.c.h.bf16 %v448
    %v1192 = vunpack.c.l.bf16 %v449
    %v1193 = vunpack.c.h.bf16 %v449
    %v1194 = vunpack.c.l.bf16 %v450
    %v1195 = vunpack.c.h.bf16 %v450
    %v1196 = vunpack.c.l.bf16 %v451
    %v1197 = vunpack.c.h.bf16 %v451
    %v1198 = vunpack.c.l.bf16 %v452
    %v1199 = vunpack.c.h.bf16 %v452
    %v1200 = vunpack.c.l.bf16 %v453
    %v1201 = vunpack.c.h.bf16 %v453
    %v1202 = vunpack.c.l.bf16 %v454
    %v1203 = vunpack.c.h.bf16 %v454
    %v1204 = vunpack.c.l.bf16 %v455
    %v1205 = vunpack.c.h.bf16 %v455
    %v1206 = vunpack.c.l.bf16 %v456
    %v1207 = vunpack.c.h.bf16 %v456
    %v1208 = vunpack.c.l.bf16 %v457
    %v1209 = vunpack.c.h.bf16 %v457
    %v1210 = vunpack.c.l.bf16 %v458
    %v1211 = vunpack.c.h.bf16 %v458
    %v1212 = vunpack.c.l.bf16 %v459
    %v1213 = vunpack.c.h.bf16 %v459
    %v1214 = vunpack.c.l.bf16 %v460
    %v1215 = vunpack.c.h.bf16 %v460
    %v1216 = vunpack.c.l.bf16 %v461
    %v1217 = vunpack.c.h.bf16 %v461
    %v1218 = vunpack.c.l.bf16 %v462
    %v1219 = vunpack.c.h.bf16 %v462
    %v1220 = vunpack.c.l.bf16 %v463
    %v1221 = vunpack.c.h.bf16 %v463
    %v1222 = vunpack.c.l.bf16 %v464
    %v1223 = vunpack.c.h.bf16 %v464
    %v1224 = vunpack.c.l.bf16 %v465
    %v1225 = vunpack.c.h.bf16 %v465
    %v1226 = vunpack.c.l.bf16 %v466
    %v1227 = vunpack.c.h.bf16 %v466
    %v1228 = vunpack.c.l.bf16 %v467
    %v1229 = vunpack.c.h.bf16 %v467
    %v1230 = vunpack.c.l.bf16 %v468
    %v1231 = vunpack.c.h.bf16 %v468
    %v1232 = vunpack.c.l.bf16 %v469
    %v1233 = vunpack.c.h.bf16 %v469
    %v1234 = vunpack.c.l.bf16 %v470
    %v1235 = vunpack.c.h.bf16 %v470
    %v1236 = vunpack.c.l.bf16 %v471
    %v1237 = vunpack.c.h.bf16 %v471
    %v1238 = vunpack.c.l.bf16 %v472
    %v1239 = vunpack.c.h.bf16 %v472
    %v1240 = vunpack.c.l.bf16 %v473
    %v1241 = vunpack.c.h.bf16 %v473
    %v1242 = vunpack.c.l.bf16 %v474
    %v1243 = vunpack.c.h.bf16 %v474
    %v1244 = vunpack.c.l.bf16 %v475
    %v1245 = vunpack.c.h.bf16 %v475
    %v1246 = vunpack.c.l.bf16 %v476
    %v1247 = vunpack.c.h.bf16 %v476
    %v1248 = vunpack.c.l.bf16 %v477
    %v1249 = vunpack.c.h.bf16 %v477
    %v1250 = vunpack.c.l.bf16 %v478
    %v1251 = vunpack.c.h.bf16 %v478
    %v1252 = vunpack.c.l.bf16 %v479
    %v1253 = vunpack.c.h.bf16 %v479
    %v1254 = vunpack.c.l.bf16 %v480
    %v1255 = vunpack.c.h.bf16 %v480
    %v1256 = vunpack.c.l.bf16 %v481
    %v1257 = vunpack.c.h.bf16 %v481
    %v1258 = vunpack.c.l.bf16 %v482
    %v1259 = vunpack.c.h.bf16 %v482
    %v1260 = vunpack.c.l.bf16 %v483
    %v1261 = vunpack.c.h.bf16 %v483
    %v1262 = vunpack.c.l.bf16 %v484
    %v1263 = vunpack.c.h.bf16 %v484
    %v1264 = vunpack.c.l.bf16 %v485
    %v1265 = vunpack.c.h.bf16 %v485
    %v1266 = vunpack.c.l.bf16 %v486
    %v1267 = vunpack.c.h.bf16 %v486
    %v1268 = vunpack.c.l.bf16 %v487
    %v1269 = vunpack.c.h.bf16 %v487
    %v1270 = vunpack.c.l.bf16 %v488
    %v1271 = vunpack.c.h.bf16 %v488
    %v1272 = vunpack.c.l.bf16 %v489
    %v1273 = vunpack.c.h.bf16 %v489
    %v1274 = vunpack.c.l.bf16 %v490
    %v1275 = vunpack.c.h.bf16 %v490
    %v1276 = vunpack.c.l.bf16 %v491
    %v1277 = vunpack.c.h.bf16 %v491
    %v1278 = vunpack.c.l.bf16 %v492
    %v1279 = vunpack.c.h.bf16 %v492
    %v1280 = vunpack.c.l.bf16 %v493
    %v1281 = vunpack.c.h.bf16 %v493
    %v1282 = vunpack.c.l.bf16 %v494
    %v1283 = vunpack.c.h.bf16 %v494
    %v1284 = vunpack.c.l.bf16 %v495
    %v1285 = vunpack.c.h.bf16 %v495
    %v1286 = vunpack.c.l.bf16 %v496
    %v1287 = vunpack.c.h.bf16 %v496
    %v1288 = vunpack.c.l.bf16 %v497
    %v1289 = vunpack.c.h.bf16 %v497
    %v1290 = vunpack.c.l.bf16 %v498
    %v1291 = vunpack.c.h.bf16 %v498
    %v1292 = vunpack.c.l.bf16 %v499
    %v1293 = vunpack.c.h.bf16 %v499
    %v1294 = vunpack.c.l.bf16 %v500
    %v1295 = vunpack.c.h.bf16 %v500
    %v1296 = vunpack.c.l.bf16 %v501
    %v1297 = vunpack.c.h.bf16 %v501
    %v1298 = vunpack.c.l.bf16 %v502
    %v1299 = vunpack.c.h.bf16 %v502
    %v1300 = vunpack.c.l.bf16 %v503
    %v1301 = vunpack.c.h.bf16 %v503
    %v1302 = vunpack.c.l.bf16 %v504
    %v1303 = vunpack.c.h.bf16 %v504
    %v1304 = vunpack.c.l.bf16 %v505
    %v1305 = vunpack.c.h.bf16 %v505
    %v1306 = vunpack.c.l.bf16 %v506
    %v1307 = vunpack.c.h.bf16 %v506
    %v1308 = vunpack.c.l.bf16 %v507
    %v1309 = vunpack.c.h.bf16 %v507
    %v1310 = vunpack.c.l.bf16 %v508
    %v1311 = vunpack.c.h.bf16 %v508
    %v1312 = vunpack.c.l.bf16 %v509
    %v1313 = vunpack.c.h.bf16 %v509
    %v1314 = vunpack.c.l.bf16 %v510
    %v1315 = vunpack.c.h.bf16 %v510
    %v1316 = vunpack.c.l.bf16 %v511
    %v1317 = vunpack.c.h.bf16 %v511
    %v1318 = vunpack.c.l.bf16 %v512
    %v1319 = vunpack.c.h.bf16 %v512
    %v1320 = vunpack.c.l.bf16 %v513
    %v1321 = vunpack.c.h.bf16 %v513
    %v1322 = vunpack.c.l.bf16 %v514
    %v1323 = vunpack.c.h.bf16 %v514
    %v1324 = vunpack.c.l.bf16 %v515
    %v1325 = vunpack.c.h.bf16 %v515
    %v1326 = vunpack.c.l.bf16 %v516
    %v1327 = vunpack.c.h.bf16 %v516
    %v1328 = vunpack.c.l.bf16 %v517
    %v1329 = vunpack.c.h.bf16 %v517
    %v1330 = vunpack.c.l.bf16 %v518
    %v1331 = vunpack.c.h.bf16 %v518
    %v1332 = vunpack.c.l.bf16 %v519
    %v1333 = vunpack.c.h.bf16 %v519
    %v1334 = vunpack.c.l.bf16 %v520
    %v1335 = vunpack.c.h.bf16 %v520
    %v1336 = vunpack.c.l.bf16 %v521
    %v1337 = vunpack.c.h.bf16 %v521
    %v1338 = vunpack.c.l.bf16 %v522
    %v1339 = vunpack.c.h.bf16 %v522
    %v1340 = vunpack.c.l.bf16 %v523
    %v1341 = vunpack.c.h.bf16 %v523
    %v1342 = vunpack.c.l.bf16 %v524
    %v1343 = vunpack.c.h.bf16 %v524
    %v1344 = vunpack.c.l.bf16 %v525
    %v1345 = vunpack.c.h.bf16 %v525
    %v1346 = vunpack.c.l.bf16 %v526
    %v1347 = vunpack.c.h.bf16 %v526
    %v1348 = vunpack.c.l.bf16 %v527
    %v1349 = vunpack.c.h.bf16 %v527
    %v1350 = vunpack.c.l.bf16 %v528
    %v1351 = vunpack.c.h.bf16 %v528
    %v1352 = vunpack.c.l.bf16 %v529
    %v1353 = vunpack.c.h.bf16 %v529
    %v1354 = vunpack.c.l.bf16 %v530
    %v1355 = vunpack.c.h.bf16 %v530
    %v1356 = vunpack.c.l.bf16 %v531
    %v1357 = vunpack.c.h.bf16 %v531
    %v1358 = vunpack.c.l.bf16 %v532
    %v1359 = vunpack.c.h.bf16 %v532
    %v1360 = vunpack.c.l.bf16 %v533
    %v1361 = vunpack.c.h.bf16 %v533
    %v1362 = vunpack.c.l.bf16 %v534
    %v1363 = vunpack.c.h.bf16 %v534
    %v1364 = vunpack.c.l.bf16 %v535
    %v1365 = vunpack.c.h.bf16 %v535
    %v1366 = vunpack.c.l.bf16 %v536
    %v1367 = vunpack.c.h.bf16 %v536
    %v1368 = vunpack.c.l.bf16 %v537
    %v1369 = vunpack.c.h.bf16 %v537
    %v1370 = vunpack.c.l.bf16 %v538
    %v1371 = vunpack.c.h.bf16 %v538
    %v1372 = vunpack.c.l.bf16 %v539
    %v1373 = vunpack.c.h.bf16 %v539
    %v1374 = vunpack.c.l.bf16 %v540
    %v1375 = vunpack.c.h.bf16 %v540
    %v1376 = vunpack.c.l.bf16 %v541
    %v1377 = vunpack.c.h.bf16 %v541
    %v1378 = vunpack.c.l.bf16 %v542
    %v1379 = vunpack.c.h.bf16 %v542
    %v1380 = vunpack.c.l.bf16 %v543
    %v1381 = vunpack.c.h.bf16 %v543
    %v1382 = vunpack.c.l.bf16 %v544
    %v1383 = vunpack.c.h.bf16 %v544
    %v1384 = vunpack.c.l.bf16 %v545
    %v1385 = vunpack.c.h.bf16 %v545
    %v1386 = vunpack.c.l.bf16 %v546
    %v1387 = vunpack.c.h.bf16 %v546
    %v1388 = vunpack.c.l.bf16 %v547
    %v1389 = vunpack.c.h.bf16 %v547
    %v1390 = vunpack.c.l.bf16 %v548
    %v1391 = vunpack.c.h.bf16 %v548
    %v1392 = vunpack.c.l.bf16 %v549
    %v1393 = vunpack.c.h.bf16 %v549
    %v1394 = vunpack.c.l.bf16 %v550
    %v1395 = vunpack.c.h.bf16 %v550
    %v1396 = vunpack.c.l.bf16 %v551
    %v1397 = vunpack.c.h.bf16 %v551
    %v1398 = vunpack.c.l.bf16 %v552
    %v1399 = vunpack.c.h.bf16 %v552
    %v1400 = vunpack.c.l.bf16 %v553
    %v1401 = vunpack.c.h.bf16 %v553
    %v1402 = vunpack.c.l.bf16 %v554
    %v1403 = vunpack.c.h.bf16 %v554
    %v1404 = vunpack.c.l.bf16 %v555
    %v1405 = vunpack.c.h.bf16 %v555
    %v1406 = vunpack.c.l.bf16 %v556
    %v1407 = vunpack.c.h.bf16 %v556
    %v1408 = vunpack.c.l.bf16 %v557
    %v1409 = vunpack.c.h.bf16 %v557
    %v1410 = vunpack.c.l.bf16 %v558
    %v1411 = vunpack.c.h.bf16 %v558
    %v1412 = vunpack.c.l.bf16 %v559
    %v1413 = vunpack.c.h.bf16 %v559
    %v1414 = vunpack.c.l.bf16 %v560
    %v1415 = vunpack.c.h.bf16 %v560
    %v1416 = vunpack.c.l.bf16 %v561
    %v1417 = vunpack.c.h.bf16 %v561
    %v1418 = vunpack.c.l.bf16 %v562
    %v1419 = vunpack.c.h.bf16 %v562
    %v1420 = vunpack.c.l.bf16 %v563
    %v1421 = vunpack.c.h.bf16 %v563
    %v1422 = vunpack.c.l.bf16 %v564
    %v1423 = vunpack.c.h.bf16 %v564
    %v1424 = vunpack.c.l.bf16 %v565
    %v1425 = vunpack.c.h.bf16 %v565
    %v1426 = vunpack.c.l.bf16 %v566
    %v1427 = vunpack.c.h.bf16 %v566
    %v1428 = vunpack.c.l.bf16 %v567
    %v1429 = vunpack.c.h.bf16 %v567
    %v1430 = vunpack.c.l.bf16 %v568
    %v1431 = vunpack.c.h.bf16 %v568
    %v1432 = vunpack.c.l.bf16 %v569
    %v1433 = vunpack.c.h.bf16 %v569
    %v1434 = vunpack.c.l.bf16 %v570
    %v1435 = vunpack.c.h.bf16 %v570
    %v1436 = vunpack.c.l.bf16 %v571
    %v1437 = vunpack.c.h.bf16 %v571
    %v1438 = vunpack.c.l.bf16 %v572
    %v1439 = vunpack.c.h.bf16 %v572
    %v1440 = vunpack.c.l.bf16 %v573
    %v1441 = vunpack.c.h.bf16 %v573
    %v1442 = vunpack.c.l.bf16 %v574
    %v1443 = vunpack.c.h.bf16 %v574
    %v1444 = vunpack.c.l.bf16 %v575
    %v1445 = vunpack.c.h.bf16 %v575
    %v1446 = vunpack.c.l.bf16 %v576
    %v1447 = vunpack.c.h.bf16 %v576
    %v1448 = vunpack.c.l.bf16 %v577
    %v1449 = vunpack.c.h.bf16 %v577
    %v1450 = vunpack.c.l.bf16 %v578
    %v1451 = vunpack.c.h.bf16 %v578
    %v1452 = vunpack.c.l.bf16 %v579
    %v1453 = vunpack.c.h.bf16 %v579
    %v1454 = vunpack.c.l.bf16 %v580
    %v1455 = vunpack.c.h.bf16 %v580
    %v1456 = vunpack.c.l.bf16 %v581
    %v1457 = vunpack.c.h.bf16 %v581
    %v1458 = vunpack.c.l.bf16 %v582
    %v1459 = vunpack.c.h.bf16 %v582
    %v1460 = vunpack.c.l.bf16 %v583
    %v1461 = vunpack.c.h.bf16 %v583
    %v1462 = vunpack.c.l.bf16 %v584
    %v1463 = vunpack.c.h.bf16 %v584
    %v1464 = vunpack.c.l.bf16 %v585
    %v1465 = vunpack.c.h.bf16 %v585
    %v1466 = vunpack.c.l.bf16 %v586
    %v1467 = vunpack.c.h.bf16 %v586
    %v1468 = vunpack.c.l.bf16 %v587
    %v1469 = vunpack.c.h.bf16 %v587
    %v1470 = vunpack.c.l.bf16 %v588
    %v1471 = vunpack.c.h.bf16 %v588
    %v1472 = vunpack.c.l.bf16 %v589
    %v1473 = vunpack.c.h.bf16 %v589
    %v1474 = vunpack.c.l.bf16 %v590
    %v1475 = vunpack.c.h.bf16 %v590
    %v1476 = vunpack.c.l.bf16 %v591
    %v1477 = vunpack.c.h.bf16 %v591
    %v1478 = vunpack.c.l.bf16 %v592
    %v1479 = vunpack.c.h.bf16 %v592
    %v1480 = vunpack.c.l.bf16 %v593
    %v1481 = vunpack.c.h.bf16 %v593
    %v1482 = vunpack.c.l.bf16 %v594
    %v1483 = vunpack.c.h.bf16 %v594
    %v1484 = vunpack.c.l.bf16 %v595
    %v1485 = vunpack.c.h.bf16 %v595
    %v1486 = vunpack.c.l.bf16 %v596
    %v1487 = vunpack.c.h.bf16 %v596
    %v1488 = vunpack.c.l.bf16 %v597
    %v1489 = vunpack.c.h.bf16 %v597
    %v1490 = vunpack.c.l.bf16 %v598
    %v1491 = vunpack.c.h.bf16 %v598
    %v1492 = vunpack.c.l.bf16 %v599
    %v1493 = vunpack.c.h.bf16 %v599
    %v1494 = vunpack.c.l.bf16 %v600
    %v1495 = vunpack.c.h.bf16 %v600
    %v1496 = vunpack.c.l.bf16 %v601
    %v1497 = vunpack.c.h.bf16 %v601
    %v1498 = vunpack.c.l.bf16 %v602
    %v1499 = vunpack.c.h.bf16 %v602
    %v1500 = vunpack.c.l.bf16 %v603
    %v1501 = vunpack.c.h.bf16 %v603
    %v1502 = vunpack.c.l.bf16 %v604
    %v1503 = vunpack.c.h.bf16 %v604
    %v1504 = vunpack.c.l.bf16 %v605
    %v1505 = vunpack.c.h.bf16 %v605
    %v1506 = vunpack.c.l.bf16 %v606
    %v1507 = vunpack.c.h.bf16 %v606
    %v1508 = vunpack.c.l.bf16 %v607
    %v1509 = vunpack.c.h.bf16 %v607
    %v1510 = vunpack.c.l.bf16 %v608
    %v1511 = vunpack.c.h.bf16 %v608
    %v1512 = vunpack.c.l.bf16 %v609
    %v1513 = vunpack.c.h.bf16 %v609
    %v1514 = vunpack.c.l.bf16 %v610
    %v1515 = vunpack.c.h.bf16 %v610
    %v1516 = vunpack.c.l.bf16 %v611
    %v1517 = vunpack.c.h.bf16 %v611
    %v1518 = vunpack.c.l.bf16 %v612
    %v1519 = vunpack.c.h.bf16 %v612
    %v1520 = vunpack.c.l.bf16 %v613
    %v1521 = vunpack.c.h.bf16 %v613
    %v1522 = vunpack.c.l.bf16 %v614
    %v1523 = vunpack.c.h.bf16 %v614
    %v1524 = vunpack.c.l.bf16 %v615
    %v1525 = vunpack.c.h.bf16 %v615
    %v1526 = vunpack.c.l.bf16 %v616
    %v1527 = vunpack.c.h.bf16 %v616
    %v1528 = vunpack.c.l.bf16 %v617
    %v1529 = vunpack.c.h.bf16 %v617
    %v1530 = vunpack.c.l.bf16 %v618
    %v1531 = vunpack.c.h.bf16 %v618
    %v1532 = vunpack.c.l.bf16 %v619
    %v1533 = vunpack.c.h.bf16 %v619
    %v1534 = vunpack.c.l.bf16 %v620
    %v1535 = vunpack.c.h.bf16 %v620
    %v1536 = vunpack.c.l.bf16 %v621
    %v1537 = vunpack.c.h.bf16 %v621
    %v1538 = vunpack.c.l.bf16 %v622
    %v1539 = vunpack.c.h.bf16 %v622
    %v1540 = vunpack.c.l.bf16 %v623
    %v1541 = vunpack.c.h.bf16 %v623
    %v1542 = vunpack.c.l.bf16 %v624
    %v1543 = vunpack.c.h.bf16 %v624
    %v1544 = vunpack.c.l.bf16 %v625
    %v1545 = vunpack.c.h.bf16 %v625
    %v1546 = vunpack.c.l.bf16 %v626
    %v1547 = vunpack.c.h.bf16 %v626
    %v1548 = vunpack.c.l.bf16 %v627
    %v1549 = vunpack.c.h.bf16 %v627
    %v1550 = vunpack.c.l.bf16 %v628
    %v1551 = vunpack.c.h.bf16 %v628
    %v1552 = vunpack.c.l.bf16 %v629
    %v1553 = vunpack.c.h.bf16 %v629
    %v1554 = vunpack.c.l.bf16 %v630
    %v1555 = vunpack.c.h.bf16 %v630
    %v1556 = vunpack.c.l.bf16 %v631
    %v1557 = vunpack.c.h.bf16 %v631
    %v1558 = vunpack.c.l.bf16 %v632
    %v1559 = vunpack.c.h.bf16 %v632
    %v1560 = vunpack.c.l.bf16 %v633
    %v1561 = vunpack.c.h.bf16 %v633
    %v1562 = vunpack.c.l.bf16 %v634
    %v1563 = vunpack.c.h.bf16 %v634
    %v1564 = vunpack.c.l.bf16 %v635
    %v1565 = vunpack.c.h.bf16 %v635
    %v1566 = vunpack.c.l.bf16 %v636
    %v1567 = vunpack.c.h.bf16 %v636
    %v1568 = vunpack.c.l.bf16 %v637
    %v1569 = vunpack.c.h.bf16 %v637
    %v1570 = vunpack.c.l.bf16 %v638
    %v1571 = vunpack.c.h.bf16 %v638
    %v1572 = vunpack.c.l.bf16 %v639
    %v1573 = vunpack.c.h.bf16 %v639
    %v1574 = vunpack.c.l.bf16 %v640
    %v1575 = vunpack.c.h.bf16 %v640
    %v1576 = vunpack.c.l.bf16 %v641
    %v1577 = vunpack.c.h.bf16 %v641
    %v1578 = vunpack.c.l.bf16 %v642
    %v1579 = vunpack.c.h.bf16 %v642
    %v1580 = vunpack.c.l.bf16 %v643
    %v1581 = vunpack.c.h.bf16 %v643
    %v1582 = vunpack.c.l.bf16 %v644
    %v1583 = vunpack.c.h.bf16 %v644
    %v1584 = vunpack.c.l.bf16 %v645
    %v1585 = vunpack.c.h.bf16 %v645
    %v1586 = vunpack.c.l.bf16 %v646
    %v1587 = vunpack.c.h.bf16 %v646
    %v1588 = vunpack.c.l.bf16 %v647
    %v1589 = vunpack.c.h.bf16 %v647
    %v1590 = vunpack.c.l.bf16 %v648
    %v1591 = vunpack.c.h.bf16 %v648
    %v1592 = vunpack.c.l.bf16 %v649
    %v1593 = vunpack.c.h.bf16 %v649
    %v1594 = vunpack.c.l.bf16 %v650
    %v1595 = vunpack.c.h.bf16 %v650
    %v1596 = vunpack.c.l.bf16 %v651
    %v1597 = vunpack.c.h.bf16 %v651
    %v1598 = vunpack.c.l.bf16 %v652
    %v1599 = vunpack.c.h.bf16 %v652
    %v1600 = vunpack.c.l.bf16 %v653
    %v1601 = vunpack.c.h.bf16 %v653
    %v1602 = vunpack.c.l.bf16 %v654
    %v1603 = vunpack.c.h.bf16 %v654
    %v1604 = vunpack.c.l.bf16 %v655
    %v1605 = vunpack.c.h.bf16 %v655
    %v1606 = vunpack.c.l.bf16 %v656
    %v1607 = vunpack.c.h.bf16 %v656
    %v1608 = vunpack.c.l.bf16 %v657
    %v1609 = vunpack.c.h.bf16 %v657
    %v1610 = vunpack.c.l.bf16 %v658
    %v1611 = vunpack.c.h.bf16 %v658
    %v1612 = vunpack.c.l.bf16 %v659
    %v1613 = vunpack.c.h.bf16 %v659
    %v1614 = vunpack.c.l.bf16 %v660
    %v1615 = vunpack.c.h.bf16 %v660
    %v1616 = vunpack.c.l.bf16 %v661
    %v1617 = vunpack.c.h.bf16 %v661
    %v1618 = vunpack.c.l.bf16 %v662
    %v1619 = vunpack.c.h.bf16 %v662
    %v1620 = vunpack.c.l.bf16 %v663
    %v1621 = vunpack.c.h.bf16 %v663
    %v1622 = vunpack.c.l.bf16 %v664
    %v1623 = vunpack.c.h.bf16 %v664
    %v1624 = vunpack.c.l.bf16 %v665
    %v1625 = vunpack.c.h.bf16 %v665
    %v1626 = vunpack.c.l.bf16 %v666
    %v1627 = vunpack.c.h.bf16 %v666
    %v1628 = vunpack.c.l.bf16 %v667
    %v1629 = vunpack.c.h.bf16 %v667
    %v1630 = vunpack.c.l.bf16 %v668
    %v1631 = vunpack.c.h.bf16 %v668
    %v1632 = vunpack.c.l.bf16 %v669
    %v1633 = vunpack.c.h.bf16 %v669
    %v1634 = vunpack.c.l.bf16 %v670
    %v1635 = vunpack.c.h.bf16 %v670
    %v1636 = vunpack.c.l.bf16 %v671
    %v1637 = vunpack.c.h.bf16 %v671
    %v1638 = vunpack.c.l.bf16 %v672
    %v1639 = vunpack.c.h.bf16 %v672
    %v1640 = vunpack.c.l.bf16 %v673
    %v1641 = vunpack.c.h.bf16 %v673
    %v1642 = vunpack.c.l.bf16 %v674
    %v1643 = vunpack.c.h.bf16 %v674
    %v1644 = vunpack.c.l.bf16 %v675
    %v1645 = vunpack.c.h.bf16 %v675
    %v1646 = vunpack.c.l.bf16 %v676
    %v1647 = vunpack.c.h.bf16 %v676
    %v1648 = vunpack.c.l.bf16 %v677
    %v1649 = vunpack.c.h.bf16 %v677
    %v1650 = vunpack.c.l.bf16 %v678
    %v1651 = vunpack.c.h.bf16 %v678
    %v1652 = vunpack.c.l.bf16 %v679
    %v1653 = vunpack.c.h.bf16 %v679
    %v1654 = vunpack.c.l.bf16 %v680
    %v1655 = vunpack.c.h.bf16 %v680
    %v1656 = vunpack.c.l.bf16 %v681
    %v1657 = vunpack.c.h.bf16 %v681
    %v1658 = vunpack.c.l.bf16 %v682
    %v1659 = vunpack.c.h.bf16 %v682
    %v1660 = vunpack.c.l.bf16 %v683
    %v1661 = vunpack.c.h.bf16 %v683
    %v1662 = vunpack.c.l.bf16 %v684
    %v1663 = vunpack.c.h.bf16 %v684
    %v1664 = vunpack.c.l.bf16 %v685
    %v1665 = vunpack.c.h.bf16 %v685
    %v1666 = vunpack.c.l.bf16 %v686
    %v1667 = vunpack.c.h.bf16 %v686
    %v1668 = vunpack.c.l.bf16 %v687
    %v1669 = vunpack.c.h.bf16 %v687
    %v1670 = vunpack.c.l.bf16 %v688
    %v1671 = vunpack.c.h.bf16 %v688
    %v1672 = vunpack.c.l.bf16 %v689
    %v1673 = vunpack.c.h.bf16 %v689
    %v1674 = vunpack.c.l.bf16 %v690
    %v1675 = vunpack.c.h.bf16 %v690
    %v1676 = vunpack.c.l.bf16 %v691
    %v1677 = vunpack.c.h.bf16 %v691
    %v1678 = vunpack.c.l.bf16 %v692
    %v1679 = vunpack.c.h.bf16 %v692
    %v1680 = vunpack.c.l.bf16 %v693
    %v1681 = vunpack.c.h.bf16 %v693
    %v1682 = vunpack.c.l.bf16 %v694
    %v1683 = vunpack.c.h.bf16 %v694
    %v1684 = vunpack.c.l.bf16 %v695
    %v1685 = vunpack.c.h.bf16 %v695
    %v1686 = vunpack.c.l.bf16 %v696
    %v1687 = vunpack.c.h.bf16 %v696
    %v1688 = vunpack.c.l.bf16 %v697
    %v1689 = vunpack.c.h.bf16 %v697
    %v1690 = vunpack.c.l.bf16 %v698
    %v1691 = vunpack.c.h.bf16 %v698
    %v1692 = vunpack.c.l.bf16 %v699
    %v1693 = vunpack.c.h.bf16 %v699
    %v1694 = vunpack.c.l.bf16 %v700
    %v1695 = vunpack.c.h.bf16 %v700
    %v1696 = vunpack.c.l.bf16 %v701
    %v1697 = vunpack.c.h.bf16 %v701
    %v1698 = vunpack.c.l.bf16 %v702
    %v1699 = vunpack.c.h.bf16 %v702
    %v1700 = vunpack.c.l.bf16 %v703
    %v1701 = vunpack.c.h.bf16 %v703
    %v1702 = vunpack.c.l.bf16 %v704
    %v1703 = vunpack.c.h.bf16 %v704
    %v1704 = vunpack.c.l.bf16 %v705
    %v1705 = vunpack.c.h.bf16 %v705
    %v1706 = vunpack.c.l.bf16 %v706
    %v1707 = vunpack.c.h.bf16 %v706
    %v1708 = vunpack.c.l.bf16 %v707
    %v1709 = vunpack.c.h.bf16 %v707
    %v1710 = vunpack.c.l.bf16 %v708
    %v1711 = vunpack.c.h.bf16 %v708
    %v1712 = vunpack.c.l.bf16 %v709
    %v1713 = vunpack.c.h.bf16 %v709
    %v1714 = vunpack.c.l.bf16 %v710
    %v1715 = vunpack.c.h.bf16 %v710
    %v1716 = vunpack.c.l.bf16 %v711
    %v1717 = vunpack.c.h.bf16 %v711
    %v1718 = vunpack.c.l.bf16 %v712
    %v1719 = vunpack.c.h.bf16 %v712
    %v1720 = vunpack.c.l.bf16 %v713
    %v1721 = vunpack.c.h.bf16 %v713
    %v1722 = vunpack.c.l.bf16 %v714
    %v1723 = vunpack.c.h.bf16 %v714
    %v1724 = vunpack.c.l.bf16 %v715
    %v1725 = vunpack.c.h.bf16 %v715
    %v1726 = vunpack.c.l.bf16 %v716
    %v1727 = vunpack.c.h.bf16 %v716
    %v1728 = vunpack.c.l.bf16 %v717
    %v1729 = vunpack.c.h.bf16 %v717
    %v1730 = vunpack.c.l.bf16 %v718
    %v1731 = vunpack.c.h.bf16 %v718
    %v1732 = vunpack.c.l.bf16 %v719
    %v1733 = vunpack.c.h.bf16 %v719
    %v1734 = vunpack.c.l.bf16 %v720
    %v1735 = vunpack.c.h.bf16 %v720
    %v1736 = vunpack.c.l.bf16 %v721
    %v1737 = vunpack.c.h.bf16 %v721
    %v1738 = vunpack.c.l.bf16 %v722
    %v1739 = vunpack.c.h.bf16 %v722
    %v1740 = vunpack.c.l.bf16 %v723
    %v1741 = vunpack.c.h.bf16 %v723
    %v1742 = vunpack.c.l.bf16 %v724
    %v1743 = vunpack.c.h.bf16 %v724
    %v1744 = vunpack.c.l.bf16 %v725
    %v1745 = vunpack.c.h.bf16 %v725
    %v1746 = vunpack.c.l.bf16 %v726
    %v1747 = vunpack.c.h.bf16 %v726
    %v1748 = vunpack.c.l.bf16 %v727
    %v1749 = vunpack.c.h.bf16 %v727
    %v1750 = vunpack.c.l.bf16 %v728
    %v1751 = vunpack.c.h.bf16 %v728
    %v1752 = vunpack.c.l.bf16 %v729
    %v1753 = vunpack.c.h.bf16 %v729
    %v1754 = vld [vmem:[#allocation8] sm:$0xf]
    %v1756 = vlaneseq
    %v1757 = vshrl.u32 %v1756, 7
    %v1758 = vsub.s32 0, %v1757
    %v1759 = vrot.slane %v1754, %v1758
    %v1760 = vlaneseq
    %v1761 = vshrl.u32 %v1760, 7
    %v1762 = vsub.s32 1, %v1761
    %v1763 = vrot.slane %v1754, %v1762
    %v1764 = vlaneseq
    %v1765 = vshrl.u32 %v1764, 7
    %v1766 = vsub.s32 2, %v1765
    %v1767 = vrot.slane %v1754, %v1766
    %v1768 = vlaneseq
    %v1769 = vshrl.u32 %v1768, 7
    %v1770 = vsub.s32 3, %v1769
    %v1771 = vrot.slane %v1754, %v1770
    %v1780 = vcombine.high %v214, %v214
    %v1782 = vunpack.c.l.s4 1983009808
    %v1783 = vunpack.c.0.s8 %v1782
    %v1784 = vlaneseq
    %v1785 = vshrl.u32 %v1784, 7
    %v1786 = vsub.s32 %v1783, %v1785
    %v1787 = vrot.slane %v214, %v1786
    %v1789 = vunpack.c.l.s4 1983009808
    %v1790 = vunpack.c.0.s8 %v1789
    %v1791 = vlaneseq
    %v1792 = vshrl.u32 %v1791, 7
    %v1793 = vsub.s32 %v1790, %v1792
    %v1794 = vrot.slane %v1780, %v1793
    %v1795 = vcombine.high %v1787, %v1787
    %v1796 = vcombine.high %v1794, %v1794
    %v1797 = vcombine.high %v215, %v215
    %v1799 = vunpack.c.l.s4 1983009808
    %v1800 = vunpack.c.0.s8 %v1799
    %v1801 = vlaneseq
    %v1802 = vshrl.u32 %v1801, 7
    %v1803 = vsub.s32 %v1800, %v1802
    %v1804 = vrot.slane %v215, %v1803
    %v1806 = vunpack.c.l.s4 1983009808
    %v1807 = vunpack.c.0.s8 %v1806
    %v1808 = vlaneseq
    %v1809 = vshrl.u32 %v1808, 7
    %v1810 = vsub.s32 %v1807, %v1809
    %v1811 = vrot.slane %v1797, %v1810
    %v1812 = vcombine.high %v1804, %v1804
    %v1813 = vcombine.high %v1811, %v1811
    %v1814 = vcombine.high %v216, %v216
    %v1816 = vunpack.c.l.s4 1983009808
    %v1817 = vunpack.c.0.s8 %v1816
    %v1818 = vlaneseq
    %v1819 = vshrl.u32 %v1818, 7
    %v1820 = vsub.s32 %v1817, %v1819
    %v1821 = vrot.slane %v216, %v1820
    %v1823 = vunpack.c.l.s4 1983009808
    %v1824 = vunpack.c.0.s8 %v1823
    %v1825 = vlaneseq
    %v1826 = vshrl.u32 %v1825, 7
    %v1827 = vsub.s32 %v1824, %v1826
    %v1828 = vrot.slane %v1814, %v1827
    %v1829 = vcombine.high %v1821, %v1821
    %v1830 = vcombine.high %v1828, %v1828
    %v1831 = vcombine.high %v217, %v217
    %v1833 = vunpack.c.l.s4 1983009808
    %v1834 = vunpack.c.0.s8 %v1833
    %v1835 = vlaneseq
    %v1836 = vshrl.u32 %v1835, 7
    %v1837 = vsub.s32 %v1834, %v1836
    %v1838 = vrot.slane %v217, %v1837
    %v1840 = vunpack.c.l.s4 1983009808
    %v1841 = vunpack.c.0.s8 %v1840
    %v1842 = vlaneseq
    %v1843 = vshrl.u32 %v1842, 7
    %v1844 = vsub.s32 %v1841, %v1843
    %v1845 = vrot.slane %v1831, %v1844
    %v1846 = vcombine.high %v1838, %v1838
    %v1847 = vcombine.high %v1845, %v1845
    %1864 = vmatprep.subr.mxu0 %v731
    %1865 = vmatpush1.msra.mxu0 %v730
    %1866 = vmatprep.subr.mxu0 %v735
    %1867 = vmatpush1.msra.mxu0 %v734
    %1868 = vmatprep.subr.mxu0 %v739
    %1869 = vmatpush1.msra.mxu0 %v738
    %1870 = vmatprep.subr.mxu0 %v743
    %1871 = vmatpush1.msra.mxu0 %v742
    %1872 = vmatprep.subr.mxu0 %v747
    %1873 = vmatpush1.msra.mxu0 %v746
    %1874 = vmatprep.subr.mxu0 %v751
    %1875 = vmatpush1.msra.mxu0 %v750
    %1876 = vmatprep.subr.mxu0 %v755
    %1877 = vmatpush1.msra.mxu0 %v754
    %1878 = vmatprep.subr.mxu0 %v759
    %1879 = vmatpush1.msra.mxu0 %v758
    %1880 = vmatprep.subr.mxu0 %v763
    %1881 = vmatpush1.msra.mxu0 %v762
    %1882 = vmatprep.subr.mxu0 %v767
    %1883 = vmatpush1.msra.mxu0 %v766
    %1884 = vmatprep.subr.mxu0 %v771
    %1885 = vmatpush1.msra.mxu0 %v770
    %1886 = vmatprep.subr.mxu0 %v775
    %1887 = vmatpush1.msra.mxu0 %v774
    %1888 = vmatprep.subr.mxu0 %v779
    %1889 = vmatpush1.msra.mxu0 %v778
    %1890 = vmatprep.subr.mxu0 %v783
    %1891 = vmatpush1.msra.mxu0 %v782
    %1892 = vmatprep.subr.mxu0 %v787
    %1893 = vmatpush1.msra.mxu0 %v786
    %1894 = vmatprep.subr.mxu0 %v791
    %1895 = vmatpush1.msra.mxu0 %v790
    %1896 = vmatprep.subr.mxu0 %v795
    %1897 = vmatpush1.msra.mxu0 %v794
    %1898 = vmatprep.subr.mxu0 %v799
    %1899 = vmatpush1.msra.mxu0 %v798
    %1900 = vmatprep.subr.mxu0 %v803
    %1901 = vmatpush1.msra.mxu0 %v802
    %1902 = vmatprep.subr.mxu0 %v807
    %1903 = vmatpush1.msra.mxu0 %v806
    %1904 = vmatprep.subr.mxu0 %v811
    %1905 = vmatpush1.msra.mxu0 %v810
    %1906 = vmatprep.subr.mxu0 %v815
    %1907 = vmatpush1.msra.mxu0 %v814
    %1908 = vmatprep.subr.mxu0 %v819
    %1909 = vmatpush1.msra.mxu0 %v818
    %1910 = vmatprep.subr.mxu0 %v823
    %1911 = vmatpush1.msra.mxu0 %v822
    %1912 = vmatprep.subr.mxu0 %v827
    %1913 = vmatpush1.msra.mxu0 %v826
    %1914 = vmatprep.subr.mxu0 %v831
    %1915 = vmatpush1.msra.mxu0 %v830
    %1916 = vmatprep.subr.mxu0 %v835
    %1917 = vmatpush1.msra.mxu0 %v834
    %1918 = vmatprep.subr.mxu0 %v839
    %1919 = vmatpush1.msra.mxu0 %v838
    %1920 = vmatprep.subr.mxu0 %v843
    %1921 = vmatpush1.msra.mxu0 %v842
    %1922 = vmatprep.subr.mxu0 %v847
    %1923 = vmatpush1.msra.mxu0 %v846
    %1924 = vmatprep.subr.mxu0 %v851
    %1925 = vmatpush1.msra.mxu0 %v850
    %1926 = vmatprep.subr.mxu0 %v855
    %1927 = vmatpush1.msra.mxu0 %v854
    %1928 = vmatprep.mubr.f32.mxu0 %v1795
    %1929 = vmatmul.mubr.f32.gmra.mrb[0].mxu0 %v1787
    %v1930 = vpop.f32.mrb[0].mxu0
    %v1931 = vadd.f32 %v1759, %v1930
    %v1932 = vpop.f32.mrb[0].mxu0
    %v1933 = vadd.f32 %v1763, %v1932
    %1934 = vdwg.mxu0
    %1935 = vmatprep.subr.mxu0 %v859
    %1936 = vmatpush1.msra.mxu0 %v858
    %1937 = vmatprep.subr.mxu0 %v863
    %1938 = vmatpush1.msra.mxu0 %v862
    %1939 = vmatprep.subr.mxu0 %v867
    %1940 = vmatpush1.msra.mxu0 %v866
    %1941 = vmatprep.subr.mxu0 %v871
    %1942 = vmatpush1.msra.mxu0 %v870
    %1943 = vmatprep.subr.mxu0 %v875
    %1944 = vmatpush1.msra.mxu0 %v874
    %1945 = vmatprep.subr.mxu0 %v879
    %1946 = vmatpush1.msra.mxu0 %v878
    %1947 = vmatprep.subr.mxu0 %v883
    %1948 = vmatpush1.msra.mxu0 %v882
    %1949 = vmatprep.subr.mxu0 %v887
    %1950 = vmatpush1.msra.mxu0 %v886
    %1951 = vmatprep.subr.mxu0 %v891
    %1952 = vmatpush1.msra.mxu0 %v890
    %1953 = vmatprep.subr.mxu0 %v895
    %1954 = vmatpush1.msra.mxu0 %v894
    %1955 = vmatprep.subr.mxu0 %v899
    %1956 = vmatpush1.msra.mxu0 %v898
    %1957 = vmatprep.subr.mxu0 %v903
    %1958 = vmatpush1.msra.mxu0 %v902
    %1959 = vmatprep.subr.mxu0 %v907
    %1960 = vmatpush1.msra.mxu0 %v906
    %1961 = vmatprep.subr.mxu0 %v911
    %1962 = vmatpush1.msra.mxu0 %v910
    %1963 = vmatprep.subr.mxu0 %v915
    %1964 = vmatpush1.msra.mxu0 %v914
    %1965 = vmatprep.subr.mxu0 %v919
    %1966 = vmatpush1.msra.mxu0 %v918
    %1967 = vmatprep.subr.mxu0 %v923
    %1968 = vmatpush1.msra.mxu0 %v922
    %1969 = vmatprep.subr.mxu0 %v927
    %1970 = vmatpush1.msra.mxu0 %v926
    %1971 = vmatprep.subr.mxu0 %v931
    %1972 = vmatpush1.msra.mxu0 %v930
    %1973 = vmatprep.subr.mxu0 %v935
    %1974 = vmatpush1.msra.mxu0 %v934
    %1975 = vmatprep.subr.mxu0 %v939
    %1976 = vmatpush1.msra.mxu0 %v938
    %1977 = vmatprep.subr.mxu0 %v943
    %1978 = vmatpush1.msra.mxu0 %v942
    %1979 = vmatprep.subr.mxu0 %v947
    %1980 = vmatpush1.msra.mxu0 %v946
    %1981 = vmatprep.subr.mxu0 %v951
    %1982 = vmatpush1.msra.mxu0 %v950
    %1983 = vmatprep.subr.mxu0 %v955
    %1984 = vmatpush1.msra.mxu0 %v954
    %1985 = vmatprep.subr.mxu0 %v959
    %1986 = vmatpush1.msra.mxu0 %v958
    %1987 = vmatprep.subr.mxu0 %v963
    %1988 = vmatpush1.msra.mxu0 %v962
    %1989 = vmatprep.subr.mxu0 %v967
    %1990 = vmatpush1.msra.mxu0 %v966
    %1991 = vmatprep.subr.mxu0 %v971
    %1992 = vmatpush1.msra.mxu0 %v970
    %1993 = vmatprep.subr.mxu0 %v975
    %1994 = vmatpush1.msra.mxu0 %v974
    %1995 = vmatprep.subr.mxu0 %v979
    %1996 = vmatpush1.msra.mxu0 %v978
    %1997 = vmatprep.subr.mxu0 %v983
    %1998 = vmatpush1.msra.mxu0 %v982
    %1999 = vmatprep.mubr.f32.mxu0 %v1796
    %2000 = vmatmul.mubr.f32.gmra.mrb[0].mxu0 %v1794
    %v2001 = vpop.f32.mrb[0].mxu0
    %v2002 = vadd.f32 %v1931, %v2001
    %v2003 = vpop.f32.mrb[0].mxu0
    %v2004 = vadd.f32 %v1933, %v2003
    %2005 = vdwg.mxu0
    %2006 = vmatprep.subr.mxu0 %v987
    %2007 = vmatpush1.msra.mxu0 %v986
    %2008 = vmatprep.subr.mxu0 %v991
    %2009 = vmatpush1.msra.mxu0 %v990
    %2010 = vmatprep.subr.mxu0 %v995
    %2011 = vmatpush1.msra.mxu0 %v994
    %2012 = vmatprep.subr.mxu0 %v999
    %2013 = vmatpush1.msra.mxu0 %v998
    %2014 = vmatprep.subr.mxu0 %v1003
    %2015 = vmatpush1.msra.mxu0 %v1002
    %2016 = vmatprep.subr.mxu0 %v1007
    %2017 = vmatpush1.msra.mxu0 %v1006
    %2018 = vmatprep.subr.mxu0 %v1011
    %2019 = vmatpush1.msra.mxu0 %v1010
    %2020 = vmatprep.subr.mxu0 %v1015
    %2021 = vmatpush1.msra.mxu0 %v1014
    %2022 = vmatprep.subr.mxu0 %v1019
    %2023 = vmatpush1.msra.mxu0 %v1018
    %2024 = vmatprep.subr.mxu0 %v1023
    %2025 = vmatpush1.msra.mxu0 %v1022
    %2026 = vmatprep.subr.mxu0 %v1027
    %2027 = vmatpush1.msra.mxu0 %v1026
    %2028 = vmatprep.subr.mxu0 %v1031
    %2029 = vmatpush1.msra.mxu0 %v1030
    %2030 = vmatprep.subr.mxu0 %v1035
    %2031 = vmatpush1.msra.mxu0 %v1034
    %2032 = vmatprep.subr.mxu0 %v1039
    %2033 = vmatpush1.msra.mxu0 %v1038
    %2034 = vmatprep.subr.mxu0 %v1043
    %2035 = vmatpush1.msra.mxu0 %v1042
    %2036 = vmatprep.subr.mxu0 %v1047
    %2037 = vmatpush1.msra.mxu0 %v1046
    %2038 = vmatprep.subr.mxu0 %v1051
    %2039 = vmatpush1.msra.mxu0 %v1050
    %2040 = vmatprep.subr.mxu0 %v1055
    %2041 = vmatpush1.msra.mxu0 %v1054
    %2042 = vmatprep.subr.mxu0 %v1059
    %2043 = vmatpush1.msra.mxu0 %v1058
    %2044 = vmatprep.subr.mxu0 %v1063
    %2045 = vmatpush1.msra.mxu0 %v1062
    %2046 = vmatprep.subr.mxu0 %v1067
    %2047 = vmatpush1.msra.mxu0 %v1066
    %2048 = vmatprep.subr.mxu0 %v1071
    %2049 = vmatpush1.msra.mxu0 %v1070
    %2050 = vmatprep.subr.mxu0 %v1075
    %2051 = vmatpush1.msra.mxu0 %v1074
    %2052 = vmatprep.subr.mxu0 %v1079
    %2053 = vmatpush1.msra.mxu0 %v1078
    %2054 = vmatprep.subr.mxu0 %v1083
    %2055 = vmatpush1.msra.mxu0 %v1082
    %2056 = vmatprep.subr.mxu0 %v1087
    %2057 = vmatpush1.msra.mxu0 %v1086
    %2058 = vmatprep.subr.mxu0 %v1091
    %2059 = vmatpush1.msra.mxu0 %v1090
    %2060 = vmatprep.subr.mxu0 %v1095
    %2061 = vmatpush1.msra.mxu0 %v1094
    %2062 = vmatprep.subr.mxu0 %v1099
    %2063 = vmatpush1.msra.mxu0 %v1098
    %2064 = vmatprep.subr.mxu0 %v1103
    %2065 = vmatpush1.msra.mxu0 %v1102
    %2066 = vmatprep.subr.mxu0 %v1107
    %2067 = vmatpush1.msra.mxu0 %v1106
    %2068 = vmatprep.subr.mxu0 %v1111
    %2069 = vmatpush1.msra.mxu0 %v1110
    %2070 = vmatprep.mubr.f32.mxu0 %v1812
    %2071 = vmatmul.mubr.f32.gmra.mrb[0].mxu0 %v1804
    %v2072 = vpop.f32.mrb[0].mxu0
    %v2073 = vadd.f32 %v2002, %v2072
    %v2074 = vpop.f32.mrb[0].mxu0
    %v2075 = vadd.f32 %v2004, %v2074
    %2076 = vdwg.mxu0
    %2077 = vmatprep.subr.mxu0 %v1115
    %2078 = vmatpush1.msra.mxu0 %v1114
    %2079 = vmatprep.subr.mxu0 %v1119
    %2080 = vmatpush1.msra.mxu0 %v1118
    %2081 = vmatprep.subr.mxu0 %v1123
    %2082 = vmatpush1.msra.mxu0 %v1122
    %2083 = vmatprep.subr.mxu0 %v1127
    %2084 = vmatpush1.msra.mxu0 %v1126
    %2085 = vmatprep.subr.mxu0 %v1131
    %2086 = vmatpush1.msra.mxu0 %v1130
    %2087 = vmatprep.subr.mxu0 %v1135
    %2088 = vmatpush1.msra.mxu0 %v1134
    %2089 = vmatprep.subr.mxu0 %v1139
    %2090 = vmatpush1.msra.mxu0 %v1138
    %2091 = vmatprep.subr.mxu0 %v1143
    %2092 = vmatpush1.msra.mxu0 %v1142
    %2093 = vmatprep.subr.mxu0 %v1147
    %2094 = vmatpush1.msra.mxu0 %v1146
    %2095 = vmatprep.subr.mxu0 %v1151
    %2096 = vmatpush1.msra.mxu0 %v1150
    %2097 = vmatprep.subr.mxu0 %v1155
    %2098 = vmatpush1.msra.mxu0 %v1154
    %2099 = vmatprep.subr.mxu0 %v1159
    %2100 = vmatpush1.msra.mxu0 %v1158
    %2101 = vmatprep.subr.mxu0 %v1163
    %2102 = vmatpush1.msra.mxu0 %v1162
    %2103 = vmatprep.subr.mxu0 %v1167
    %2104 = vmatpush1.msra.mxu0 %v1166
    %2105 = vmatprep.subr.mxu0 %v1171
    %2106 = vmatpush1.msra.mxu0 %v1170
    %2107 = vmatprep.subr.mxu0 %v1175
    %2108 = vmatpush1.msra.mxu0 %v1174
    %2109 = vmatprep.subr.mxu0 %v1179
    %2110 = vmatpush1.msra.mxu0 %v1178
    %2111 = vmatprep.subr.mxu0 %v1183
    %2112 = vmatpush1.msra.mxu0 %v1182
    %2113 = vmatprep.subr.mxu0 %v1187
    %2114 = vmatpush1.msra.mxu0 %v1186
    %2115 = vmatprep.subr.mxu0 %v1191
    %2116 = vmatpush1.msra.mxu0 %v1190
    %2117 = vmatprep.subr.mxu0 %v1195
    %2118 = vmatpush1.msra.mxu0 %v1194
    %2119 = vmatprep.subr.mxu0 %v1199
    %2120 = vmatpush1.msra.mxu0 %v1198
    %2121 = vmatprep.subr.mxu0 %v1203
    %2122 = vmatpush1.msra.mxu0 %v1202
    %2123 = vmatprep.subr.mxu0 %v1207
    %2124 = vmatpush1.msra.mxu0 %v1206
    %2125 = vmatprep.subr.mxu0 %v1211
    %2126 = vmatpush1.msra.mxu0 %v1210
    %2127 = vmatprep.subr.mxu0 %v1215
    %2128 = vmatpush1.msra.mxu0 %v1214
    %2129 = vmatprep.subr.mxu0 %v1219
    %2130 = vmatpush1.msra.mxu0 %v1218
    %2131 = vmatprep.subr.mxu0 %v1223
    %2132 = vmatpush1.msra.mxu0 %v1222
    %2133 = vmatprep.subr.mxu0 %v1227
    %2134 = vmatpush1.msra.mxu0 %v1226
    %2135 = vmatprep.subr.mxu0 %v1231
    %2136 = vmatpush1.msra.mxu0 %v1230
    %2137 = vmatprep.subr.mxu0 %v1235
    %2138 = vmatpush1.msra.mxu0 %v1234
    %2139 = vmatprep.subr.mxu0 %v1239
    %2140 = vmatpush1.msra.mxu0 %v1238
    %2141 = vmatprep.mubr.f32.mxu0 %v1813
    %2142 = vmatmul.mubr.f32.gmra.mrb[0].mxu0 %v1811
    %v2143 = vpop.f32.mrb[0].mxu0
    %v2144 = vadd.f32 %v2073, %v2143
    %v2145 = vpop.f32.mrb[0].mxu0
    %v2146 = vadd.f32 %v2075, %v2145
    %2147 = vdwg.mxu0
    %2148 = vmatprep.subr.mxu0 %v1243
    %2149 = vmatpush1.msra.mxu0 %v1242
    %2150 = vmatprep.subr.mxu0 %v1247
    %2151 = vmatpush1.msra.mxu0 %v1246
    %2152 = vmatprep.subr.mxu0 %v1251
    %2153 = vmatpush1.msra.mxu0 %v1250
    %2154 = vmatprep.subr.mxu0 %v1255
    %2155 = vmatpush1.msra.mxu0 %v1254
    %2156 = vmatprep.subr.mxu0 %v1259
    %2157 = vmatpush1.msra.mxu0 %v1258
    %2158 = vmatprep.subr.mxu0 %v1263
    %2159 = vmatpush1.msra.mxu0 %v1262
    %2160 = vmatprep.subr.mxu0 %v1267
    %2161 = vmatpush1.msra.mxu0 %v1266
    %2162 = vmatprep.subr.mxu0 %v1271
    %2163 = vmatpush1.msra.mxu0 %v1270
    %2164 = vmatprep.subr.mxu0 %v1275
    %2165 = vmatpush1.msra.mxu0 %v1274
    %2166 = vmatprep.subr.mxu0 %v1279
    %2167 = vmatpush1.msra.mxu0 %v1278
    %2168 = vmatprep.subr.mxu0 %v1283
    %2169 = vmatpush1.msra.mxu0 %v1282
    %2170 = vmatprep.subr.mxu0 %v1287
    %2171 = vmatpush1.msra.mxu0 %v1286
    %2172 = vmatprep.subr.mxu0 %v1291
    %2173 = vmatpush1.msra.mxu0 %v1290
    %2174 = vmatprep.subr.mxu0 %v1295
    %2175 = vmatpush1.msra.mxu0 %v1294
    %2176 = vmatprep.subr.mxu0 %v1299
    %2177 = vmatpush1.msra.mxu0 %v1298
    %2178 = vmatprep.subr.mxu0 %v1303
    %2179 = vmatpush1.msra.mxu0 %v1302
    %2180 = vmatprep.subr.mxu0 %v1307
    %2181 = vmatpush1.msra.mxu0 %v1306
    %2182 = vmatprep.subr.mxu0 %v1311
    %2183 = vmatpush1.msra.mxu0 %v1310
    %2184 = vmatprep.subr.mxu0 %v1315
    %2185 = vmatpush1.msra.mxu0 %v1314
    %2186 = vmatprep.subr.mxu0 %v1319
    %2187 = vmatpush1.msra.mxu0 %v1318
    %2188 = vmatprep.subr.mxu0 %v1323
    %2189 = vmatpush1.msra.mxu0 %v1322
    %2190 = vmatprep.subr.mxu0 %v1327
    %2191 = vmatpush1.msra.mxu0 %v1326
    %2192 = vmatprep.subr.mxu0 %v1331
    %2193 = vmatpush1.msra.mxu0 %v1330
    %2194 = vmatprep.subr.mxu0 %v1335
    %2195 = vmatpush1.msra.mxu0 %v1334
    %2196 = vmatprep.subr.mxu0 %v1339
    %2197 = vmatpush1.msra.mxu0 %v1338
    %2198 = vmatprep.subr.mxu0 %v1343
    %2199 = vmatpush1.msra.mxu0 %v1342
    %2200 = vmatprep.subr.mxu0 %v1347
    %2201 = vmatpush1.msra.mxu0 %v1346
    %2202 = vmatprep.subr.mxu0 %v1351
    %2203 = vmatpush1.msra.mxu0 %v1350
    %2204 = vmatprep.subr.mxu0 %v1355
    %2205 = vmatpush1.msra.mxu0 %v1354
    %2206 = vmatprep.subr.mxu0 %v1359
    %2207 = vmatpush1.msra.mxu0 %v1358
    %2208 = vmatprep.subr.mxu0 %v1363
    %2209 = vmatpush1.msra.mxu0 %v1362
    %2210 = vmatprep.subr.mxu0 %v1367
    %2211 = vmatpush1.msra.mxu0 %v1366
    %2212 = vmatprep.mubr.f32.mxu0 %v1829
    %2213 = vmatmul.mubr.f32.gmra.mrb[0].mxu0 %v1821
    %v2214 = vpop.f32.mrb[0].mxu0
    %v2215 = vadd.f32 %v2144, %v2214
    %v2216 = vpop.f32.mrb[0].mxu0
    %v2217 = vadd.f32 %v2146, %v2216
    %2218 = vdwg.mxu0
    %2219 = vmatprep.subr.mxu0 %v1371
    %2220 = vmatpush1.msra.mxu0 %v1370
    %2221 = vmatprep.subr.mxu0 %v1375
    %2222 = vmatpush1.msra.mxu0 %v1374
    %2223 = vmatprep.subr.mxu0 %v1379
    %2224 = vmatpush1.msra.mxu0 %v1378
    %2225 = vmatprep.subr.mxu0 %v1383
    %2226 = vmatpush1.msra.mxu0 %v1382
    %2227 = vmatprep.subr.mxu0 %v1387
    %2228 = vmatpush1.msra.mxu0 %v1386
    %2229 = vmatprep.subr.mxu0 %v1391
    %2230 = vmatpush1.msra.mxu0 %v1390
    %2231 = vmatprep.subr.mxu0 %v1395
    %2232 = vmatpush1.msra.mxu0 %v1394
    %2233 = vmatprep.subr.mxu0 %v1399
    %2234 = vmatpush1.msra.mxu0 %v1398
    %2235 = vmatprep.subr.mxu0 %v1403
    %2236 = vmatpush1.msra.mxu0 %v1402
    %2237 = vmatprep.subr.mxu0 %v1407
    %2238 = vmatpush1.msra.mxu0 %v1406
    %2239 = vmatprep.subr.mxu0 %v1411
    %2240 = vmatpush1.msra.mxu0 %v1410
    %2241 = vmatprep.subr.mxu0 %v1415
    %2242 = vmatpush1.msra.mxu0 %v1414
    %2243 = vmatprep.subr.mxu0 %v1419
    %2244 = vmatpush1.msra.mxu0 %v1418
    %2245 = vmatprep.subr.mxu0 %v1423
    %2246 = vmatpush1.msra.mxu0 %v1422
    %2247 = vmatprep.subr.mxu0 %v1427
    %2248 = vmatpush1.msra.mxu0 %v1426
    %2249 = vmatprep.subr.mxu0 %v1431
    %2250 = vmatpush1.msra.mxu0 %v1430
    %2251 = vmatprep.subr.mxu0 %v1435
    %2252 = vmatpush1.msra.mxu0 %v1434
    %2253 = vmatprep.subr.mxu0 %v1439
    %2254 = vmatpush1.msra.mxu0 %v1438
    %2255 = vmatprep.subr.mxu0 %v1443
    %2256 = vmatpush1.msra.mxu0 %v1442
    %2257 = vmatprep.subr.mxu0 %v1447
    %2258 = vmatpush1.msra.mxu0 %v1446
    %2259 = vmatprep.subr.mxu0 %v1451
    %2260 = vmatpush1.msra.mxu0 %v1450
    %2261 = vmatprep.subr.mxu0 %v1455
    %2262 = vmatpush1.msra.mxu0 %v1454
    %2263 = vmatprep.subr.mxu0 %v1459
    %2264 = vmatpush1.msra.mxu0 %v1458
    %2265 = vmatprep.subr.mxu0 %v1463
    %2266 = vmatpush1.msra.mxu0 %v1462
    %2267 = vmatprep.subr.mxu0 %v1467
    %2268 = vmatpush1.msra.mxu0 %v1466
    %2269 = vmatprep.subr.mxu0 %v1471
    %2270 = vmatpush1.msra.mxu0 %v1470
    %2271 = vmatprep.subr.mxu0 %v1475
    %2272 = vmatpush1.msra.mxu0 %v1474
    %2273 = vmatprep.subr.mxu0 %v1479
    %2274 = vmatpush1.msra.mxu0 %v1478
    %2275 = vmatprep.subr.mxu0 %v1483
    %2276 = vmatpush1.msra.mxu0 %v1482
    %2277 = vmatprep.subr.mxu0 %v1487
    %2278 = vmatpush1.msra.mxu0 %v1486
    %2279 = vmatprep.subr.mxu0 %v1491
    %2280 = vmatpush1.msra.mxu0 %v1490
    %2281 = vmatprep.subr.mxu0 %v1495
    %2282 = vmatpush1.msra.mxu0 %v1494
    %2283 = vmatprep.mubr.f32.mxu0 %v1830
    %2284 = vmatmul.mubr.f32.gmra.mrb[0].mxu0 %v1828
    %v2285 = vpop.f32.mrb[0].mxu0
    %v2286 = vadd.f32 %v2215, %v2285
    %v2287 = vpop.f32.mrb[0].mxu0
    %v2288 = vadd.f32 %v2217, %v2287
    %2289 = vdwg.mxu0
    %2290 = vmatprep.subr.mxu0 %v1499
    %2291 = vmatpush1.msra.mxu0 %v1498
    %2292 = vmatprep.subr.mxu0 %v1503
    %2293 = vmatpush1.msra.mxu0 %v1502
    %2294 = vmatprep.subr.mxu0 %v1507
    %2295 = vmatpush1.msra.mxu0 %v1506
    %2296 = vmatprep.subr.mxu0 %v1511
    %2297 = vmatpush1.msra.mxu0 %v1510
    %2298 = vmatprep.subr.mxu0 %v1515
    %2299 = vmatpush1.msra.mxu0 %v1514
    %2300 = vmatprep.subr.mxu0 %v1519
    %2301 = vmatpush1.msra.mxu0 %v1518
    %2302 = vmatprep.subr.mxu0 %v1523
    %2303 = vmatpush1.msra.mxu0 %v1522
    %2304 = vmatprep.subr.mxu0 %v1527
    %2305 = vmatpush1.msra.mxu0 %v1526
    %2306 = vmatprep.subr.mxu0 %v1531
    %2307 = vmatpush1.msra.mxu0 %v1530
    %2308 = vmatprep.subr.mxu0 %v1535
    %2309 = vmatpush1.msra.mxu0 %v1534
    %2310 = vmatprep.subr.mxu0 %v1539
    %2311 = vmatpush1.msra.mxu0 %v1538
    %2312 = vmatprep.subr.mxu0 %v1543
    %2313 = vmatpush1.msra.mxu0 %v1542
    %2314 = vmatprep.subr.mxu0 %v1547
    %2315 = vmatpush1.msra.mxu0 %v1546
    %2316 = vmatprep.subr.mxu0 %v1551
    %2317 = vmatpush1.msra.mxu0 %v1550
    %2318 = vmatprep.subr.mxu0 %v1555
    %2319 = vmatpush1.msra.mxu0 %v1554
    %2320 = vmatprep.subr.mxu0 %v1559
    %2321 = vmatpush1.msra.mxu0 %v1558
    %2322 = vmatprep.subr.mxu0 %v1563
    %2323 = vmatpush1.msra.mxu0 %v1562
    %2324 = vmatprep.subr.mxu0 %v1567
    %2325 = vmatpush1.msra.mxu0 %v1566
    %2326 = vmatprep.subr.mxu0 %v1571
    %2327 = vmatpush1.msra.mxu0 %v1570
    %2328 = vmatprep.subr.mxu0 %v1575
    %2329 = vmatpush1.msra.mxu0 %v1574
    %2330 = vmatprep.subr.mxu0 %v1579
    %2331 = vmatpush1.msra.mxu0 %v1578
    %2332 = vmatprep.subr.mxu0 %v1583
    %2333 = vmatpush1.msra.mxu0 %v1582
    %2334 = vmatprep.subr.mxu0 %v1587
    %2335 = vmatpush1.msra.mxu0 %v1586
    %2336 = vmatprep.subr.mxu0 %v1591
    %2337 = vmatpush1.msra.mxu0 %v1590
    %2338 = vmatprep.subr.mxu0 %v1595
    %2339 = vmatpush1.msra.mxu0 %v1594
    %2340 = vmatprep.subr.mxu0 %v1599
    %2341 = vmatpush1.msra.mxu0 %v1598
    %2342 = vmatprep.subr.mxu0 %v1603
    %2343 = vmatpush1.msra.mxu0 %v1602
    %2344 = vmatprep.subr.mxu0 %v1607
    %2345 = vmatpush1.msra.mxu0 %v1606
    %2346 = vmatprep.subr.mxu0 %v1611
    %2347 = vmatpush1.msra.mxu0 %v1610
    %2348 = vmatprep.subr.mxu0 %v1615
    %2349 = vmatpush1.msra.mxu0 %v1614
    %2350 = vmatprep.subr.mxu0 %v1619
    %2351 = vmatpush1.msra.mxu0 %v1618
    %2352 = vmatprep.subr.mxu0 %v1623
    %2353 = vmatpush1.msra.mxu0 %v1622
    %2354 = vmatprep.mubr.f32.mxu0 %v1846
    %2355 = vmatmul.mubr.f32.gmra.mrb[0].mxu0 %v1838
    %v2356 = vpop.f32.mrb[0].mxu0
    %v2357 = vadd.f32 %v2286, %v2356
    %v2358 = vpop.f32.mrb[0].mxu0
    %v2359 = vadd.f32 %v2288, %v2358
    %2360 = vdwg.mxu0
    %2361 = vmatprep.subr.mxu0 %v1627
    %2362 = vmatpush1.msra.mxu0 %v1626
    %2363 = vmatprep.subr.mxu0 %v1631
    %2364 = vmatpush1.msra.mxu0 %v1630
    %2365 = vmatprep.subr.mxu0 %v1635
    %2366 = vmatpush1.msra.mxu0 %v1634
    %2367 = vmatprep.subr.mxu0 %v1639
    %2368 = vmatpush1.msra.mxu0 %v1638
    %2369 = vmatprep.subr.mxu0 %v1643
    %2370 = vmatpush1.msra.mxu0 %v1642
    %2371 = vmatprep.subr.mxu0 %v1647
    %2372 = vmatpush1.msra.mxu0 %v1646
    %2373 = vmatprep.subr.mxu0 %v1651
    %2374 = vmatpush1.msra.mxu0 %v1650
    %2375 = vmatprep.subr.mxu0 %v1655
    %2376 = vmatpush1.msra.mxu0 %v1654
    %2377 = vmatprep.subr.mxu0 %v1659
    %2378 = vmatpush1.msra.mxu0 %v1658
    %2379 = vmatprep.subr.mxu0 %v1663
    %2380 = vmatpush1.msra.mxu0 %v1662
    %2381 = vmatprep.subr.mxu0 %v1667
    %2382 = vmatpush1.msra.mxu0 %v1666
    %2383 = vmatprep.subr.mxu0 %v1671
    %2384 = vmatpush1.msra.mxu0 %v1670
    %2385 = vmatprep.subr.mxu0 %v1675
    %2386 = vmatpush1.msra.mxu0 %v1674
    %2387 = vmatprep.subr.mxu0 %v1679
    %2388 = vmatpush1.msra.mxu0 %v1678
    %2389 = vmatprep.subr.mxu0 %v1683
    %2390 = vmatpush1.msra.mxu0 %v1682
    %2391 = vmatprep.subr.mxu0 %v1687
    %2392 = vmatpush1.msra.mxu0 %v1686
    %2393 = vmatprep.subr.mxu0 %v1691
    %2394 = vmatpush1.msra.mxu0 %v1690
    %2395 = vmatprep.subr.mxu0 %v1695
    %2396 = vmatpush1.msra.mxu0 %v1694
    %2397 = vmatprep.subr.mxu0 %v1699
    %2398 = vmatpush1.msra.mxu0 %v1698
    %2399 = vmatprep.subr.mxu0 %v1703
    %2400 = vmatpush1.msra.mxu0 %v1702
    %2401 = vmatprep.subr.mxu0 %v1707
    %2402 = vmatpush1.msra.mxu0 %v1706
    %2403 = vmatprep.subr.mxu0 %v1711
    %2404 = vmatpush1.msra.mxu0 %v1710
    %2405 = vmatprep.subr.mxu0 %v1715
    %2406 = vmatpush1.msra.mxu0 %v1714
    %2407 = vmatprep.subr.mxu0 %v1719
    %2408 = vmatpush1.msra.mxu0 %v1718
    %2409 = vmatprep.subr.mxu0 %v1723
    %2410 = vmatpush1.msra.mxu0 %v1722
    %2411 = vmatprep.subr.mxu0 %v1727
    %2412 = vmatpush1.msra.mxu0 %v1726
    %2413 = vmatprep.subr.mxu0 %v1731
    %2414 = vmatpush1.msra.mxu0 %v1730
    %2415 = vmatprep.subr.mxu0 %v1735
    %2416 = vmatpush1.msra.mxu0 %v1734
    %2417 = vmatprep.subr.mxu0 %v1739
    %2418 = vmatpush1.msra.mxu0 %v1738
    %2419 = vmatprep.subr.mxu0 %v1743
    %2420 = vmatpush1.msra.mxu0 %v1742
    %2421 = vmatprep.subr.mxu0 %v1747
    %2422 = vmatpush1.msra.mxu0 %v1746
    %2423 = vmatprep.subr.mxu0 %v1751
    %2424 = vmatpush1.msra.mxu0 %v1750
    %2425 = vmatprep.mubr.f32.mxu0 %v1847
    %2426 = vmatmul.mubr.f32.gmra.mrb[0].mxu0 %v1845
    %v2427 = vpop.f32.mrb[0].mxu0
    %v2428 = vadd.f32 %v2357, %v2427
    %v2429 = vpop.f32.mrb[0].mxu0
    %v2430 = vadd.f32 %v2359, %v2429
    %2431 = vdwg.mxu0
    %2432 = vmatprep.subr.mxu0 %v733
    %2433 = vmatpush1.msra.mxu0 %v732
    %2434 = vmatprep.subr.mxu0 %v737
    %2435 = vmatpush1.msra.mxu0 %v736
    %2436 = vmatprep.subr.mxu0 %v741
    %2437 = vmatpush1.msra.mxu0 %v740
    %2438 = vmatprep.subr.mxu0 %v745
    %2439 = vmatpush1.msra.mxu0 %v744
    %2440 = vmatprep.subr.mxu0 %v749
    %2441 = vmatpush1.msra.mxu0 %v748
    %2442 = vmatprep.subr.mxu0 %v753
    %2443 = vmatpush1.msra.mxu0 %v752
    %2444 = vmatprep.subr.mxu0 %v757
    %2445 = vmatpush1.msra.mxu0 %v756
    %2446 = vmatprep.subr.mxu0 %v761
    %2447 = vmatpush1.msra.mxu0 %v760
    %2448 = vmatprep.subr.mxu0 %v765
    %2449 = vmatpush1.msra.mxu0 %v764
    %2450 = vmatprep.subr.mxu0 %v769
    %2451 = vmatpush1.msra.mxu0 %v768
    %2452 = vmatprep.subr.mxu0 %v773
    %2453 = vmatpush1.msra.mxu0 %v772
    %2454 = vmatprep.subr.mxu0 %v777
    %2455 = vmatpush1.msra.mxu0 %v776
    %2456 = vmatprep.subr.mxu0 %v781
    %2457 = vmatpush1.msra.mxu0 %v780
    %2458 = vmatprep.subr.mxu0 %v785
    %2459 = vmatpush1.msra.mxu0 %v784
    %2460 = vmatprep.subr.mxu0 %v789
    %2461 = vmatpush1.msra.mxu0 %v788
    %2462 = vmatprep.subr.mxu0 %v793
    %2463 = vmatpush1.msra.mxu0 %v792
    %2464 = vmatprep.subr.mxu0 %v797
    %2465 = vmatpush1.msra.mxu0 %v796
    %2466 = vmatprep.subr.mxu0 %v801
    %2467 = vmatpush1.msra.mxu0 %v800
    %2468 = vmatprep.subr.mxu0 %v805
    %2469 = vmatpush1.msra.mxu0 %v804
    %2470 = vmatprep.subr.mxu0 %v809
    %2471 = vmatpush1.msra.mxu0 %v808
    %2472 = vmatprep.subr.mxu0 %v813
    %2473 = vmatpush1.msra.mxu0 %v812
    %2474 = vmatprep.subr.mxu0 %v817
    %2475 = vmatpush1.msra.mxu0 %v816
    %2476 = vmatprep.subr.mxu0 %v821
    %2477 = vmatpush1.msra.mxu0 %v820
    %2478 = vmatprep.subr.mxu0 %v825
    %2479 = vmatpush1.msra.mxu0 %v824
    %2480 = vmatprep.subr.mxu0 %v829
    %2481 = vmatpush1.msra.mxu0 %v828
    %2482 = vmatprep.subr.mxu0 %v833
    %2483 = vmatpush1.msra.mxu0 %v832
    %2484 = vmatprep.subr.mxu0 %v837
    %2485 = vmatpush1.msra.mxu0 %v836
    %2486 = vmatprep.subr.mxu0 %v841
    %2487 = vmatpush1.msra.mxu0 %v840
    %2488 = vmatprep.subr.mxu0 %v845
    %2489 = vmatpush1.msra.mxu0 %v844
    %2490 = vmatprep.subr.mxu0 %v849
    %2491 = vmatpush1.msra.mxu0 %v848
    %2492 = vmatprep.subr.mxu0 %v853
    %2493 = vmatpush1.msra.mxu0 %v852
    %2494 = vmatprep.subr.mxu0 %v857
    %2495 = vmatpush1.msra.mxu0 %v856
    %2496 = vmatprep.mubr.f32.mxu0 %v1795
    %2497 = vmatmul.mubr.f32.gmra.mrb[0].mxu0 %v1787
    %v2498 = vpop.f32.mrb[0].mxu0
    %v2499 = vadd.f32 %v1767, %v2498
    %v2500 = vpop.f32.mrb[0].mxu0
    %v2501 = vadd.f32 %v1771, %v2500
    %2502 = vdwg.mxu0
    %2503 = vmatprep.subr.mxu0 %v861
    %2504 = vmatpush1.msra.mxu0 %v860
    %2505 = vmatprep.subr.mxu0 %v865
    %2506 = vmatpush1.msra.mxu0 %v864
    %2507 = vmatprep.subr.mxu0 %v869
    %2508 = vmatpush1.msra.mxu0 %v868
    %2509 = vmatprep.subr.mxu0 %v873
    %2510 = vmatpush1.msra.mxu0 %v872
    %2511 = vmatprep.subr.mxu0 %v877
    %2512 = vmatpush1.msra.mxu0 %v876
    %2513 = vmatprep.subr.mxu0 %v881
    %2514 = vmatpush1.msra.mxu0 %v880
    %2515 = vmatprep.subr.mxu0 %v885
    %2516 = vmatpush1.msra.mxu0 %v884
    %2517 = vmatprep.subr.mxu0 %v889
    %2518 = vmatpush1.msra.mxu0 %v888
    %2519 = vmatprep.subr.mxu0 %v893
    %2520 = vmatpush1.msra.mxu0 %v892
    %2521 = vmatprep.subr.mxu0 %v897
    %2522 = vmatpush1.msra.mxu0 %v896
    %2523 = vmatprep.subr.mxu0 %v901
    %2524 = vmatpush1.msra.mxu0 %v900
    %2525 = vmatprep.subr.mxu0 %v905
    %2526 = vmatpush1.msra.mxu0 %v904
    %2527 = vmatprep.subr.mxu0 %v909
    %2528 = vmatpush1.msra.mxu0 %v908
    %2529 = vmatprep.subr.mxu0 %v913
    %2530 = vmatpush1.msra.mxu0 %v912
    %2531 = vmatprep.subr.mxu0 %v917
    %2532 = vmatpush1.msra.mxu0 %v916
    %2533 = vmatprep.subr.mxu0 %v921
    %2534 = vmatpush1.msra.mxu0 %v920
    %2535 = vmatprep.subr.mxu0 %v925
    %2536 = vmatpush1.msra.mxu0 %v924
    %2537 = vmatprep.subr.mxu0 %v929
    %2538 = vmatpush1.msra.mxu0 %v928
    %2539 = vmatprep.subr.mxu0 %v933
    %2540 = vmatpush1.msra.mxu0 %v932
    %2541 = vmatprep.subr.mxu0 %v937
    %2542 = vmatpush1.msra.mxu0 %v936
    %2543 = vmatprep.subr.mxu0 %v941
    %2544 = vmatpush1.msra.mxu0 %v940
    %2545 = vmatprep.subr.mxu0 %v945
    %2546 = vmatpush1.msra.mxu0 %v944
    %2547 = vmatprep.subr.mxu0 %v949
    %2548 = vmatpush1.msra.mxu0 %v948
    %2549 = vmatprep.subr.mxu0 %v953
    %2550 = vmatpush1.msra.mxu0 %v952
    %2551 = vmatprep.subr.mxu0 %v957
    %2552 = vmatpush1.msra.mxu0 %v956
    %2553 = vmatprep.subr.mxu0 %v961
    %2554 = vmatpush1.msra.mxu0 %v960
    %2555 = vmatprep.subr.mxu0 %v965
    %2556 = vmatpush1.msra.mxu0 %v964
    %2557 = vmatprep.subr.mxu0 %v969
    %2558 = vmatpush1.msra.mxu0 %v968
    %2559 = vmatprep.subr.mxu0 %v973
    %2560 = vmatpush1.msra.mxu0 %v972
    %2561 = vmatprep.subr.mxu0 %v977
    %2562 = vmatpush1.msra.mxu0 %v976
    %2563 = vmatprep.subr.mxu0 %v981
    %2564 = vmatpush1.msra.mxu0 %v980
    %2565 = vmatprep.subr.mxu0 %v985
    %2566 = vmatpush1.msra.mxu0 %v984
    %2567 = vmatprep.mubr.f32.mxu0 %v1796
    %2568 = vmatmul.mubr.f32.gmra.mrb[0].mxu0 %v1794
    %v2569 = vpop.f32.mrb[0].mxu0
    %v2570 = vadd.f32 %v2499, %v2569
    %v2571 = vpop.f32.mrb[0].mxu0
    %v2572 = vadd.f32 %v2501, %v2571
    %2573 = vdwg.mxu0
    %2574 = vmatprep.subr.mxu0 %v989
    %2575 = vmatpush1.msra.mxu0 %v988
    %2576 = vmatprep.subr.mxu0 %v993
    %2577 = vmatpush1.msra.mxu0 %v992
    %2578 = vmatprep.subr.mxu0 %v997
    %2579 = vmatpush1.msra.mxu0 %v996
    %2580 = vmatprep.subr.mxu0 %v1001
    %2581 = vmatpush1.msra.mxu0 %v1000
    %2582 = vmatprep.subr.mxu0 %v1005
    %2583 = vmatpush1.msra.mxu0 %v1004
    %2584 = vmatprep.subr.mxu0 %v1009
    %2585 = vmatpush1.msra.mxu0 %v1008
    %2586 = vmatprep.subr.mxu0 %v1013
    %2587 = vmatpush1.msra.mxu0 %v1012
    %2588 = vmatprep.subr.mxu0 %v1017
    %2589 = vmatpush1.msra.mxu0 %v1016
    %2590 = vmatprep.subr.mxu0 %v1021
    %2591 = vmatpush1.msra.mxu0 %v1020
    %2592 = vmatprep.subr.mxu0 %v1025
    %2593 = vmatpush1.msra.mxu0 %v1024
    %2594 = vmatprep.subr.mxu0 %v1029
    %2595 = vmatpush1.msra.mxu0 %v1028
    %2596 = vmatprep.subr.mxu0 %v1033
    %2597 = vmatpush1.msra.mxu0 %v1032
    %2598 = vmatprep.subr.mxu0 %v1037
    %2599 = vmatpush1.msra.mxu0 %v1036
    %2600 = vmatprep.subr.mxu0 %v1041
    %2601 = vmatpush1.msra.mxu0 %v1040
    %2602 = vmatprep.subr.mxu0 %v1045
    %2603 = vmatpush1.msra.mxu0 %v1044
    %2604 = vmatprep.subr.mxu0 %v1049
    %2605 = vmatpush1.msra.mxu0 %v1048
    %2606 = vmatprep.subr.mxu0 %v1053
    %2607 = vmatpush1.msra.mxu0 %v1052
    %2608 = vmatprep.subr.mxu0 %v1057
    %2609 = vmatpush1.msra.mxu0 %v1056
    %2610 = vmatprep.subr.mxu0 %v1061
    %2611 = vmatpush1.msra.mxu0 %v1060
    %2612 = vmatprep.subr.mxu0 %v1065
    %2613 = vmatpush1.msra.mxu0 %v1064
    %2614 = vmatprep.subr.mxu0 %v1069
    %2615 = vmatpush1.msra.mxu0 %v1068
    %2616 = vmatprep.subr.mxu0 %v1073
    %2617 = vmatpush1.msra.mxu0 %v1072
    %2618 = vmatprep.subr.mxu0 %v1077
    %2619 = vmatpush1.msra.mxu0 %v1076
    %2620 = vmatprep.subr.mxu0 %v1081
    %2621 = vmatpush1.msra.mxu0 %v1080
    %2622 = vmatprep.subr.mxu0 %v1085
    %2623 = vmatpush1.msra.mxu0 %v1084
    %2624 = vmatprep.subr.mxu0 %v1089
    %2625 = vmatpush1.msra.mxu0 %v1088
    %2626 = vmatprep.subr.mxu0 %v1093
    %2627 = vmatpush1.msra.mxu0 %v1092
    %2628 = vmatprep.subr.mxu0 %v1097
    %2629 = vmatpush1.msra.mxu0 %v1096
    %2630 = vmatprep.subr.mxu0 %v1101
    %2631 = vmatpush1.msra.mxu0 %v1100
    %2632 = vmatprep.subr.mxu0 %v1105
    %2633 = vmatpush1.msra.mxu0 %v1104
    %2634 = vmatprep.subr.mxu0 %v1109
    %2635 = vmatpush1.msra.mxu0 %v1108
    %2636 = vmatprep.subr.mxu0 %v1113
    %2637 = vmatpush1.msra.mxu0 %v1112
    %2638 = vmatprep.mubr.f32.mxu0 %v1812
    %2639 = vmatmul.mubr.f32.gmra.mrb[0].mxu0 %v1804
    %v2640 = vpop.f32.mrb[0].mxu0
    %v2641 = vadd.f32 %v2570, %v2640
    %v2642 = vpop.f32.mrb[0].mxu0
    %v2643 = vadd.f32 %v2572, %v2642
    %2644 = vdwg.mxu0
    %2645 = vmatprep.subr.mxu0 %v1117
    %2646 = vmatpush1.msra.mxu0 %v1116
    %2647 = vmatprep.subr.mxu0 %v1121
    %2648 = vmatpush1.msra.mxu0 %v1120
    %2649 = vmatprep.subr.mxu0 %v1125
    %2650 = vmatpush1.msra.mxu0 %v1124
    %2651 = vmatprep.subr.mxu0 %v1129
    %2652 = vmatpush1.msra.mxu0 %v1128
    %2653 = vmatprep.subr.mxu0 %v1133
    %2654 = vmatpush1.msra.mxu0 %v1132
    %2655 = vmatprep.subr.mxu0 %v1137
    %2656 = vmatpush1.msra.mxu0 %v1136
    %2657 = vmatprep.subr.mxu0 %v1141
    %2658 = vmatpush1.msra.mxu0 %v1140
    %2659 = vmatprep.subr.mxu0 %v1145
    %2660 = vmatpush1.msra.mxu0 %v1144
    %2661 = vmatprep.subr.mxu0 %v1149
    %2662 = vmatpush1.msra.mxu0 %v1148
    %2663 = vmatprep.subr.mxu0 %v1153
    %2664 = vmatpush1.msra.mxu0 %v1152
    %2665 = vmatprep.subr.mxu0 %v1157
    %2666 = vmatpush1.msra.mxu0 %v1156
    %2667 = vmatprep.subr.mxu0 %v1161
    %2668 = vmatpush1.msra.mxu0 %v1160
    %2669 = vmatprep.subr.mxu0 %v1165
    %2670 = vmatpush1.msra.mxu0 %v1164
    %2671 = vmatprep.subr.mxu0 %v1169
    %2672 = vmatpush1.msra.mxu0 %v1168
    %2673 = vmatprep.subr.mxu0 %v1173
    %2674 = vmatpush1.msra.mxu0 %v1172
    %2675 = vmatprep.subr.mxu0 %v1177
    %2676 = vmatpush1.msra.mxu0 %v1176
    %2677 = vmatprep.subr.mxu0 %v1181
    %2678 = vmatpush1.msra.mxu0 %v1180
    %2679 = vmatprep.subr.mxu0 %v1185
    %2680 = vmatpush1.msra.mxu0 %v1184
    %2681 = vmatprep.subr.mxu0 %v1189
    %2682 = vmatpush1.msra.mxu0 %v1188
    %2683 = vmatprep.subr.mxu0 %v1193
    %2684 = vmatpush1.msra.mxu0 %v1192
    %2685 = vmatprep.subr.mxu0 %v1197
    %2686 = vmatpush1.msra.mxu0 %v1196
    %2687 = vmatprep.subr.mxu0 %v1201
    %2688 = vmatpush1.msra.mxu0 %v1200
    %2689 = vmatprep.subr.mxu0 %v1205
    %2690 = vmatpush1.msra.mxu0 %v1204
    %2691 = vmatprep.subr.mxu0 %v1209
    %2692 = vmatpush1.msra.mxu0 %v1208
    %2693 = vmatprep.subr.mxu0 %v1213
    %2694 = vmatpush1.msra.mxu0 %v1212
    %2695 = vmatprep.subr.mxu0 %v1217
    %2696 = vmatpush1.msra.mxu0 %v1216
    %2697 = vmatprep.subr.mxu0 %v1221
    %2698 = vmatpush1.msra.mxu0 %v1220
    %2699 = vmatprep.subr.mxu0 %v1225
    %2700 = vmatpush1.msra.mxu0 %v1224
    %2701 = vmatprep.subr.mxu0 %v1229
    %2702 = vmatpush1.msra.mxu0 %v1228
    %2703 = vmatprep.subr.mxu0 %v1233
    %2704 = vmatpush1.msra.mxu0 %v1232
    %2705 = vmatprep.subr.mxu0 %v1237
    %2706 = vmatpush1.msra.mxu0 %v1236
    %2707 = vmatprep.subr.mxu0 %v1241
    %2708 = vmatpush1.msra.mxu0 %v1240
    %2709 = vmatprep.mubr.f32.mxu0 %v1813
    %2710 = vmatmul.mubr.f32.gmra.mrb[0].mxu0 %v1811
    %v2711 = vpop.f32.mrb[0].mxu0
    %v2712 = vadd.f32 %v2641, %v2711
    %v2713 = vpop.f32.mrb[0].mxu0
    %v2714 = vadd.f32 %v2643, %v2713
    %2715 = vdwg.mxu0
    %2716 = vmatprep.subr.mxu0 %v1245
    %2717 = vmatpush1.msra.mxu0 %v1244
    %2718 = vmatprep.subr.mxu0 %v1249
    %2719 = vmatpush1.msra.mxu0 %v1248
    %2720 = vmatprep.subr.mxu0 %v1253
    %2721 = vmatpush1.msra.mxu0 %v1252
    %2722 = vmatprep.subr.mxu0 %v1257
    %2723 = vmatpush1.msra.mxu0 %v1256
    %2724 = vmatprep.subr.mxu0 %v1261
    %2725 = vmatpush1.msra.mxu0 %v1260
    %2726 = vmatprep.subr.mxu0 %v1265
    %2727 = vmatpush1.msra.mxu0 %v1264
    %2728 = vmatprep.subr.mxu0 %v1269
    %2729 = vmatpush1.msra.mxu0 %v1268
    %2730 = vmatprep.subr.mxu0 %v1273
    %2731 = vmatpush1.msra.mxu0 %v1272
    %2732 = vmatprep.subr.mxu0 %v1277
    %2733 = vmatpush1.msra.mxu0 %v1276
    %2734 = vmatprep.subr.mxu0 %v1281
    %2735 = vmatpush1.msra.mxu0 %v1280
    %2736 = vmatprep.subr.mxu0 %v1285
    %2737 = vmatpush1.msra.mxu0 %v1284
    %2738 = vmatprep.subr.mxu0 %v1289
    %2739 = vmatpush1.msra.mxu0 %v1288
    %2740 = vmatprep.subr.mxu0 %v1293
    %2741 = vmatpush1.msra.mxu0 %v1292
    %2742 = vmatprep.subr.mxu0 %v1297
    %2743 = vmatpush1.msra.mxu0 %v1296
    %2744 = vmatprep.subr.mxu0 %v1301
    %2745 = vmatpush1.msra.mxu0 %v1300
    %2746 = vmatprep.subr.mxu0 %v1305
    %2747 = vmatpush1.msra.mxu0 %v1304
    %2748 = vmatprep.subr.mxu0 %v1309
    %2749 = vmatpush1.msra.mxu0 %v1308
    %2750 = vmatprep.subr.mxu0 %v1313
    %2751 = vmatpush1.msra.mxu0 %v1312
    %2752 = vmatprep.subr.mxu0 %v1317
    %2753 = vmatpush1.msra.mxu0 %v1316
    %2754 = vmatprep.subr.mxu0 %v1321
    %2755 = vmatpush1.msra.mxu0 %v1320
    %2756 = vmatprep.subr.mxu0 %v1325
    %2757 = vmatpush1.msra.mxu0 %v1324
    %2758 = vmatprep.subr.mxu0 %v1329
    %2759 = vmatpush1.msra.mxu0 %v1328
    %2760 = vmatprep.subr.mxu0 %v1333
    %2761 = vmatpush1.msra.mxu0 %v1332
    %2762 = vmatprep.subr.mxu0 %v1337
    %2763 = vmatpush1.msra.mxu0 %v1336
    %2764 = vmatprep.subr.mxu0 %v1341
    %2765 = vmatpush1.msra.mxu0 %v1340
    %2766 = vmatprep.subr.mxu0 %v1345
    %2767 = vmatpush1.msra.mxu0 %v1344
    %2768 = vmatprep.subr.mxu0 %v1349
    %2769 = vmatpush1.msra.mxu0 %v1348
    %2770 = vmatprep.subr.mxu0 %v1353
    %2771 = vmatpush1.msra.mxu0 %v1352
    %2772 = vmatprep.subr.mxu0 %v1357
    %2773 = vmatpush1.msra.mxu0 %v1356
    %2774 = vmatprep.subr.mxu0 %v1361
    %2775 = vmatpush1.msra.mxu0 %v1360
    %2776 = vmatprep.subr.mxu0 %v1365
    %2777 = vmatpush1.msra.mxu0 %v1364
    %2778 = vmatprep.subr.mxu0 %v1369
    %2779 = vmatpush1.msra.mxu0 %v1368
    %2780 = vmatprep.mubr.f32.mxu0 %v1829
    %2781 = vmatmul.mubr.f32.gmra.mrb[0].mxu0 %v1821
    %v2782 = vpop.f32.mrb[0].mxu0
    %v2783 = vadd.f32 %v2712, %v2782
    %v2784 = vpop.f32.mrb[0].mxu0
    %v2785 = vadd.f32 %v2714, %v2784
    %2786 = vdwg.mxu0
    %2787 = vmatprep.subr.mxu0 %v1373
    %2788 = vmatpush1.msra.mxu0 %v1372
    %2789 = vmatprep.subr.mxu0 %v1377
    %2790 = vmatpush1.msra.mxu0 %v1376
    %2791 = vmatprep.subr.mxu0 %v1381
    %2792 = vmatpush1.msra.mxu0 %v1380
    %2793 = vmatprep.subr.mxu0 %v1385
    %2794 = vmatpush1.msra.mxu0 %v1384
    %2795 = vmatprep.subr.mxu0 %v1389
    %2796 = vmatpush1.msra.mxu0 %v1388
    %2797 = vmatprep.subr.mxu0 %v1393
    %2798 = vmatpush1.msra.mxu0 %v1392
    %2799 = vmatprep.subr.mxu0 %v1397
    %2800 = vmatpush1.msra.mxu0 %v1396
    %2801 = vmatprep.subr.mxu0 %v1401
    %2802 = vmatpush1.msra.mxu0 %v1400
    %2803 = vmatprep.subr.mxu0 %v1405
    %2804 = vmatpush1.msra.mxu0 %v1404
    %2805 = vmatprep.subr.mxu0 %v1409
    %2806 = vmatpush1.msra.mxu0 %v1408
    %2807 = vmatprep.subr.mxu0 %v1413
    %2808 = vmatpush1.msra.mxu0 %v1412
    %2809 = vmatprep.subr.mxu0 %v1417
    %2810 = vmatpush1.msra.mxu0 %v1416
    %2811 = vmatprep.subr.mxu0 %v1421
    %2812 = vmatpush1.msra.mxu0 %v1420
    %2813 = vmatprep.subr.mxu0 %v1425
    %2814 = vmatpush1.msra.mxu0 %v1424
    %2815 = vmatprep.subr.mxu0 %v1429
    %2816 = vmatpush1.msra.mxu0 %v1428
    %2817 = vmatprep.subr.mxu0 %v1433
    %2818 = vmatpush1.msra.mxu0 %v1432
    %2819 = vmatprep.subr.mxu0 %v1437
    %2820 = vmatpush1.msra.mxu0 %v1436
    %2821 = vmatprep.subr.mxu0 %v1441
    %2822 = vmatpush1.msra.mxu0 %v1440
    %2823 = vmatprep.subr.mxu0 %v1445
    %2824 = vmatpush1.msra.mxu0 %v1444
    %2825 = vmatprep.subr.mxu0 %v1449
    %2826 = vmatpush1.msra.mxu0 %v1448
    %2827 = vmatprep.subr.mxu0 %v1453
    %2828 = vmatpush1.msra.mxu0 %v1452
    %2829 = vmatprep.subr.mxu0 %v1457
    %2830 = vmatpush1.msra.mxu0 %v1456
    %2831 = vmatprep.subr.mxu0 %v1461
    %2832 = vmatpush1.msra.mxu0 %v1460
    %2833 = vmatprep.subr.mxu0 %v1465
    %2834 = vmatpush1.msra.mxu0 %v1464
    %2835 = vmatprep.subr.mxu0 %v1469
    %2836 = vmatpush1.msra.mxu0 %v1468
    %2837 = vmatprep.subr.mxu0 %v1473
    %2838 = vmatpush1.msra.mxu0 %v1472
    %2839 = vmatprep.subr.mxu0 %v1477
    %2840 = vmatpush1.msra.mxu0 %v1476
    %2841 = vmatprep.subr.mxu0 %v1481
    %2842 = vmatpush1.msra.mxu0 %v1480
    %2843 = vmatprep.subr.mxu0 %v1485
    %2844 = vmatpush1.msra.mxu0 %v1484
    %2845 = vmatprep.subr.mxu0 %v1489
    %2846 = vmatpush1.msra.mxu0 %v1488
    %2847 = vmatprep.subr.mxu0 %v1493
    %2848 = vmatpush1.msra.mxu0 %v1492
    %2849 = vmatprep.subr.mxu0 %v1497
    %2850 = vmatpush1.msra.mxu0 %v1496
    %2851 = vmatprep.mubr.f32.mxu0 %v1830
    %2852 = vmatmul.mubr.f32.gmra.mrb[0].mxu0 %v1828
    %v2853 = vpop.f32.mrb[0].mxu0
    %v2854 = vadd.f32 %v2783, %v2853
    %v2855 = vpop.f32.mrb[0].mxu0
    %v2856 = vadd.f32 %v2785, %v2855
    %2857 = vdwg.mxu0
    %2858 = vmatprep.subr.mxu0 %v1501
    %2859 = vmatpush1.msra.mxu0 %v1500
    %2860 = vmatprep.subr.mxu0 %v1505
    %2861 = vmatpush1.msra.mxu0 %v1504
    %2862 = vmatprep.subr.mxu0 %v1509
    %2863 = vmatpush1.msra.mxu0 %v1508
    %2864 = vmatprep.subr.mxu0 %v1513
    %2865 = vmatpush1.msra.mxu0 %v1512
    %2866 = vmatprep.subr.mxu0 %v1517
    %2867 = vmatpush1.msra.mxu0 %v1516
    %2868 = vmatprep.subr.mxu0 %v1521
    %2869 = vmatpush1.msra.mxu0 %v1520
    %2870 = vmatprep.subr.mxu0 %v1525
    %2871 = vmatpush1.msra.mxu0 %v1524
    %2872 = vmatprep.subr.mxu0 %v1529
    %2873 = vmatpush1.msra.mxu0 %v1528
    %2874 = vmatprep.subr.mxu0 %v1533
    %2875 = vmatpush1.msra.mxu0 %v1532
    %2876 = vmatprep.subr.mxu0 %v1537
    %2877 = vmatpush1.msra.mxu0 %v1536
    %2878 = vmatprep.subr.mxu0 %v1541
    %2879 = vmatpush1.msra.mxu0 %v1540
    %2880 = vmatprep.subr.mxu0 %v1545
    %2881 = vmatpush1.msra.mxu0 %v1544
    %2882 = vmatprep.subr.mxu0 %v1549
    %2883 = vmatpush1.msra.mxu0 %v1548
    %2884 = vmatprep.subr.mxu0 %v1553
    %2885 = vmatpush1.msra.mxu0 %v1552
    %2886 = vmatprep.subr.mxu0 %v1557
    %2887 = vmatpush1.msra.mxu0 %v1556
    %2888 = vmatprep.subr.mxu0 %v1561
    %2889 = vmatpush1.msra.mxu0 %v1560
    %2890 = vmatprep.subr.mxu0 %v1565
    %2891 = vmatpush1.msra.mxu0 %v1564
    %2892 = vmatprep.subr.mxu0 %v1569
    %2893 = vmatpush1.msra.mxu0 %v1568
    %2894 = vmatprep.subr.mxu0 %v1573
    %2895 = vmatpush1.msra.mxu0 %v1572
    %2896 = vmatprep.subr.mxu0 %v1577
    %2897 = vmatpush1.msra.mxu0 %v1576
    %2898 = vmatprep.subr.mxu0 %v1581
    %2899 = vmatpush1.msra.mxu0 %v1580
    %2900 = vmatprep.subr.mxu0 %v1585
    %2901 = vmatpush1.msra.mxu0 %v1584
    %2902 = vmatprep.subr.mxu0 %v1589
    %2903 = vmatpush1.msra.mxu0 %v1588
    %2904 = vmatprep.subr.mxu0 %v1593
    %2905 = vmatpush1.msra.mxu0 %v1592
    %2906 = vmatprep.subr.mxu0 %v1597
    %2907 = vmatpush1.msra.mxu0 %v1596
    %2908 = vmatprep.subr.mxu0 %v1601
    %2909 = vmatpush1.msra.mxu0 %v1600
    %2910 = vmatprep.subr.mxu0 %v1605
    %2911 = vmatpush1.msra.mxu0 %v1604
    %2912 = vmatprep.subr.mxu0 %v1609
    %2913 = vmatpush1.msra.mxu0 %v1608
    %2914 = vmatprep.subr.mxu0 %v1613
    %2915 = vmatpush1.msra.mxu0 %v1612
    %2916 = vmatprep.subr.mxu0 %v1617
    %2917 = vmatpush1.msra.mxu0 %v1616
    %2918 = vmatprep.subr.mxu0 %v1621
    %2919 = vmatpush1.msra.mxu0 %v1620
    %2920 = vmatprep.subr.mxu0 %v1625
    %2921 = vmatpush1.msra.mxu0 %v1624
    %2922 = vmatprep.mubr.f32.mxu0 %v1846
    %2923 = vmatmul.mubr.f32.gmra.mrb[0].mxu0 %v1838
    %v2924 = vpop.f32.mrb[0].mxu0
    %v2925 = vadd.f32 %v2854, %v2924
    %v2926 = vpop.f32.mrb[0].mxu0
    %v2927 = vadd.f32 %v2856, %v2926
    %2928 = vdwg.mxu0
    %2929 = vmatprep.subr.mxu0 %v1629
    %2930 = vmatpush1.msra.mxu0 %v1628
    %2931 = vmatprep.subr.mxu0 %v1633
    %2932 = vmatpush1.msra.mxu0 %v1632
    %2933 = vmatprep.subr.mxu0 %v1637
    %2934 = vmatpush1.msra.mxu0 %v1636
    %2935 = vmatprep.subr.mxu0 %v1641
    %2936 = vmatpush1.msra.mxu0 %v1640
    %2937 = vmatprep.subr.mxu0 %v1645
    %2938 = vmatpush1.msra.mxu0 %v1644
    %2939 = vmatprep.subr.mxu0 %v1649
    %2940 = vmatpush1.msra.mxu0 %v1648
    %2941 = vmatprep.subr.mxu0 %v1653
    %2942 = vmatpush1.msra.mxu0 %v1652
    %2943 = vmatprep.subr.mxu0 %v1657
    %2944 = vmatpush1.msra.mxu0 %v1656
    %2945 = vmatprep.subr.mxu0 %v1661
    %2946 = vmatpush1.msra.mxu0 %v1660
    %2947 = vmatprep.subr.mxu0 %v1665
    %2948 = vmatpush1.msra.mxu0 %v1664
    %2949 = vmatprep.subr.mxu0 %v1669
    %2950 = vmatpush1.msra.mxu0 %v1668
    %2951 = vmatprep.subr.mxu0 %v1673
    %2952 = vmatpush1.msra.mxu0 %v1672
    %2953 = vmatprep.subr.mxu0 %v1677
    %2954 = vmatpush1.msra.mxu0 %v1676
    %2955 = vmatprep.subr.mxu0 %v1681
    %2956 = vmatpush1.msra.mxu0 %v1680
    %2957 = vmatprep.subr.mxu0 %v1685
    %2958 = vmatpush1.msra.mxu0 %v1684
    %2959 = vmatprep.subr.mxu0 %v1689
    %2960 = vmatpush1.msra.mxu0 %v1688
    %2961 = vmatprep.subr.mxu0 %v1693
    %2962 = vmatpush1.msra.mxu0 %v1692
    %2963 = vmatprep.subr.mxu0 %v1697
    %2964 = vmatpush1.msra.mxu0 %v1696
    %2965 = vmatprep.subr.mxu0 %v1701
    %2966 = vmatpush1.msra.mxu0 %v1700
    %2967 = vmatprep.subr.mxu0 %v1705
    %2968 = vmatpush1.msra.mxu0 %v1704
    %2969 = vmatprep.subr.mxu0 %v1709
    %2970 = vmatpush1.msra.mxu0 %v1708
    %2971 = vmatprep.subr.mxu0 %v1713
    %2972 = vmatpush1.msra.mxu0 %v1712
    %2973 = vmatprep.subr.mxu0 %v1717
    %2974 = vmatpush1.msra.mxu0 %v1716
    %2975 = vmatprep.subr.mxu0 %v1721
    %2976 = vmatpush1.msra.mxu0 %v1720
    %2977 = vmatprep.subr.mxu0 %v1725
    %2978 = vmatpush1.msra.mxu0 %v1724
    %2979 = vmatprep.subr.mxu0 %v1729
    %2980 = vmatpush1.msra.mxu0 %v1728
    %2981 = vmatprep.subr.mxu0 %v1733
    %2982 = vmatpush1.msra.mxu0 %v1732
    %2983 = vmatprep.subr.mxu0 %v1737
    %2984 = vmatpush1.msra.mxu0 %v1736
    %2985 = vmatprep.subr.mxu0 %v1741
    %2986 = vmatpush1.msra.mxu0 %v1740
    %2987 = vmatprep.subr.mxu0 %v1745
    %2988 = vmatpush1.msra.mxu0 %v1744
    %2989 = vmatprep.subr.mxu0 %v1749
    %2990 = vmatpush1.msra.mxu0 %v1748
    %2991 = vmatprep.subr.mxu0 %v1753
    %2992 = vmatpush1.msra.mxu0 %v1752
    %2993 = vmatprep.mubr.f32.mxu0 %v1847
    %2994 = vmatmul.mubr.f32.gmra.mrb[0].mxu0 %v1845
    %v2995 = vpop.f32.mrb[0].mxu0
    %v2996 = vadd.f32 %v2925, %v2995
    %v2997 = vpop.f32.mrb[0].mxu0
    %v2998 = vadd.f32 %v2927, %v2997
    %2999 = vdwg.mxu0
    %v3000 = vld [vmem:[#allocation10] sm:$0xff]
    %v3001 = vld [vmem:[#allocation10 + $0x8] sm:$0xff]
    %v3002 = vld [vmem:[#allocation10 + $0x10] sm:$0xff]
    %v3003 = vld [vmem:[#allocation10 + $0x18] sm:$0xff]
    %v3004 = vld [vmem:[#allocation10 + $0x20] sm:$0xff]
    %v3005 = vld [vmem:[#allocation10 + $0x28] sm:$0xff]
    %v3006 = vld [vmem:[#allocation10 + $0x30] sm:$0xff]
    %v3007 = vld [vmem:[#allocation10 + $0x38] sm:$0xff]
    %v3008 = vld [vmem:[#allocation10 + $0x40] sm:$0xff]
    %v3009 = vld [vmem:[#allocation10 + $0x48] sm:$0xff]
    %v3010 = vld [vmem:[#allocation10 + $0x50] sm:$0xff]
    %v3011 = vld [vmem:[#allocation10 + $0x58] sm:$0xff]
    %v3012 = vld [vmem:[#allocation10 + $0x60] sm:$0xff]
    %v3013 = vld [vmem:[#allocation10 + $0x68] sm:$0xff]
    %v3014 = vld [vmem:[#allocation10 + $0x70] sm:$0xff]
    %v3015 = vld [vmem:[#allocation10 + $0x78] sm:$0xff]
    %v3016 = vld [vmem:[#allocation10 + $0x80] sm:$0xff]
    %v3017 = vld [vmem:[#allocation10 + $0x88] sm:$0xff]
    %v3018 = vld [vmem:[#allocation10 + $0x90] sm:$0xff]
    %v3019 = vld [vmem:[#allocation10 + $0x98] sm:$0xff]
    %v3020 = vld [vmem:[#allocation10 + $0xa0] sm:$0xff]
    %v3021 = vld [vmem:[#allocation10 + $0xa8] sm:$0xff]
    %v3022 = vld [vmem:[#allocation10 + $0xb0] sm:$0xff]
    %v3023 = vld [vmem:[#allocation10 + $0xb8] sm:$0xff]
    %v3024 = vld [vmem:[#allocation10 + $0xc0] sm:$0xff]
    %v3025 = vld [vmem:[#allocation10 + $0xc8] sm:$0xff]
    %v3026 = vld [vmem:[#allocation10 + $0xd0] sm:$0xff]
    %v3027 = vld [vmem:[#allocation10 + $0xd8] sm:$0xff]
    %v3028 = vld [vmem:[#allocation10 + $0xe0] sm:$0xff]
    %v3029 = vld [vmem:[#allocation10 + $0xe8] sm:$0xff]
    %v3030 = vld [vmem:[#allocation10 + $0xf0] sm:$0xff]
    %v3031 = vld [vmem:[#allocation10 + $0xf8] sm:$0xff]
    %v3032 = vld [vmem:[#allocation10 + $0x100] sm:$0xff]
    %v3033 = vld [vmem:[#allocation10 + $0x108] sm:$0xff]
    %v3034 = vld [vmem:[#allocation10 + $0x110] sm:$0xff]
    %v3035 = vld [vmem:[#allocation10 + $0x118] sm:$0xff]
    %v3036 = vld [vmem:[#allocation10 + $0x120] sm:$0xff]
    %v3037 = vld [vmem:[#allocation10 + $0x128] sm:$0xff]
    %v3038 = vld [vmem:[#allocation10 + $0x130] sm:$0xff]
    %v3039 = vld [vmem:[#allocation10 + $0x138] sm:$0xff]
    %v3040 = vld [vmem:[#allocation10 + $0x140] sm:$0xff]
    %v3041 = vld [vmem:[#allocation10 + $0x148] sm:$0xff]
    %v3042 = vld [vmem:[#allocation10 + $0x150] sm:$0xff]
    %v3043 = vld [vmem:[#allocation10 + $0x158] sm:$0xff]
    %v3044 = vld [vmem:[#allocation10 + $0x160] sm:$0xff]
    %v3045 = vld [vmem:[#allocation10 + $0x168] sm:$0xff]
    %v3046 = vld [vmem:[#allocation10 + $0x170] sm:$0xff]
    %v3047 = vld [vmem:[#allocation10 + $0x178] sm:$0xff]
    %v3048 = vld [vmem:[#allocation10 + $0x180] sm:$0xff]
    %v3049 = vld [vmem:[#allocation10 + $0x188] sm:$0xff]
    %v3050 = vld [vmem:[#allocation10 + $0x190] sm:$0xff]
    %v3051 = vld [vmem:[#allocation10 + $0x198] sm:$0xff]
    %v3052 = vld [vmem:[#allocation10 + $0x1a0] sm:$0xff]
    %v3053 = vld [vmem:[#allocation10 + $0x1a8] sm:$0xff]
    %v3054 = vld [vmem:[#allocation10 + $0x1b0] sm:$0xff]
    %v3055 = vld [vmem:[#allocation10 + $0x1b8] sm:$0xff]
    %v3056 = vld [vmem:[#allocation10 + $0x1c0] sm:$0xff]
    %v3057 = vld [vmem:[#allocation10 + $0x1c8] sm:$0xff]
    %v3058 = vld [vmem:[#allocation10 + $0x1d0] sm:$0xff]
    %v3059 = vld [vmem:[#allocation10 + $0x1d8] sm:$0xff]
    %v3060 = vld [vmem:[#allocation10 + $0x1e0] sm:$0xff]
    %v3061 = vld [vmem:[#allocation10 + $0x1e8] sm:$0xff]
    %v3062 = vld [vmem:[#allocation10 + $0x1f0] sm:$0xff]
    %v3063 = vld [vmem:[#allocation10 + $0x1f8] sm:$0xff]
    %v3064 = vld [vmem:[#allocation10 + $0x200] sm:$0xff]
    %v3065 = vld [vmem:[#allocation10 + $0x208] sm:$0xff]
    %v3066 = vld [vmem:[#allocation10 + $0x210] sm:$0xff]
    %v3067 = vld [vmem:[#allocation10 + $0x218] sm:$0xff]
    %v3068 = vld [vmem:[#allocation10 + $0x220] sm:$0xff]
    %v3069 = vld [vmem:[#allocation10 + $0x228] sm:$0xff]
    %v3070 = vld [vmem:[#allocation10 + $0x230] sm:$0xff]
    %v3071 = vld [vmem:[#allocation10 + $0x238] sm:$0xff]
    %v3072 = vld [vmem:[#allocation10 + $0x240] sm:$0xff]
    %v3073 = vld [vmem:[#allocation10 + $0x248] sm:$0xff]
    %v3074 = vld [vmem:[#allocation10 + $0x250] sm:$0xff]
    %v3075 = vld [vmem:[#allocation10 + $0x258] sm:$0xff]
    %v3076 = vld [vmem:[#allocation10 + $0x260] sm:$0xff]
    %v3077 = vld [vmem:[#allocation10 + $0x268] sm:$0xff]
    %v3078 = vld [vmem:[#allocation10 + $0x270] sm:$0xff]
    %v3079 = vld [vmem:[#allocation10 + $0x278] sm:$0xff]
    %v3080 = vld [vmem:[#allocation10 + $0x280] sm:$0xff]
    %v3081 = vld [vmem:[#allocation10 + $0x288] sm:$0xff]
    %v3082 = vld [vmem:[#allocation10 + $0x290] sm:$0xff]
    %v3083 = vld [vmem:[#allocation10 + $0x298] sm:$0xff]
    %v3084 = vld [vmem:[#allocation10 + $0x2a0] sm:$0xff]
    %v3085 = vld [vmem:[#allocation10 + $0x2a8] sm:$0xff]
    %v3086 = vld [vmem:[#allocation10 + $0x2b0] sm:$0xff]
    %v3087 = vld [vmem:[#allocation10 + $0x2b8] sm:$0xff]
    %v3088 = vld [vmem:[#allocation10 + $0x2c0] sm:$0xff]
    %v3089 = vld [vmem:[#allocation10 + $0x2c8] sm:$0xff]
    %v3090 = vld [vmem:[#allocation10 + $0x2d0] sm:$0xff]
    %v3091 = vld [vmem:[#allocation10 + $0x2d8] sm:$0xff]
    %v3092 = vld [vmem:[#allocation10 + $0x2e0] sm:$0xff]
    %v3093 = vld [vmem:[#allocation10 + $0x2e8] sm:$0xff]
    %v3094 = vld [vmem:[#allocation10 + $0x2f0] sm:$0xff]
    %v3095 = vld [vmem:[#allocation10 + $0x2f8] sm:$0xff]
    %v3096 = vld [vmem:[#allocation10 + $0x300] sm:$0xff]
    %v3097 = vld [vmem:[#allocation10 + $0x308] sm:$0xff]
    %v3098 = vld [vmem:[#allocation10 + $0x310] sm:$0xff]
    %v3099 = vld [vmem:[#allocation10 + $0x318] sm:$0xff]
    %v3100 = vld [vmem:[#allocation10 + $0x320] sm:$0xff]
    %v3101 = vld [vmem:[#allocation10 + $0x328] sm:$0xff]
    %v3102 = vld [vmem:[#allocation10 + $0x330] sm:$0xff]
    %v3103 = vld [vmem:[#allocation10 + $0x338] sm:$0xff]
    %v3104 = vld [vmem:[#allocation10 + $0x340] sm:$0xff]
    %v3105 = vld [vmem:[#allocation10 + $0x348] sm:$0xff]
    %v3106 = vld [vmem:[#allocation10 + $0x350] sm:$0xff]
    %v3107 = vld [vmem:[#allocation10 + $0x358] sm:$0xff]
    %v3108 = vld [vmem:[#allocation10 + $0x360] sm:$0xff]
    %v3109 = vld [vmem:[#allocation10 + $0x368] sm:$0xff]
    %v3110 = vld [vmem:[#allocation10 + $0x370] sm:$0xff]
    %v3111 = vld [vmem:[#allocation10 + $0x378] sm:$0xff]
    %v3112 = vld [vmem:[#allocation10 + $0x380] sm:$0xff]
    %v3113 = vld [vmem:[#allocation10 + $0x388] sm:$0xff]
    %v3114 = vld [vmem:[#allocation10 + $0x390] sm:$0xff]
    %v3115 = vld [vmem:[#allocation10 + $0x398] sm:$0xff]
    %v3116 = vld [vmem:[#allocation10 + $0x3a0] sm:$0xff]
    %v3117 = vld [vmem:[#allocation10 + $0x3a8] sm:$0xff]
    %v3118 = vld [vmem:[#allocation10 + $0x3b0] sm:$0xff]
    %v3119 = vld [vmem:[#allocation10 + $0x3b8] sm:$0xff]
    %v3120 = vld [vmem:[#allocation10 + $0x3c0] sm:$0xff]
    %v3121 = vld [vmem:[#allocation10 + $0x3c8] sm:$0xff]
    %v3122 = vld [vmem:[#allocation10 + $0x3d0] sm:$0xff]
    %v3123 = vld [vmem:[#allocation10 + $0x3d8] sm:$0xff]
    %v3124 = vld [vmem:[#allocation10 + $0x3e0] sm:$0xff]
    %v3125 = vld [vmem:[#allocation10 + $0x3e8] sm:$0xff]
    %v3126 = vld [vmem:[#allocation10 + $0x3f0] sm:$0xff]
    %v3127 = vld [vmem:[#allocation10 + $0x3f8] sm:$0xff]
    %v3128 = vunpack.c.l.bf16 %v3000
    %v3129 = vunpack.c.h.bf16 %v3000
    %v3130 = vunpack.c.l.bf16 %v3001
    %v3131 = vunpack.c.h.bf16 %v3001
    %v3132 = vunpack.c.l.bf16 %v3002
    %v3133 = vunpack.c.h.bf16 %v3002
    %v3134 = vunpack.c.l.bf16 %v3003
    %v3135 = vunpack.c.h.bf16 %v3003
    %v3136 = vunpack.c.l.bf16 %v3004
    %v3137 = vunpack.c.h.bf16 %v3004
    %v3138 = vunpack.c.l.bf16 %v3005
    %v3139 = vunpack.c.h.bf16 %v3005
    %v3140 = vunpack.c.l.bf16 %v3006
    %v3141 = vunpack.c.h.bf16 %v3006
    %v3142 = vunpack.c.l.bf16 %v3007
    %v3143 = vunpack.c.h.bf16 %v3007
    %v3144 = vunpack.c.l.bf16 %v3008
    %v3145 = vunpack.c.h.bf16 %v3008
    %v3146 = vunpack.c.l.bf16 %v3009
    %v3147 = vunpack.c.h.bf16 %v3009
    %v3148 = vunpack.c.l.bf16 %v3010
    %v3149 = vunpack.c.h.bf16 %v3010
    %v3150 = vunpack.c.l.bf16 %v3011
    %v3151 = vunpack.c.h.bf16 %v3011
    %v3152 = vunpack.c.l.bf16 %v3012
    %v3153 = vunpack.c.h.bf16 %v3012
    %v3154 = vunpack.c.l.bf16 %v3013
    %v3155 = vunpack.c.h.bf16 %v3013
    %v3156 = vunpack.c.l.bf16 %v3014
    %v3157 = vunpack.c.h.bf16 %v3014
    %v3158 = vunpack.c.l.bf16 %v3015
    %v3159 = vunpack.c.h.bf16 %v3015
    %v3160 = vunpack.c.l.bf16 %v3016
    %v3161 = vunpack.c.h.bf16 %v3016
    %v3162 = vunpack.c.l.bf16 %v3017
    %v3163 = vunpack.c.h.bf16 %v3017
    %v3164 = vunpack.c.l.bf16 %v3018
    %v3165 = vunpack.c.h.bf16 %v3018
    %v3166 = vunpack.c.l.bf16 %v3019
    %v3167 = vunpack.c.h.bf16 %v3019
    %v3168 = vunpack.c.l.bf16 %v3020
    %v3169 = vunpack.c.h.bf16 %v3020
    %v3170 = vunpack.c.l.bf16 %v3021
    %v3171 = vunpack.c.h.bf16 %v3021
    %v3172 = vunpack.c.l.bf16 %v3022
    %v3173 = vunpack.c.h.bf16 %v3022
    %v3174 = vunpack.c.l.bf16 %v3023
    %v3175 = vunpack.c.h.bf16 %v3023
    %v3176 = vunpack.c.l.bf16 %v3024
    %v3177 = vunpack.c.h.bf16 %v3024
    %v3178 = vunpack.c.l.bf16 %v3025
    %v3179 = vunpack.c.h.bf16 %v3025
    %v3180 = vunpack.c.l.bf16 %v3026
    %v3181 = vunpack.c.h.bf16 %v3026
    %v3182 = vunpack.c.l.bf16 %v3027
    %v3183 = vunpack.c.h.bf16 %v3027
    %v3184 = vunpack.c.l.bf16 %v3028
    %v3185 = vunpack.c.h.bf16 %v3028
    %v3186 = vunpack.c.l.bf16 %v3029
    %v3187 = vunpack.c.h.bf16 %v3029
    %v3188 = vunpack.c.l.bf16 %v3030
    %v3189 = vunpack.c.h.bf16 %v3030
    %v3190 = vunpack.c.l.bf16 %v3031
    %v3191 = vunpack.c.h.bf16 %v3031
    %v3192 = vunpack.c.l.bf16 %v3032
    %v3193 = vunpack.c.h.bf16 %v3032
    %v3194 = vunpack.c.l.bf16 %v3033
    %v3195 = vunpack.c.h.bf16 %v3033
    %v3196 = vunpack.c.l.bf16 %v3034
    %v3197 = vunpack.c.h.bf16 %v3034
    %v3198 = vunpack.c.l.bf16 %v3035
    %v3199 = vunpack.c.h.bf16 %v3035
    %v3200 = vunpack.c.l.bf16 %v3036
    %v3201 = vunpack.c.h.bf16 %v3036
    %v3202 = vunpack.c.l.bf16 %v3037
    %v3203 = vunpack.c.h.bf16 %v3037
    %v3204 = vunpack.c.l.bf16 %v3038
    %v3205 = vunpack.c.h.bf16 %v3038
    %v3206 = vunpack.c.l.bf16 %v3039
    %v3207 = vunpack.c.h.bf16 %v3039
    %v3208 = vunpack.c.l.bf16 %v3040
    %v3209 = vunpack.c.h.bf16 %v3040
    %v3210 = vunpack.c.l.bf16 %v3041
    %v3211 = vunpack.c.h.bf16 %v3041
    %v3212 = vunpack.c.l.bf16 %v3042
    %v3213 = vunpack.c.h.bf16 %v3042
    %v3214 = vunpack.c.l.bf16 %v3043
    %v3215 = vunpack.c.h.bf16 %v3043
    %v3216 = vunpack.c.l.bf16 %v3044
    %v3217 = vunpack.c.h.bf16 %v3044
    %v3218 = vunpack.c.l.bf16 %v3045
    %v3219 = vunpack.c.h.bf16 %v3045
    %v3220 = vunpack.c.l.bf16 %v3046
    %v3221 = vunpack.c.h.bf16 %v3046
    %v3222 = vunpack.c.l.bf16 %v3047
    %v3223 = vunpack.c.h.bf16 %v3047
    %v3224 = vunpack.c.l.bf16 %v3048
    %v3225 = vunpack.c.h.bf16 %v3048
    %v3226 = vunpack.c.l.bf16 %v3049
    %v3227 = vunpack.c.h.bf16 %v3049
    %v3228 = vunpack.c.l.bf16 %v3050
    %v3229 = vunpack.c.h.bf16 %v3050
    %v3230 = vunpack.c.l.bf16 %v3051
    %v3231 = vunpack.c.h.bf16 %v3051
    %v3232 = vunpack.c.l.bf16 %v3052
    %v3233 = vunpack.c.h.bf16 %v3052
    %v3234 = vunpack.c.l.bf16 %v3053
    %v3235 = vunpack.c.h.bf16 %v3053
    %v3236 = vunpack.c.l.bf16 %v3054
    %v3237 = vunpack.c.h.bf16 %v3054
    %v3238 = vunpack.c.l.bf16 %v3055
    %v3239 = vunpack.c.h.bf16 %v3055
    %v3240 = vunpack.c.l.bf16 %v3056
    %v3241 = vunpack.c.h.bf16 %v3056
    %v3242 = vunpack.c.l.bf16 %v3057
    %v3243 = vunpack.c.h.bf16 %v3057
    %v3244 = vunpack.c.l.bf16 %v3058
    %v3245 = vunpack.c.h.bf16 %v3058
    %v3246 = vunpack.c.l.bf16 %v3059
    %v3247 = vunpack.c.h.bf16 %v3059
    %v3248 = vunpack.c.l.bf16 %v3060
    %v3249 = vunpack.c.h.bf16 %v3060
    %v3250 = vunpack.c.l.bf16 %v3061
    %v3251 = vunpack.c.h.bf16 %v3061
    %v3252 = vunpack.c.l.bf16 %v3062
    %v3253 = vunpack.c.h.bf16 %v3062
    %v3254 = vunpack.c.l.bf16 %v3063
    %v3255 = vunpack.c.h.bf16 %v3063
    %v3256 = vunpack.c.l.bf16 %v3064
    %v3257 = vunpack.c.h.bf16 %v3064
    %v3258 = vunpack.c.l.bf16 %v3065
    %v3259 = vunpack.c.h.bf16 %v3065
    %v3260 = vunpack.c.l.bf16 %v3066
    %v3261 = vunpack.c.h.bf16 %v3066
    %v3262 = vunpack.c.l.bf16 %v3067
    %v3263 = vunpack.c.h.bf16 %v3067
    %v3264 = vunpack.c.l.bf16 %v3068
    %v3265 = vunpack.c.h.bf16 %v3068
    %v3266 = vunpack.c.l.bf16 %v3069
    %v3267 = vunpack.c.h.bf16 %v3069
    %v3268 = vunpack.c.l.bf16 %v3070
    %v3269 = vunpack.c.h.bf16 %v3070
    %v3270 = vunpack.c.l.bf16 %v3071
    %v3271 = vunpack.c.h.bf16 %v3071
    %v3272 = vunpack.c.l.bf16 %v3072
    %v3273 = vunpack.c.h.bf16 %v3072
    %v3274 = vunpack.c.l.bf16 %v3073
    %v3275 = vunpack.c.h.bf16 %v3073
    %v3276 = vunpack.c.l.bf16 %v3074
    %v3277 = vunpack.c.h.bf16 %v3074
    %v3278 = vunpack.c.l.bf16 %v3075
    %v3279 = vunpack.c.h.bf16 %v3075
    %v3280 = vunpack.c.l.bf16 %v3076
    %v3281 = vunpack.c.h.bf16 %v3076
    %v3282 = vunpack.c.l.bf16 %v3077
    %v3283 = vunpack.c.h.bf16 %v3077
    %v3284 = vunpack.c.l.bf16 %v3078
    %v3285 = vunpack.c.h.bf16 %v3078
    %v3286 = vunpack.c.l.bf16 %v3079
    %v3287 = vunpack.c.h.bf16 %v3079
    %v3288 = vunpack.c.l.bf16 %v3080
    %v3289 = vunpack.c.h.bf16 %v3080
    %v3290 = vunpack.c.l.bf16 %v3081
    %v3291 = vunpack.c.h.bf16 %v3081
    %v3292 = vunpack.c.l.bf16 %v3082
    %v3293 = vunpack.c.h.bf16 %v3082
    %v3294 = vunpack.c.l.bf16 %v3083
    %v3295 = vunpack.c.h.bf16 %v3083
    %v3296 = vunpack.c.l.bf16 %v3084
    %v3297 = vunpack.c.h.bf16 %v3084
    %v3298 = vunpack.c.l.bf16 %v3085
    %v3299 = vunpack.c.h.bf16 %v3085
    %v3300 = vunpack.c.l.bf16 %v3086
    %v3301 = vunpack.c.h.bf16 %v3086
    %v3302 = vunpack.c.l.bf16 %v3087
    %v3303 = vunpack.c.h.bf16 %v3087
    %v3304 = vunpack.c.l.bf16 %v3088
    %v3305 = vunpack.c.h.bf16 %v3088
    %v3306 = vunpack.c.l.bf16 %v3089
    %v3307 = vunpack.c.h.bf16 %v3089
    %v3308 = vunpack.c.l.bf16 %v3090
    %v3309 = vunpack.c.h.bf16 %v3090
    %v3310 = vunpack.c.l.bf16 %v3091
    %v3311 = vunpack.c.h.bf16 %v3091
    %v3312 = vunpack.c.l.bf16 %v3092
    %v3313 = vunpack.c.h.bf16 %v3092
    %v3314 = vunpack.c.l.bf16 %v3093
    %v3315 = vunpack.c.h.bf16 %v3093
    %v3316 = vunpack.c.l.bf16 %v3094
    %v3317 = vunpack.c.h.bf16 %v3094
    %v3318 = vunpack.c.l.bf16 %v3095
    %v3319 = vunpack.c.h.bf16 %v3095
    %v3320 = vunpack.c.l.bf16 %v3096
    %v3321 = vunpack.c.h.bf16 %v3096
    %v3322 = vunpack.c.l.bf16 %v3097
    %v3323 = vunpack.c.h.bf16 %v3097
    %v3324 = vunpack.c.l.bf16 %v3098
    %v3325 = vunpack.c.h.bf16 %v3098
    %v3326 = vunpack.c.l.bf16 %v3099
    %v3327 = vunpack.c.h.bf16 %v3099
    %v3328 = vunpack.c.l.bf16 %v3100
    %v3329 = vunpack.c.h.bf16 %v3100
    %v3330 = vunpack.c.l.bf16 %v3101
    %v3331 = vunpack.c.h.bf16 %v3101
    %v3332 = vunpack.c.l.bf16 %v3102
    %v3333 = vunpack.c.h.bf16 %v3102
    %v3334 = vunpack.c.l.bf16 %v3103
    %v3335 = vunpack.c.h.bf16 %v3103
    %v3336 = vunpack.c.l.bf16 %v3104
    %v3337 = vunpack.c.h.bf16 %v3104
    %v3338 = vunpack.c.l.bf16 %v3105
    %v3339 = vunpack.c.h.bf16 %v3105
    %v3340 = vunpack.c.l.bf16 %v3106
    %v3341 = vunpack.c.h.bf16 %v3106
    %v3342 = vunpack.c.l.bf16 %v3107
    %v3343 = vunpack.c.h.bf16 %v3107
    %v3344 = vunpack.c.l.bf16 %v3108
    %v3345 = vunpack.c.h.bf16 %v3108
    %v3346 = vunpack.c.l.bf16 %v3109
    %v3347 = vunpack.c.h.bf16 %v3109
    %v3348 = vunpack.c.l.bf16 %v3110
    %v3349 = vunpack.c.h.bf16 %v3110
    %v3350 = vunpack.c.l.bf16 %v3111
    %v3351 = vunpack.c.h.bf16 %v3111
    %v3352 = vunpack.c.l.bf16 %v3112
    %v3353 = vunpack.c.h.bf16 %v3112
    %v3354 = vunpack.c.l.bf16 %v3113
    %v3355 = vunpack.c.h.bf16 %v3113
    %v3356 = vunpack.c.l.bf16 %v3114
    %v3357 = vunpack.c.h.bf16 %v3114
    %v3358 = vunpack.c.l.bf16 %v3115
    %v3359 = vunpack.c.h.bf16 %v3115
    %v3360 = vunpack.c.l.bf16 %v3116
    %v3361 = vunpack.c.h.bf16 %v3116
    %v3362 = vunpack.c.l.bf16 %v3117
    %v3363 = vunpack.c.h.bf16 %v3117
    %v3364 = vunpack.c.l.bf16 %v3118
    %v3365 = vunpack.c.h.bf16 %v3118
    %v3366 = vunpack.c.l.bf16 %v3119
    %v3367 = vunpack.c.h.bf16 %v3119
    %v3368 = vunpack.c.l.bf16 %v3120
    %v3369 = vunpack.c.h.bf16 %v3120
    %v3370 = vunpack.c.l.bf16 %v3121
    %v3371 = vunpack.c.h.bf16 %v3121
    %v3372 = vunpack.c.l.bf16 %v3122
    %v3373 = vunpack.c.h.bf16 %v3122
    %v3374 = vunpack.c.l.bf16 %v3123
    %v3375 = vunpack.c.h.bf16 %v3123
    %v3376 = vunpack.c.l.bf16 %v3124
    %v3377 = vunpack.c.h.bf16 %v3124
    %v3378 = vunpack.c.l.bf16 %v3125
    %v3379 = vunpack.c.h.bf16 %v3125
    %v3380 = vunpack.c.l.bf16 %v3126
    %v3381 = vunpack.c.h.bf16 %v3126
    %v3382 = vunpack.c.l.bf16 %v3127
    %v3383 = vunpack.c.h.bf16 %v3127
    %v3384 = vld [vmem:[#allocation11] sm:$0xf]
    %v3386 = vlaneseq
    %v3387 = vshrl.u32 %v3386, 7
    %v3388 = vsub.s32 0, %v3387
    %v3389 = vrot.slane %v3384, %v3388
    %v3390 = vlaneseq
    %v3391 = vshrl.u32 %v3390, 7
    %v3392 = vsub.s32 1, %v3391
    %v3393 = vrot.slane %v3384, %v3392
    %v3394 = vlaneseq
    %v3395 = vshrl.u32 %v3394, 7
    %v3396 = vsub.s32 2, %v3395
    %v3397 = vrot.slane %v3384, %v3396
    %v3398 = vlaneseq
    %v3399 = vshrl.u32 %v3398, 7
    %v3400 = vsub.s32 3, %v3399
    %v3401 = vrot.slane %v3384, %v3400
    %vm3414 = vcmask 1041409
    %v3415 = vsel %vm3414, %v210, %v206
    %v3416 = vsel %vm3414, %v211, %v207
    %v3417 = vsel %vm3414, %v212, %v208
    %v3418 = vsel %vm3414, %v213, %v209
    %3423 = vmatprep.subr.mxu0 %v3129
    %3424 = vmatpush1.msra.mxu0 %v3128
    %3425 = vmatprep.subr.mxu0 %v3133
    %3426 = vmatpush1.msra.mxu0 %v3132
    %3427 = vmatprep.subr.mxu0 %v3137
    %3428 = vmatpush1.msra.mxu0 %v3136
    %3429 = vmatprep.subr.mxu0 %v3141
    %3430 = vmatpush1.msra.mxu0 %v3140
    %3431 = vmatprep.subr.mxu0 %v3145
    %3432 = vmatpush1.msra.mxu0 %v3144
    %3433 = vmatprep.subr.mxu0 %v3149
    %3434 = vmatpush1.msra.mxu0 %v3148
    %3435 = vmatprep.subr.mxu0 %v3153
    %3436 = vmatpush1.msra.mxu0 %v3152
    %3437 = vmatprep.subr.mxu0 %v3157
    %3438 = vmatpush1.msra.mxu0 %v3156
    %3439 = vmatprep.subr.mxu0 %v3161
    %3440 = vmatpush1.msra.mxu0 %v3160
    %3441 = vmatprep.subr.mxu0 %v3165
    %3442 = vmatpush1.msra.mxu0 %v3164
    %3443 = vmatprep.subr.mxu0 %v3169
    %3444 = vmatpush1.msra.mxu0 %v3168
    %3445 = vmatprep.subr.mxu0 %v3173
    %3446 = vmatpush1.msra.mxu0 %v3172
    %3447 = vmatprep.subr.mxu0 %v3177
    %3448 = vmatpush1.msra.mxu0 %v3176
    %3449 = vmatprep.subr.mxu0 %v3181
    %3450 = vmatpush1.msra.mxu0 %v3180
    %3451 = vmatprep.subr.mxu0 %v3185
    %3452 = vmatpush1.msra.mxu0 %v3184
    %3453 = vmatprep.subr.mxu0 %v3189
    %3454 = vmatpush1.msra.mxu0 %v3188
    %3455 = vmatprep.subr.mxu0 %v3193
    %3456 = vmatpush1.msra.mxu0 %v3192
    %3457 = vmatprep.subr.mxu0 %v3197
    %3458 = vmatpush1.msra.mxu0 %v3196
    %3459 = vmatprep.subr.mxu0 %v3201
    %3460 = vmatpush1.msra.mxu0 %v3200
    %3461 = vmatprep.subr.mxu0 %v3205
    %3462 = vmatpush1.msra.mxu0 %v3204
    %3463 = vmatprep.subr.mxu0 %v3209
    %3464 = vmatpush1.msra.mxu0 %v3208
    %3465 = vmatprep.subr.mxu0 %v3213
    %3466 = vmatpush1.msra.mxu0 %v3212
    %3467 = vmatprep.subr.mxu0 %v3217
    %3468 = vmatpush1.msra.mxu0 %v3216
    %3469 = vmatprep.subr.mxu0 %v3221
    %3470 = vmatpush1.msra.mxu0 %v3220
    %3471 = vmatprep.subr.mxu0 %v3225
    %3472 = vmatpush1.msra.mxu0 %v3224
    %3473 = vmatprep.subr.mxu0 %v3229
    %3474 = vmatpush1.msra.mxu0 %v3228
    %3475 = vmatprep.subr.mxu0 %v3233
    %3476 = vmatpush1.msra.mxu0 %v3232
    %3477 = vmatprep.subr.mxu0 %v3237
    %3478 = vmatpush1.msra.mxu0 %v3236
    %3479 = vmatprep.subr.mxu0 %v3241
    %3480 = vmatpush1.msra.mxu0 %v3240
    %3481 = vmatprep.subr.mxu0 %v3245
    %3482 = vmatpush1.msra.mxu0 %v3244
    %3483 = vmatprep.subr.mxu0 %v3249
    %3484 = vmatpush1.msra.mxu0 %v3248
    %3485 = vmatprep.subr.mxu0 %v3253
    %3486 = vmatpush1.msra.mxu0 %v3252
    %3487 = vmatprep.mubr.f32.mxu0 %v3416
    %3488 = vmatmul.mubr.f32.gmra.mrb[0].mxu0 %v3415
    %v3489 = vpop.f32.mrb[0].mxu0
    %v3490 = vadd.f32 %v3389, %v3489
    %v3491 = vpop.f32.mrb[0].mxu0
    %v3492 = vadd.f32 %v3393, %v3491
    %3493 = vdwg.mxu0
    %3494 = vmatprep.subr.mxu0 %v3257
    %3495 = vmatpush1.msra.mxu0 %v3256
    %3496 = vmatprep.subr.mxu0 %v3261
    %3497 = vmatpush1.msra.mxu0 %v3260
    %3498 = vmatprep.subr.mxu0 %v3265
    %3499 = vmatpush1.msra.mxu0 %v3264
    %3500 = vmatprep.subr.mxu0 %v3269
    %3501 = vmatpush1.msra.mxu0 %v3268
    %3502 = vmatprep.subr.mxu0 %v3273
    %3503 = vmatpush1.msra.mxu0 %v3272
    %3504 = vmatprep.subr.mxu0 %v3277
    %3505 = vmatpush1.msra.mxu0 %v3276
    %3506 = vmatprep.subr.mxu0 %v3281
    %3507 = vmatpush1.msra.mxu0 %v3280
    %3508 = vmatprep.subr.mxu0 %v3285
    %3509 = vmatpush1.msra.mxu0 %v3284
    %3510 = vmatprep.subr.mxu0 %v3289
    %3511 = vmatpush1.msra.mxu0 %v3288
    %3512 = vmatprep.subr.mxu0 %v3293
    %3513 = vmatpush1.msra.mxu0 %v3292
    %3514 = vmatprep.subr.mxu0 %v3297
    %3515 = vmatpush1.msra.mxu0 %v3296
    %3516 = vmatprep.subr.mxu0 %v3301
    %3517 = vmatpush1.msra.mxu0 %v3300
    %3518 = vmatprep.subr.mxu0 %v3305
    %3519 = vmatpush1.msra.mxu0 %v3304
    %3520 = vmatprep.subr.mxu0 %v3309
    %3521 = vmatpush1.msra.mxu0 %v3308
    %3522 = vmatprep.subr.mxu0 %v3313
    %3523 = vmatpush1.msra.mxu0 %v3312
    %3524 = vmatprep.subr.mxu0 %v3317
    %3525 = vmatpush1.msra.mxu0 %v3316
    %3526 = vmatprep.subr.mxu0 %v3321
    %3527 = vmatpush1.msra.mxu0 %v3320
    %3528 = vmatprep.subr.mxu0 %v3325
    %3529 = vmatpush1.msra.mxu0 %v3324
    %3530 = vmatprep.subr.mxu0 %v3329
    %3531 = vmatpush1.msra.mxu0 %v3328
    %3532 = vmatprep.subr.mxu0 %v3333
    %3533 = vmatpush1.msra.mxu0 %v3332
    %3534 = vmatprep.subr.mxu0 %v3337
    %3535 = vmatpush1.msra.mxu0 %v3336
    %3536 = vmatprep.subr.mxu0 %v3341
    %3537 = vmatpush1.msra.mxu0 %v3340
    %3538 = vmatprep.subr.mxu0 %v3345
    %3539 = vmatpush1.msra.mxu0 %v3344
    %3540 = vmatprep.subr.mxu0 %v3349
    %3541 = vmatpush1.msra.mxu0 %v3348
    %3542 = vmatprep.subr.mxu0 %v3353
    %3543 = vmatpush1.msra.mxu0 %v3352
    %3544 = vmatprep.subr.mxu0 %v3357
    %3545 = vmatpush1.msra.mxu0 %v3356
    %3546 = vmatprep.subr.mxu0 %v3361
    %3547 = vmatpush1.msra.mxu0 %v3360
    %3548 = vmatprep.subr.mxu0 %v3365
    %3549 = vmatpush1.msra.mxu0 %v3364
    %3550 = vmatprep.subr.mxu0 %v3369
    %3551 = vmatpush1.msra.mxu0 %v3368
    %3552 = vmatprep.subr.mxu0 %v3373
    %3553 = vmatpush1.msra.mxu0 %v3372
    %3554 = vmatprep.subr.mxu0 %v3377
    %3555 = vmatpush1.msra.mxu0 %v3376
    %3556 = vmatprep.subr.mxu0 %v3381
    %3557 = vmatpush1.msra.mxu0 %v3380
    %3558 = vmatprep.mubr.f32.mxu0 %v3418
    %3559 = vmatmul.mubr.f32.gmra.mrb[0].mxu0 %v3417
    %v3560 = vpop.f32.mrb[0].mxu0
    %v3561 = vadd.f32 %v3490, %v3560
    %v3562 = vpop.f32.mrb[0].mxu0
    %v3563 = vadd.f32 %v3492, %v3562
    %3564 = vdwg.mxu0
    %3565 = vmatprep.subr.mxu0 %v3131
    %3566 = vmatpush1.msra.mxu0 %v3130
    %3567 = vmatprep.subr.mxu0 %v3135
    %3568 = vmatpush1.msra.mxu0 %v3134
    %3569 = vmatprep.subr.mxu0 %v3139
    %3570 = vmatpush1.msra.mxu0 %v3138
    %3571 = vmatprep.subr.mxu0 %v3143
    %3572 = vmatpush1.msra.mxu0 %v3142
    %3573 = vmatprep.subr.mxu0 %v3147
    %3574 = vmatpush1.msra.mxu0 %v3146
    %3575 = vmatprep.subr.mxu0 %v3151
    %3576 = vmatpush1.msra.mxu0 %v3150
    %3577 = vmatprep.subr.mxu0 %v3155
    %3578 = vmatpush1.msra.mxu0 %v3154
    %3579 = vmatprep.subr.mxu0 %v3159
    %3580 = vmatpush1.msra.mxu0 %v3158
    %3581 = vmatprep.subr.mxu0 %v3163
    %3582 = vmatpush1.msra.mxu0 %v3162
    %3583 = vmatprep.subr.mxu0 %v3167
    %3584 = vmatpush1.msra.mxu0 %v3166
    %3585 = vmatprep.subr.mxu0 %v3171
    %3586 = vmatpush1.msra.mxu0 %v3170
    %3587 = vmatprep.subr.mxu0 %v3175
    %3588 = vmatpush1.msra.mxu0 %v3174
    %3589 = vmatprep.subr.mxu0 %v3179
    %3590 = vmatpush1.msra.mxu0 %v3178
    %3591 = vmatprep.subr.mxu0 %v3183
    %3592 = vmatpush1.msra.mxu0 %v3182
    %3593 = vmatprep.subr.mxu0 %v3187
    %3594 = vmatpush1.msra.mxu0 %v3186
    %3595 = vmatprep.subr.mxu0 %v3191
    %3596 = vmatpush1.msra.mxu0 %v3190
    %3597 = vmatprep.subr.mxu0 %v3195
    %3598 = vmatpush1.msra.mxu0 %v3194
    %3599 = vmatprep.subr.mxu0 %v3199
    %3600 = vmatpush1.msra.mxu0 %v3198
    %3601 = vmatprep.subr.mxu0 %v3203
    %3602 = vmatpush1.msra.mxu0 %v3202
    %3603 = vmatprep.subr.mxu0 %v3207
    %3604 = vmatpush1.msra.mxu0 %v3206
    %3605 = vmatprep.subr.mxu0 %v3211
    %3606 = vmatpush1.msra.mxu0 %v3210
    %3607 = vmatprep.subr.mxu0 %v3215
    %3608 = vmatpush1.msra.mxu0 %v3214
    %3609 = vmatprep.subr.mxu0 %v3219
    %3610 = vmatpush1.msra.mxu0 %v3218
    %3611 = vmatprep.subr.mxu0 %v3223
    %3612 = vmatpush1.msra.mxu0 %v3222
    %3613 = vmatprep.subr.mxu0 %v3227
    %3614 = vmatpush1.msra.mxu0 %v3226
    %3615 = vmatprep.subr.mxu0 %v3231
    %3616 = vmatpush1.msra.mxu0 %v3230
    %3617 = vmatprep.subr.mxu0 %v3235
    %3618 = vmatpush1.msra.mxu0 %v3234
    %3619 = vmatprep.subr.mxu0 %v3239
    %3620 = vmatpush1.msra.mxu0 %v3238
    %3621 = vmatprep.subr.mxu0 %v3243
    %3622 = vmatpush1.msra.mxu0 %v3242
    %3623 = vmatprep.subr.mxu0 %v3247
    %3624 = vmatpush1.msra.mxu0 %v3246
    %3625 = vmatprep.subr.mxu0 %v3251
    %3626 = vmatpush1.msra.mxu0 %v3250
    %3627 = vmatprep.subr.mxu0 %v3255
    %3628 = vmatpush1.msra.mxu0 %v3254
    %3629 = vmatprep.mubr.f32.mxu0 %v3416
    %3630 = vmatmul.mubr.f32.gmra.mrb[0].mxu0 %v3415
    %v3631 = vpop.f32.mrb[0].mxu0
    %v3632 = vadd.f32 %v3397, %v3631
    %v3633 = vpop.f32.mrb[0].mxu0
    %v3634 = vadd.f32 %v3401, %v3633
    %3635 = vdwg.mxu0
    %3636 = vmatprep.subr.mxu0 %v3259
    %3637 = vmatpush1.msra.mxu0 %v3258
    %3638 = vmatprep.subr.mxu0 %v3263
    %3639 = vmatpush1.msra.mxu0 %v3262
    %3640 = vmatprep.subr.mxu0 %v3267
    %3641 = vmatpush1.msra.mxu0 %v3266
    %3642 = vmatprep.subr.mxu0 %v3271
    %3643 = vmatpush1.msra.mxu0 %v3270
    %3644 = vmatprep.subr.mxu0 %v3275
    %3645 = vmatpush1.msra.mxu0 %v3274
    %3646 = vmatprep.subr.mxu0 %v3279
    %3647 = vmatpush1.msra.mxu0 %v3278
    %3648 = vmatprep.subr.mxu0 %v3283
    %3649 = vmatpush1.msra.mxu0 %v3282
    %3650 = vmatprep.subr.mxu0 %v3287
    %3651 = vmatpush1.msra.mxu0 %v3286
    %3652 = vmatprep.subr.mxu0 %v3291
    %3653 = vmatpush1.msra.mxu0 %v3290
    %3654 = vmatprep.subr.mxu0 %v3295
    %3655 = vmatpush1.msra.mxu0 %v3294
    %3656 = vmatprep.subr.mxu0 %v3299
    %3657 = vmatpush1.msra.mxu0 %v3298
    %3658 = vmatprep.subr.mxu0 %v3303
    %3659 = vmatpush1.msra.mxu0 %v3302
    %3660 = vmatprep.subr.mxu0 %v3307
    %3661 = vmatpush1.msra.mxu0 %v3306
    %3662 = vmatprep.subr.mxu0 %v3311
    %3663 = vmatpush1.msra.mxu0 %v3310
    %3664 = vmatprep.subr.mxu0 %v3315
    %3665 = vmatpush1.msra.mxu0 %v3314
    %3666 = vmatprep.subr.mxu0 %v3319
    %3667 = vmatpush1.msra.mxu0 %v3318
    %3668 = vmatprep.subr.mxu0 %v3323
    %3669 = vmatpush1.msra.mxu0 %v3322
    %3670 = vmatprep.subr.mxu0 %v3327
    %3671 = vmatpush1.msra.mxu0 %v3326
    %3672 = vmatprep.subr.mxu0 %v3331
    %3673 = vmatpush1.msra.mxu0 %v3330
    %3674 = vmatprep.subr.mxu0 %v3335
    %3675 = vmatpush1.msra.mxu0 %v3334
    %3676 = vmatprep.subr.mxu0 %v3339
    %3677 = vmatpush1.msra.mxu0 %v3338
    %3678 = vmatprep.subr.mxu0 %v3343
    %3679 = vmatpush1.msra.mxu0 %v3342
    %3680 = vmatprep.subr.mxu0 %v3347
    %3681 = vmatpush1.msra.mxu0 %v3346
    %3682 = vmatprep.subr.mxu0 %v3351
    %3683 = vmatpush1.msra.mxu0 %v3350
    %3684 = vmatprep.subr.mxu0 %v3355
    %3685 = vmatpush1.msra.mxu0 %v3354
    %3686 = vmatprep.subr.mxu0 %v3359
    %3687 = vmatpush1.msra.mxu0 %v3358
    %3688 = vmatprep.subr.mxu0 %v3363
    %3689 = vmatpush1.msra.mxu0 %v3362
    %3690 = vmatprep.subr.mxu0 %v3367
    %3691 = vmatpush1.msra.mxu0 %v3366
    %3692 = vmatprep.subr.mxu0 %v3371
    %3693 = vmatpush1.msra.mxu0 %v3370
    %3694 = vmatprep.subr.mxu0 %v3375
    %3695 = vmatpush1.msra.mxu0 %v3374
    %3696 = vmatprep.subr.mxu0 %v3379
    %3697 = vmatpush1.msra.mxu0 %v3378
    %3698 = vmatprep.subr.mxu0 %v3383
    %3699 = vmatpush1.msra.mxu0 %v3382
    %3700 = vmatprep.mubr.f32.mxu0 %v3418
    %3701 = vmatmul.mubr.f32.gmra.mrb[0].mxu0 %v3417
    %v3702 = vpop.f32.mrb[0].mxu0
    %v3703 = vadd.f32 %v3632, %v3702
    %v3704 = vpop.f32.mrb[0].mxu0
    %v3705 = vadd.f32 %v3634, %v3704
    %3706 = vdwg.mxu0
    %v3707 = vadd.f32 %v2428, %v3561
    %v3708 = vadd.f32 %v2430, %v3563
    %v3709 = vadd.f32 %v2996, %v3703
    %v3710 = vadd.f32 %v2998, %v3705
    %v3711 = vld [vmem:[#allocation13] sm:$0xff]
    %v3712 = vld [vmem:[#allocation13 + $0x8] sm:$0xff]
    %v3713 = vld [vmem:[#allocation13 + $0x10] sm:$0xff]
    %v3714 = vld [vmem:[#allocation13 + $0x18] sm:$0xff]
    %v3715 = vld [vmem:[#allocation13 + $0x20] sm:$0xff]
    %v3716 = vld [vmem:[#allocation13 + $0x28] sm:$0xff]
    %v3717 = vld [vmem:[#allocation13 + $0x30] sm:$0xff]
    %v3718 = vld [vmem:[#allocation13 + $0x38] sm:$0xff]
    %v3719 = vld [vmem:[#allocation13 + $0x40] sm:$0xff]
    %v3720 = vld [vmem:[#allocation13 + $0x48] sm:$0xff]
    %v3721 = vld [vmem:[#allocation13 + $0x50] sm:$0xff]
    %v3722 = vld [vmem:[#allocation13 + $0x58] sm:$0xff]
    %v3723 = vld [vmem:[#allocation13 + $0x60] sm:$0xff]
    %v3724 = vld [vmem:[#allocation13 + $0x68] sm:$0xff]
    %v3725 = vld [vmem:[#allocation13 + $0x70] sm:$0xff]
    %v3726 = vld [vmem:[#allocation13 + $0x78] sm:$0xff]
    %v3727 = vld [vmem:[#allocation13 + $0x80] sm:$0xff]
    %v3728 = vld [vmem:[#allocation13 + $0x88] sm:$0xff]
    %v3729 = vld [vmem:[#allocation13 + $0x90] sm:$0xff]
    %v3730 = vld [vmem:[#allocation13 + $0x98] sm:$0xff]
    %v3731 = vld [vmem:[#allocation13 + $0xa0] sm:$0xff]
    %v3732 = vld [vmem:[#allocation13 + $0xa8] sm:$0xff]
    %v3733 = vld [vmem:[#allocation13 + $0xb0] sm:$0xff]
    %v3734 = vld [vmem:[#allocation13 + $0xb8] sm:$0xff]
    %v3735 = vld [vmem:[#allocation13 + $0xc0] sm:$0xff]
    %v3736 = vld [vmem:[#allocation13 + $0xc8] sm:$0xff]
    %v3737 = vld [vmem:[#allocation13 + $0xd0] sm:$0xff]
    %v3738 = vld [vmem:[#allocation13 + $0xd8] sm:$0xff]
    %v3739 = vld [vmem:[#allocation13 + $0xe0] sm:$0xff]
    %v3740 = vld [vmem:[#allocation13 + $0xe8] sm:$0xff]
    %v3741 = vld [vmem:[#allocation13 + $0xf0] sm:$0xff]
    %v3742 = vld [vmem:[#allocation13 + $0xf8] sm:$0xff]
    %v3743 = vld [vmem:[#allocation13 + $0x100] sm:$0xff]
    %v3744 = vld [vmem:[#allocation13 + $0x108] sm:$0xff]
    %v3745 = vld [vmem:[#allocation13 + $0x110] sm:$0xff]
    %v3746 = vld [vmem:[#allocation13 + $0x118] sm:$0xff]
    %v3747 = vld [vmem:[#allocation13 + $0x120] sm:$0xff]
    %v3748 = vld [vmem:[#allocation13 + $0x128] sm:$0xff]
    %v3749 = vld [vmem:[#allocation13 + $0x130] sm:$0xff]
    %v3750 = vld [vmem:[#allocation13 + $0x138] sm:$0xff]
    %v3751 = vld [vmem:[#allocation13 + $0x140] sm:$0xff]
    %v3752 = vld [vmem:[#allocation13 + $0x148] sm:$0xff]
    %v3753 = vld [vmem:[#allocation13 + $0x150] sm:$0xff]
    %v3754 = vld [vmem:[#allocation13 + $0x158] sm:$0xff]
    %v3755 = vld [vmem:[#allocation13 + $0x160] sm:$0xff]
    %v3756 = vld [vmem:[#allocation13 + $0x168] sm:$0xff]
    %v3757 = vld [vmem:[#allocation13 + $0x170] sm:$0xff]
    %v3758 = vld [vmem:[#allocation13 + $0x178] sm:$0xff]
    %v3759 = vld [vmem:[#allocation13 + $0x180] sm:$0xff]
    %v3760 = vld [vmem:[#allocation13 + $0x188] sm:$0xff]
    %v3761 = vld [vmem:[#allocation13 + $0x190] sm:$0xff]
    %v3762 = vld [vmem:[#allocation13 + $0x198] sm:$0xff]
    %v3763 = vld [vmem:[#allocation13 + $0x1a0] sm:$0xff]
    %v3764 = vld [vmem:[#allocation13 + $0x1a8] sm:$0xff]
    %v3765 = vld [vmem:[#allocation13 + $0x1b0] sm:$0xff]
    %v3766 = vld [vmem:[#allocation13 + $0x1b8] sm:$0xff]
    %v3767 = vld [vmem:[#allocation13 + $0x1c0] sm:$0xff]
    %v3768 = vld [vmem:[#allocation13 + $0x1c8] sm:$0xff]
    %v3769 = vld [vmem:[#allocation13 + $0x1d0] sm:$0xff]
    %v3770 = vld [vmem:[#allocation13 + $0x1d8] sm:$0xff]
    %v3771 = vld [vmem:[#allocation13 + $0x1e0] sm:$0xff]
    %v3772 = vld [vmem:[#allocation13 + $0x1e8] sm:$0xff]
    %v3773 = vld [vmem:[#allocation13 + $0x1f0] sm:$0xff]
    %v3774 = vld [vmem:[#allocation13 + $0x1f8] sm:$0xff]
    %v3775 = vld [vmem:[#allocation13 + $0x200] sm:$0xff]
    %v3776 = vld [vmem:[#allocation13 + $0x208] sm:$0xff]
    %v3777 = vld [vmem:[#allocation13 + $0x210] sm:$0xff]
    %v3778 = vld [vmem:[#allocation13 + $0x218] sm:$0xff]
    %v3779 = vld [vmem:[#allocation13 + $0x220] sm:$0xff]
    %v3780 = vld [vmem:[#allocation13 + $0x228] sm:$0xff]
    %v3781 = vld [vmem:[#allocation13 + $0x230] sm:$0xff]
    %v3782 = vld [vmem:[#allocation13 + $0x238] sm:$0xff]
    %v3783 = vld [vmem:[#allocation13 + $0x240] sm:$0xff]
    %v3784 = vld [vmem:[#allocation13 + $0x248] sm:$0xff]
    %v3785 = vld [vmem:[#allocation13 + $0x250] sm:$0xff]
    %v3786 = vld [vmem:[#allocation13 + $0x258] sm:$0xff]
    %v3787 = vld [vmem:[#allocation13 + $0x260] sm:$0xff]
    %v3788 = vld [vmem:[#allocation13 + $0x268] sm:$0xff]
    %v3789 = vld [vmem:[#allocation13 + $0x270] sm:$0xff]
    %v3790 = vld [vmem:[#allocation13 + $0x278] sm:$0xff]
    %v3791 = vld [vmem:[#allocation13 + $0x280] sm:$0xff]
    %v3792 = vld [vmem:[#allocation13 + $0x288] sm:$0xff]
    %v3793 = vld [vmem:[#allocation13 + $0x290] sm:$0xff]
    %v3794 = vld [vmem:[#allocation13 + $0x298] sm:$0xff]
    %v3795 = vld [vmem:[#allocation13 + $0x2a0] sm:$0xff]
    %v3796 = vld [vmem:[#allocation13 + $0x2a8] sm:$0xff]
    %v3797 = vld [vmem:[#allocation13 + $0x2b0] sm:$0xff]
    %v3798 = vld [vmem:[#allocation13 + $0x2b8] sm:$0xff]
    %v3799 = vld [vmem:[#allocation13 + $0x2c0] sm:$0xff]
    %v3800 = vld [vmem:[#allocation13 + $0x2c8] sm:$0xff]
    %v3801 = vld [vmem:[#allocation13 + $0x2d0] sm:$0xff]
    %v3802 = vld [vmem:[#allocation13 + $0x2d8] sm:$0xff]
    %v3803 = vld [vmem:[#allocation13 + $0x2e0] sm:$0xff]
    %v3804 = vld [vmem:[#allocation13 + $0x2e8] sm:$0xff]
    %v3805 = vld [vmem:[#allocation13 + $0x2f0] sm:$0xff]
    %v3806 = vld [vmem:[#allocation13 + $0x2f8] sm:$0xff]
    %v3807 = vld [vmem:[#allocation13 + $0x300] sm:$0xff]
    %v3808 = vld [vmem:[#allocation13 + $0x308] sm:$0xff]
    %v3809 = vld [vmem:[#allocation13 + $0x310] sm:$0xff]
    %v3810 = vld [vmem:[#allocation13 + $0x318] sm:$0xff]
    %v3811 = vld [vmem:[#allocation13 + $0x320] sm:$0xff]
    %v3812 = vld [vmem:[#allocation13 + $0x328] sm:$0xff]
    %v3813 = vld [vmem:[#allocation13 + $0x330] sm:$0xff]
    %v3814 = vld [vmem:[#allocation13 + $0x338] sm:$0xff]
    %v3815 = vld [vmem:[#allocation13 + $0x340] sm:$0xff]
    %v3816 = vld [vmem:[#allocation13 + $0x348] sm:$0xff]
    %v3817 = vld [vmem:[#allocation13 + $0x350] sm:$0xff]
    %v3818 = vld [vmem:[#allocation13 + $0x358] sm:$0xff]
    %v3819 = vld [vmem:[#allocation13 + $0x360] sm:$0xff]
    %v3820 = vld [vmem:[#allocation13 + $0x368] sm:$0xff]
    %v3821 = vld [vmem:[#allocation13 + $0x370] sm:$0xff]
    %v3822 = vld [vmem:[#allocation13 + $0x378] sm:$0xff]
    %v3823 = vld [vmem:[#allocation13 + $0x380] sm:$0xff]
    %v3824 = vld [vmem:[#allocation13 + $0x388] sm:$0xff]
    %v3825 = vld [vmem:[#allocation13 + $0x390] sm:$0xff]
    %v3826 = vld [vmem:[#allocation13 + $0x398] sm:$0xff]
    %v3827 = vld [vmem:[#allocation13 + $0x3a0] sm:$0xff]
    %v3828 = vld [vmem:[#allocation13 + $0x3a8] sm:$0xff]
    %v3829 = vld [vmem:[#allocation13 + $0x3b0] sm:$0xff]
    %v3830 = vld [vmem:[#allocation13 + $0x3b8] sm:$0xff]
    %v3831 = vld [vmem:[#allocation13 + $0x3c0] sm:$0xff]
    %v3832 = vld [vmem:[#allocation13 + $0x3c8] sm:$0xff]
    %v3833 = vld [vmem:[#allocation13 + $0x3d0] sm:$0xff]
    %v3834 = vld [vmem:[#allocation13 + $0x3d8] sm:$0xff]
    %v3835 = vld [vmem:[#allocation13 + $0x3e0] sm:$0xff]
    %v3836 = vld [vmem:[#allocation13 + $0x3e8] sm:$0xff]
    %v3837 = vld [vmem:[#allocation13 + $0x3f0] sm:$0xff]
    %v3838 = vld [vmem:[#allocation13 + $0x3f8] sm:$0xff]
    %v3839 = vunpack.c.l.bf16 %v3711
    %v3840 = vunpack.c.h.bf16 %v3711
    %v3841 = vunpack.c.l.bf16 %v3712
    %v3842 = vunpack.c.h.bf16 %v3712
    %v3843 = vunpack.c.l.bf16 %v3713
    %v3844 = vunpack.c.h.bf16 %v3713
    %v3845 = vunpack.c.l.bf16 %v3714
    %v3846 = vunpack.c.h.bf16 %v3714
    %v3847 = vunpack.c.l.bf16 %v3715
    %v3848 = vunpack.c.h.bf16 %v3715
    %v3849 = vunpack.c.l.bf16 %v3716
    %v3850 = vunpack.c.h.bf16 %v3716
    %v3851 = vunpack.c.l.bf16 %v3717
    %v3852 = vunpack.c.h.bf16 %v3717
    %v3853 = vunpack.c.l.bf16 %v3718
    %v3854 = vunpack.c.h.bf16 %v3718
    %v3855 = vunpack.c.l.bf16 %v3719
    %v3856 = vunpack.c.h.bf16 %v3719
    %v3857 = vunpack.c.l.bf16 %v3720
    %v3858 = vunpack.c.h.bf16 %v3720
    %v3859 = vunpack.c.l.bf16 %v3721
    %v3860 = vunpack.c.h.bf16 %v3721
    %v3861 = vunpack.c.l.bf16 %v3722
    %v3862 = vunpack.c.h.bf16 %v3722
    %v3863 = vunpack.c.l.bf16 %v3723
    %v3864 = vunpack.c.h.bf16 %v3723
    %v3865 = vunpack.c.l.bf16 %v3724
    %v3866 = vunpack.c.h.bf16 %v3724
    %v3867 = vunpack.c.l.bf16 %v3725
    %v3868 = vunpack.c.h.bf16 %v3725
    %v3869 = vunpack.c.l.bf16 %v3726
    %v3870 = vunpack.c.h.bf16 %v3726
    %v3871 = vunpack.c.l.bf16 %v3727
    %v3872 = vunpack.c.h.bf16 %v3727
    %v3873 = vunpack.c.l.bf16 %v3728
    %v3874 = vunpack.c.h.bf16 %v3728
    %v3875 = vunpack.c.l.bf16 %v3729
    %v3876 = vunpack.c.h.bf16 %v3729
    %v3877 = vunpack.c.l.bf16 %v3730
    %v3878 = vunpack.c.h.bf16 %v3730
    %v3879 = vunpack.c.l.bf16 %v3731
    %v3880 = vunpack.c.h.bf16 %v3731
    %v3881 = vunpack.c.l.bf16 %v3732
    %v3882 = vunpack.c.h.bf16 %v3732
    %v3883 = vunpack.c.l.bf16 %v3733
    %v3884 = vunpack.c.h.bf16 %v3733
    %v3885 = vunpack.c.l.bf16 %v3734
    %v3886 = vunpack.c.h.bf16 %v3734
    %v3887 = vunpack.c.l.bf16 %v3735
    %v3888 = vunpack.c.h.bf16 %v3735
    %v3889 = vunpack.c.l.bf16 %v3736
    %v3890 = vunpack.c.h.bf16 %v3736
    %v3891 = vunpack.c.l.bf16 %v3737
    %v3892 = vunpack.c.h.bf16 %v3737
    %v3893 = vunpack.c.l.bf16 %v3738
    %v3894 = vunpack.c.h.bf16 %v3738
    %v3895 = vunpack.c.l.bf16 %v3739
    %v3896 = vunpack.c.h.bf16 %v3739
    %v3897 = vunpack.c.l.bf16 %v3740
    %v3898 = vunpack.c.h.bf16 %v3740
    %v3899 = vunpack.c.l.bf16 %v3741
    %v3900 = vunpack.c.h.bf16 %v3741
    %v3901 = vunpack.c.l.bf16 %v3742
    %v3902 = vunpack.c.h.bf16 %v3742
    %v3903 = vunpack.c.l.bf16 %v3743
    %v3904 = vunpack.c.h.bf16 %v3743
    %v3905 = vunpack.c.l.bf16 %v3744
    %v3906 = vunpack.c.h.bf16 %v3744
    %v3907 = vunpack.c.l.bf16 %v3745
    %v3908 = vunpack.c.h.bf16 %v3745
    %v3909 = vunpack.c.l.bf16 %v3746
    %v3910 = vunpack.c.h.bf16 %v3746
    %v3911 = vunpack.c.l.bf16 %v3747
    %v3912 = vunpack.c.h.bf16 %v3747
    %v3913 = vunpack.c.l.bf16 %v3748
    %v3914 = vunpack.c.h.bf16 %v3748
    %v3915 = vunpack.c.l.bf16 %v3749
    %v3916 = vunpack.c.h.bf16 %v3749
    %v3917 = vunpack.c.l.bf16 %v3750
    %v3918 = vunpack.c.h.bf16 %v3750
    %v3919 = vunpack.c.l.bf16 %v3751
    %v3920 = vunpack.c.h.bf16 %v3751
    %v3921 = vunpack.c.l.bf16 %v3752
    %v3922 = vunpack.c.h.bf16 %v3752
    %v3923 = vunpack.c.l.bf16 %v3753
    %v3924 = vunpack.c.h.bf16 %v3753
    %v3925 = vunpack.c.l.bf16 %v3754
    %v3926 = vunpack.c.h.bf16 %v3754
    %v3927 = vunpack.c.l.bf16 %v3755
    %v3928 = vunpack.c.h.bf16 %v3755
    %v3929 = vunpack.c.l.bf16 %v3756
    %v3930 = vunpack.c.h.bf16 %v3756
    %v3931 = vunpack.c.l.bf16 %v3757
    %v3932 = vunpack.c.h.bf16 %v3757
    %v3933 = vunpack.c.l.bf16 %v3758
    %v3934 = vunpack.c.h.bf16 %v3758
    %v3935 = vunpack.c.l.bf16 %v3759
    %v3936 = vunpack.c.h.bf16 %v3759
    %v3937 = vunpack.c.l.bf16 %v3760
    %v3938 = vunpack.c.h.bf16 %v3760
    %v3939 = vunpack.c.l.bf16 %v3761
    %v3940 = vunpack.c.h.bf16 %v3761
    %v3941 = vunpack.c.l.bf16 %v3762
    %v3942 = vunpack.c.h.bf16 %v3762
    %v3943 = vunpack.c.l.bf16 %v3763
    %v3944 = vunpack.c.h.bf16 %v3763
    %v3945 = vunpack.c.l.bf16 %v3764
    %v3946 = vunpack.c.h.bf16 %v3764
    %v3947 = vunpack.c.l.bf16 %v3765
    %v3948 = vunpack.c.h.bf16 %v3765
    %v3949 = vunpack.c.l.bf16 %v3766
    %v3950 = vunpack.c.h.bf16 %v3766
    %v3951 = vunpack.c.l.bf16 %v3767
    %v3952 = vunpack.c.h.bf16 %v3767
    %v3953 = vunpack.c.l.bf16 %v3768
    %v3954 = vunpack.c.h.bf16 %v3768
    %v3955 = vunpack.c.l.bf16 %v3769
    %v3956 = vunpack.c.h.bf16 %v3769
    %v3957 = vunpack.c.l.bf16 %v3770
    %v3958 = vunpack.c.h.bf16 %v3770
    %v3959 = vunpack.c.l.bf16 %v3771
    %v3960 = vunpack.c.h.bf16 %v3771
    %v3961 = vunpack.c.l.bf16 %v3772
    %v3962 = vunpack.c.h.bf16 %v3772
    %v3963 = vunpack.c.l.bf16 %v3773
    %v3964 = vunpack.c.h.bf16 %v3773
    %v3965 = vunpack.c.l.bf16 %v3774
    %v3966 = vunpack.c.h.bf16 %v3774
    %v3967 = vunpack.c.l.bf16 %v3775
    %v3968 = vunpack.c.h.bf16 %v3775
    %v3969 = vunpack.c.l.bf16 %v3776
    %v3970 = vunpack.c.h.bf16 %v3776
    %v3971 = vunpack.c.l.bf16 %v3777
    %v3972 = vunpack.c.h.bf16 %v3777
    %v3973 = vunpack.c.l.bf16 %v3778
    %v3974 = vunpack.c.h.bf16 %v3778
    %v3975 = vunpack.c.l.bf16 %v3779
    %v3976 = vunpack.c.h.bf16 %v3779
    %v3977 = vunpack.c.l.bf16 %v3780
    %v3978 = vunpack.c.h.bf16 %v3780
    %v3979 = vunpack.c.l.bf16 %v3781
    %v3980 = vunpack.c.h.bf16 %v3781
    %v3981 = vunpack.c.l.bf16 %v3782
    %v3982 = vunpack.c.h.bf16 %v3782
    %v3983 = vunpack.c.l.bf16 %v3783
    %v3984 = vunpack.c.h.bf16 %v3783
    %v3985 = vunpack.c.l.bf16 %v3784
    %v3986 = vunpack.c.h.bf16 %v3784
    %v3987 = vunpack.c.l.bf16 %v3785
    %v3988 = vunpack.c.h.bf16 %v3785
    %v3989 = vunpack.c.l.bf16 %v3786
    %v3990 = vunpack.c.h.bf16 %v3786
    %v3991 = vunpack.c.l.bf16 %v3787
    %v3992 = vunpack.c.h.bf16 %v3787
    %v3993 = vunpack.c.l.bf16 %v3788
    %v3994 = vunpack.c.h.bf16 %v3788
    %v3995 = vunpack.c.l.bf16 %v3789
    %v3996 = vunpack.c.h.bf16 %v3789
    %v3997 = vunpack.c.l.bf16 %v3790
    %v3998 = vunpack.c.h.bf16 %v3790
    %v3999 = vunpack.c.l.bf16 %v3791
    %v4000 = vunpack.c.h.bf16 %v3791
    %v4001 = vunpack.c.l.bf16 %v3792
    %v4002 = vunpack.c.h.bf16 %v3792
    %v4003 = vunpack.c.l.bf16 %v3793
    %v4004 = vunpack.c.h.bf16 %v3793
    %v4005 = vunpack.c.l.bf16 %v3794
    %v4006 = vunpack.c.h.bf16 %v3794
    %v4007 = vunpack.c.l.bf16 %v3795
    %v4008 = vunpack.c.h.bf16 %v3795
    %v4009 = vunpack.c.l.bf16 %v3796
    %v4010 = vunpack.c.h.bf16 %v3796
    %v4011 = vunpack.c.l.bf16 %v3797
    %v4012 = vunpack.c.h.bf16 %v3797
    %v4013 = vunpack.c.l.bf16 %v3798
    %v4014 = vunpack.c.h.bf16 %v3798
    %v4015 = vunpack.c.l.bf16 %v3799
    %v4016 = vunpack.c.h.bf16 %v3799
    %v4017 = vunpack.c.l.bf16 %v3800
    %v4018 = vunpack.c.h.bf16 %v3800
    %v4019 = vunpack.c.l.bf16 %v3801
    %v4020 = vunpack.c.h.bf16 %v3801
    %v4021 = vunpack.c.l.bf16 %v3802
    %v4022 = vunpack.c.h.bf16 %v3802
    %v4023 = vunpack.c.l.bf16 %v3803
    %v4024 = vunpack.c.h.bf16 %v3803
    %v4025 = vunpack.c.l.bf16 %v3804
    %v4026 = vunpack.c.h.bf16 %v3804
    %v4027 = vunpack.c.l.bf16 %v3805
    %v4028 = vunpack.c.h.bf16 %v3805
    %v4029 = vunpack.c.l.bf16 %v3806
    %v4030 = vunpack.c.h.bf16 %v3806
    %v4031 = vunpack.c.l.bf16 %v3807
    %v4032 = vunpack.c.h.bf16 %v3807
    %v4033 = vunpack.c.l.bf16 %v3808
    %v4034 = vunpack.c.h.bf16 %v3808
    %v4035 = vunpack.c.l.bf16 %v3809
    %v4036 = vunpack.c.h.bf16 %v3809
    %v4037 = vunpack.c.l.bf16 %v3810
    %v4038 = vunpack.c.h.bf16 %v3810
    %v4039 = vunpack.c.l.bf16 %v3811
    %v4040 = vunpack.c.h.bf16 %v3811
    %v4041 = vunpack.c.l.bf16 %v3812
    %v4042 = vunpack.c.h.bf16 %v3812
    %v4043 = vunpack.c.l.bf16 %v3813
    %v4044 = vunpack.c.h.bf16 %v3813
    %v4045 = vunpack.c.l.bf16 %v3814
    %v4046 = vunpack.c.h.bf16 %v3814
    %v4047 = vunpack.c.l.bf16 %v3815
    %v4048 = vunpack.c.h.bf16 %v3815
    %v4049 = vunpack.c.l.bf16 %v3816
    %v4050 = vunpack.c.h.bf16 %v3816
    %v4051 = vunpack.c.l.bf16 %v3817
    %v4052 = vunpack.c.h.bf16 %v3817
    %v4053 = vunpack.c.l.bf16 %v3818
    %v4054 = vunpack.c.h.bf16 %v3818
    %v4055 = vunpack.c.l.bf16 %v3819
    %v4056 = vunpack.c.h.bf16 %v3819
    %v4057 = vunpack.c.l.bf16 %v3820
    %v4058 = vunpack.c.h.bf16 %v3820
    %v4059 = vunpack.c.l.bf16 %v3821
    %v4060 = vunpack.c.h.bf16 %v3821
    %v4061 = vunpack.c.l.bf16 %v3822
    %v4062 = vunpack.c.h.bf16 %v3822
    %v4063 = vunpack.c.l.bf16 %v3823
    %v4064 = vunpack.c.h.bf16 %v3823
    %v4065 = vunpack.c.l.bf16 %v3824
    %v4066 = vunpack.c.h.bf16 %v3824
    %v4067 = vunpack.c.l.bf16 %v3825
    %v4068 = vunpack.c.h.bf16 %v3825
    %v4069 = vunpack.c.l.bf16 %v3826
    %v4070 = vunpack.c.h.bf16 %v3826
    %v4071 = vunpack.c.l.bf16 %v3827
    %v4072 = vunpack.c.h.bf16 %v3827
    %v4073 = vunpack.c.l.bf16 %v3828
    %v4074 = vunpack.c.h.bf16 %v3828
    %v4075 = vunpack.c.l.bf16 %v3829
    %v4076 = vunpack.c.h.bf16 %v3829
    %v4077 = vunpack.c.l.bf16 %v3830
    %v4078 = vunpack.c.h.bf16 %v3830
    %v4079 = vunpack.c.l.bf16 %v3831
    %v4080 = vunpack.c.h.bf16 %v3831
    %v4081 = vunpack.c.l.bf16 %v3832
    %v4082 = vunpack.c.h.bf16 %v3832
    %v4083 = vunpack.c.l.bf16 %v3833
    %v4084 = vunpack.c.h.bf16 %v3833
    %v4085 = vunpack.c.l.bf16 %v3834
    %v4086 = vunpack.c.h.bf16 %v3834
    %v4087 = vunpack.c.l.bf16 %v3835
    %v4088 = vunpack.c.h.bf16 %v3835
    %v4089 = vunpack.c.l.bf16 %v3836
    %v4090 = vunpack.c.h.bf16 %v3836
    %v4091 = vunpack.c.l.bf16 %v3837
    %v4092 = vunpack.c.h.bf16 %v3837
    %v4093 = vunpack.c.l.bf16 %v3838
    %v4094 = vunpack.c.h.bf16 %v3838
    %v4095 = vld [vmem:[#allocation14] sm:$0xf]
    %v4097 = vlaneseq
    %v4098 = vshrl.u32 %v4097, 7
    %v4099 = vsub.s32 0, %v4098
    %v4100 = vrot.slane %v4095, %v4099
    %v4101 = vlaneseq
    %v4102 = vshrl.u32 %v4101, 7
    %v4103 = vsub.s32 1, %v4102
    %v4104 = vrot.slane %v4095, %v4103
    %v4105 = vlaneseq
    %v4106 = vshrl.u32 %v4105, 7
    %v4107 = vsub.s32 2, %v4106
    %v4108 = vrot.slane %v4095, %v4107
    %v4109 = vlaneseq
    %v4110 = vshrl.u32 %v4109, 7
    %v4111 = vsub.s32 3, %v4110
    %v4112 = vrot.slane %v4095, %v4111
    %4117 = vmatprep.subr.mxu0 %v3840
    %4118 = vmatpush1.msra.mxu0 %v3839
    %4119 = vmatprep.subr.mxu0 %v3844
    %4120 = vmatpush1.msra.mxu0 %v3843
    %4121 = vmatprep.subr.mxu0 %v3848
    %4122 = vmatpush1.msra.mxu0 %v3847
    %4123 = vmatprep.subr.mxu0 %v3852
    %4124 = vmatpush1.msra.mxu0 %v3851
    %4125 = vmatprep.subr.mxu0 %v3856
    %4126 = vmatpush1.msra.mxu0 %v3855
    %4127 = vmatprep.subr.mxu0 %v3860
    %4128 = vmatpush1.msra.mxu0 %v3859
    %4129 = vmatprep.subr.mxu0 %v3864
    %4130 = vmatpush1.msra.mxu0 %v3863
    %4131 = vmatprep.subr.mxu0 %v3868
    %4132 = vmatpush1.msra.mxu0 %v3867
    %4133 = vmatprep.subr.mxu0 %v3872
    %4134 = vmatpush1.msra.mxu0 %v3871
    %4135 = vmatprep.subr.mxu0 %v3876
    %4136 = vmatpush1.msra.mxu0 %v3875
    %4137 = vmatprep.subr.mxu0 %v3880
    %4138 = vmatpush1.msra.mxu0 %v3879
    %4139 = vmatprep.subr.mxu0 %v3884
    %4140 = vmatpush1.msra.mxu0 %v3883
    %4141 = vmatprep.subr.mxu0 %v3888
    %4142 = vmatpush1.msra.mxu0 %v3887
    %4143 = vmatprep.subr.mxu0 %v3892
    %4144 = vmatpush1.msra.mxu0 %v3891
    %4145 = vmatprep.subr.mxu0 %v3896
    %4146 = vmatpush1.msra.mxu0 %v3895
    %4147 = vmatprep.subr.mxu0 %v3900
    %4148 = vmatpush1.msra.mxu0 %v3899
    %4149 = vmatprep.subr.mxu0 %v3904
    %4150 = vmatpush1.msra.mxu0 %v3903
    %4151 = vmatprep.subr.mxu0 %v3908
    %4152 = vmatpush1.msra.mxu0 %v3907
    %4153 = vmatprep.subr.mxu0 %v3912
    %4154 = vmatpush1.msra.mxu0 %v3911
    %4155 = vmatprep.subr.mxu0 %v3916
    %4156 = vmatpush1.msra.mxu0 %v3915
    %4157 = vmatprep.subr.mxu0 %v3920
    %4158 = vmatpush1.msra.mxu0 %v3919
    %4159 = vmatprep.subr.mxu0 %v3924
    %4160 = vmatpush1.msra.mxu0 %v3923
    %4161 = vmatprep.subr.mxu0 %v3928
    %4162 = vmatpush1.msra.mxu0 %v3927
    %4163 = vmatprep.subr.mxu0 %v3932
    %4164 = vmatpush1.msra.mxu0 %v3931
    %4165 = vmatprep.subr.mxu0 %v3936
    %4166 = vmatpush1.msra.mxu0 %v3935
    %4167 = vmatprep.subr.mxu0 %v3940
    %4168 = vmatpush1.msra.mxu0 %v3939
    %4169 = vmatprep.subr.mxu0 %v3944
    %4170 = vmatpush1.msra.mxu0 %v3943
    %4171 = vmatprep.subr.mxu0 %v3948
    %4172 = vmatpush1.msra.mxu0 %v3947
    %4173 = vmatprep.subr.mxu0 %v3952
    %4174 = vmatpush1.msra.mxu0 %v3951
    %4175 = vmatprep.subr.mxu0 %v3956
    %4176 = vmatpush1.msra.mxu0 %v3955
    %4177 = vmatprep.subr.mxu0 %v3960
    %4178 = vmatpush1.msra.mxu0 %v3959
    %4179 = vmatprep.subr.mxu0 %v3964
    %4180 = vmatpush1.msra.mxu0 %v3963
    %4181 = vmatprep.mubr.f32.mxu0 %v3708
    %4182 = vmatmul.mubr.f32.gmra.mrb[0].mxu0 %v3707
    %v4183 = vpop.f32.mrb[0].mxu0
    %v4184 = vadd.f32 %v4100, %v4183
    %v4185 = vpop.f32.mrb[0].mxu0
    %v4186 = vadd.f32 %v4104, %v4185
    %4187 = vdwg.mxu0
    %4188 = vmatprep.subr.mxu0 %v3968
    %4189 = vmatpush1.msra.mxu0 %v3967
    %4190 = vmatprep.subr.mxu0 %v3972
    %4191 = vmatpush1.msra.mxu0 %v3971
    %4192 = vmatprep.subr.mxu0 %v3976
    %4193 = vmatpush1.msra.mxu0 %v3975
    %4194 = vmatprep.subr.mxu0 %v3980
    %4195 = vmatpush1.msra.mxu0 %v3979
    %4196 = vmatprep.subr.mxu0 %v3984
    %4197 = vmatpush1.msra.mxu0 %v3983
    %4198 = vmatprep.subr.mxu0 %v3988
    %4199 = vmatpush1.msra.mxu0 %v3987
    %4200 = vmatprep.subr.mxu0 %v3992
    %4201 = vmatpush1.msra.mxu0 %v3991
    %4202 = vmatprep.subr.mxu0 %v3996
    %4203 = vmatpush1.msra.mxu0 %v3995
    %4204 = vmatprep.subr.mxu0 %v4000
    %4205 = vmatpush1.msra.mxu0 %v3999
    %4206 = vmatprep.subr.mxu0 %v4004
    %4207 = vmatpush1.msra.mxu0 %v4003
    %4208 = vmatprep.subr.mxu0 %v4008
    %4209 = vmatpush1.msra.mxu0 %v4007
    %4210 = vmatprep.subr.mxu0 %v4012
    %4211 = vmatpush1.msra.mxu0 %v4011
    %4212 = vmatprep.subr.mxu0 %v4016
    %4213 = vmatpush1.msra.mxu0 %v4015
    %4214 = vmatprep.subr.mxu0 %v4020
    %4215 = vmatpush1.msra.mxu0 %v4019
    %4216 = vmatprep.subr.mxu0 %v4024
    %4217 = vmatpush1.msra.mxu0 %v4023
    %4218 = vmatprep.subr.mxu0 %v4028
    %4219 = vmatpush1.msra.mxu0 %v4027
    %4220 = vmatprep.subr.mxu0 %v4032
    %4221 = vmatpush1.msra.mxu0 %v4031
    %4222 = vmatprep.subr.mxu0 %v4036
    %4223 = vmatpush1.msra.mxu0 %v4035
    %4224 = vmatprep.subr.mxu0 %v4040
    %4225 = vmatpush1.msra.mxu0 %v4039
    %4226 = vmatprep.subr.mxu0 %v4044
    %4227 = vmatpush1.msra.mxu0 %v4043
    %4228 = vmatprep.subr.mxu0 %v4048
    %4229 = vmatpush1.msra.mxu0 %v4047
    %4230 = vmatprep.subr.mxu0 %v4052
    %4231 = vmatpush1.msra.mxu0 %v4051
    %4232 = vmatprep.subr.mxu0 %v4056
    %4233 = vmatpush1.msra.mxu0 %v4055
    %4234 = vmatprep.subr.mxu0 %v4060
    %4235 = vmatpush1.msra.mxu0 %v4059
    %4236 = vmatprep.subr.mxu0 %v4064
    %4237 = vmatpush1.msra.mxu0 %v4063
    %4238 = vmatprep.subr.mxu0 %v4068
    %4239 = vmatpush1.msra.mxu0 %v4067
    %4240 = vmatprep.subr.mxu0 %v4072
    %4241 = vmatpush1.msra.mxu0 %v4071
    %4242 = vmatprep.subr.mxu0 %v4076
    %4243 = vmatpush1.msra.mxu0 %v4075
    %4244 = vmatprep.subr.mxu0 %v4080
    %4245 = vmatpush1.msra.mxu0 %v4079
    %4246 = vmatprep.subr.mxu0 %v4084
    %4247 = vmatpush1.msra.mxu0 %v4083
    %4248 = vmatprep.subr.mxu0 %v4088
    %4249 = vmatpush1.msra.mxu0 %v4087
    %4250 = vmatprep.subr.mxu0 %v4092
    %4251 = vmatpush1.msra.mxu0 %v4091
    %4252 = vmatprep.mubr.f32.mxu0 %v3710
    %4253 = vmatmul.mubr.f32.gmra.mrb[0].mxu0 %v3709
    %v4254 = vpop.f32.mrb[0].mxu0
    %v4255 = vadd.f32 %v4184, %v4254
    %v4256 = vpop.f32.mrb[0].mxu0
    %v4257 = vadd.f32 %v4186, %v4256
    %4258 = vdwg.mxu0
    %4259 = vmatprep.subr.mxu0 %v3842
    %4260 = vmatpush1.msra.mxu0 %v3841
    %4261 = vmatprep.subr.mxu0 %v3846
    %4262 = vmatpush1.msra.mxu0 %v3845
    %4263 = vmatprep.subr.mxu0 %v3850
    %4264 = vmatpush1.msra.mxu0 %v3849
    %4265 = vmatprep.subr.mxu0 %v3854
    %4266 = vmatpush1.msra.mxu0 %v3853
    %4267 = vmatprep.subr.mxu0 %v3858
    %4268 = vmatpush1.msra.mxu0 %v3857
    %4269 = vmatprep.subr.mxu0 %v3862
    %4270 = vmatpush1.msra.mxu0 %v3861
    %4271 = vmatprep.subr.mxu0 %v3866
    %4272 = vmatpush1.msra.mxu0 %v3865
    %4273 = vmatprep.subr.mxu0 %v3870
    %4274 = vmatpush1.msra.mxu0 %v3869
    %4275 = vmatprep.subr.mxu0 %v3874
    %4276 = vmatpush1.msra.mxu0 %v3873
    %4277 = vmatprep.subr.mxu0 %v3878
    %4278 = vmatpush1.msra.mxu0 %v3877
    %4279 = vmatprep.subr.mxu0 %v3882
    %4280 = vmatpush1.msra.mxu0 %v3881
    %4281 = vmatprep.subr.mxu0 %v3886
    %4282 = vmatpush1.msra.mxu0 %v3885
    %4283 = vmatprep.subr.mxu0 %v3890
    %4284 = vmatpush1.msra.mxu0 %v3889
    %4285 = vmatprep.subr.mxu0 %v3894
    %4286 = vmatpush1.msra.mxu0 %v3893
    %4287 = vmatprep.subr.mxu0 %v3898
    %4288 = vmatpush1.msra.mxu0 %v3897
    %4289 = vmatprep.subr.mxu0 %v3902
    %4290 = vmatpush1.msra.mxu0 %v3901
    %4291 = vmatprep.subr.mxu0 %v3906
    %4292 = vmatpush1.msra.mxu0 %v3905
    %4293 = vmatprep.subr.mxu0 %v3910
    %4294 = vmatpush1.msra.mxu0 %v3909
    %4295 = vmatprep.subr.mxu0 %v3914
    %4296 = vmatpush1.msra.mxu0 %v3913
    %4297 = vmatprep.subr.mxu0 %v3918
    %4298 = vmatpush1.msra.mxu0 %v3917
    %4299 = vmatprep.subr.mxu0 %v3922
    %4300 = vmatpush1.msra.mxu0 %v3921
    %4301 = vmatprep.subr.mxu0 %v3926
    %4302 = vmatpush1.msra.mxu0 %v3925
    %4303 = vmatprep.subr.mxu0 %v3930
    %4304 = vmatpush1.msra.mxu0 %v3929
    %4305 = vmatprep.subr.mxu0 %v3934
    %4306 = vmatpush1.msra.mxu0 %v3933
    %4307 = vmatprep.subr.mxu0 %v3938
    %4308 = vmatpush1.msra.mxu0 %v3937
    %4309 = vmatprep.subr.mxu0 %v3942
    %4310 = vmatpush1.msra.mxu0 %v3941
    %4311 = vmatprep.subr.mxu0 %v3946
    %4312 = vmatpush1.msra.mxu0 %v3945
    %4313 = vmatprep.subr.mxu0 %v3950
    %4314 = vmatpush1.msra.mxu0 %v3949
    %4315 = vmatprep.subr.mxu0 %v3954
    %4316 = vmatpush1.msra.mxu0 %v3953
    %4317 = vmatprep.subr.mxu0 %v3958
    %4318 = vmatpush1.msra.mxu0 %v3957
    %4319 = vmatprep.subr.mxu0 %v3962
    %4320 = vmatpush1.msra.mxu0 %v3961
    %4321 = vmatprep.subr.mxu0 %v3966
    %4322 = vmatpush1.msra.mxu0 %v3965
    %4323 = vmatprep.mubr.f32.mxu0 %v3708
    %4324 = vmatmul.mubr.f32.gmra.mrb[0].mxu0 %v3707
    %v4325 = vpop.f32.mrb[0].mxu0
    %v4326 = vadd.f32 %v4108, %v4325
    %v4327 = vpop.f32.mrb[0].mxu0
    %v4328 = vadd.f32 %v4112, %v4327
    %4329 = vdwg.mxu0
    %4330 = vmatprep.subr.mxu0 %v3970
    %4331 = vmatpush1.msra.mxu0 %v3969
    %4332 = vmatprep.subr.mxu0 %v3974
    %4333 = vmatpush1.msra.mxu0 %v3973
    %4334 = vmatprep.subr.mxu0 %v3978
    %4335 = vmatpush1.msra.mxu0 %v3977
    %4336 = vmatprep.subr.mxu0 %v3982
    %4337 = vmatpush1.msra.mxu0 %v3981
    %4338 = vmatprep.subr.mxu0 %v3986
    %4339 = vmatpush1.msra.mxu0 %v3985
    %4340 = vmatprep.subr.mxu0 %v3990
    %4341 = vmatpush1.msra.mxu0 %v3989
    %4342 = vmatprep.subr.mxu0 %v3994
    %4343 = vmatpush1.msra.mxu0 %v3993
    %4344 = vmatprep.subr.mxu0 %v3998
    %4345 = vmatpush1.msra.mxu0 %v3997
    %4346 = vmatprep.subr.mxu0 %v4002
    %4347 = vmatpush1.msra.mxu0 %v4001
    %4348 = vmatprep.subr.mxu0 %v4006
    %4349 = vmatpush1.msra.mxu0 %v4005
    %4350 = vmatprep.subr.mxu0 %v4010
    %4351 = vmatpush1.msra.mxu0 %v4009
    %4352 = vmatprep.subr.mxu0 %v4014
    %4353 = vmatpush1.msra.mxu0 %v4013
    %4354 = vmatprep.subr.mxu0 %v4018
    %4355 = vmatpush1.msra.mxu0 %v4017
    %4356 = vmatprep.subr.mxu0 %v4022
    %4357 = vmatpush1.msra.mxu0 %v4021
    %4358 = vmatprep.subr.mxu0 %v4026
    %4359 = vmatpush1.msra.mxu0 %v4025
    %4360 = vmatprep.subr.mxu0 %v4030
    %4361 = vmatpush1.msra.mxu0 %v4029
    %4362 = vmatprep.subr.mxu0 %v4034
    %4363 = vmatpush1.msra.mxu0 %v4033
    %4364 = vmatprep.subr.mxu0 %v4038
    %4365 = vmatpush1.msra.mxu0 %v4037
    %4366 = vmatprep.subr.mxu0 %v4042
    %4367 = vmatpush1.msra.mxu0 %v4041
    %4368 = vmatprep.subr.mxu0 %v4046
    %4369 = vmatpush1.msra.mxu0 %v4045
    %4370 = vmatprep.subr.mxu0 %v4050
    %4371 = vmatpush1.msra.mxu0 %v4049
    %4372 = vmatprep.subr.mxu0 %v4054
    %4373 = vmatpush1.msra.mxu0 %v4053
    %4374 = vmatprep.subr.mxu0 %v4058
    %4375 = vmatpush1.msra.mxu0 %v4057
    %4376 = vmatprep.subr.mxu0 %v4062
    %4377 = vmatpush1.msra.mxu0 %v4061
    %4378 = vmatprep.subr.mxu0 %v4066
    %4379 = vmatpush1.msra.mxu0 %v4065
    %4380 = vmatprep.subr.mxu0 %v4070
    %4381 = vmatpush1.msra.mxu0 %v4069
    %4382 = vmatprep.subr.mxu0 %v4074
    %4383 = vmatpush1.msra.mxu0 %v4073
    %4384 = vmatprep.subr.mxu0 %v4078
    %4385 = vmatpush1.msra.mxu0 %v4077
    %4386 = vmatprep.subr.mxu0 %v4082
    %4387 = vmatpush1.msra.mxu0 %v4081
    %4388 = vmatprep.subr.mxu0 %v4086
    %4389 = vmatpush1.msra.mxu0 %v4085
    %4390 = vmatprep.subr.mxu0 %v4090
    %4391 = vmatpush1.msra.mxu0 %v4089
    %4392 = vmatprep.subr.mxu0 %v4094
    %4393 = vmatpush1.msra.mxu0 %v4093
    %4394 = vmatprep.mubr.f32.mxu0 %v3710
    %4395 = vmatmul.mubr.f32.gmra.mrb[0].mxu0 %v3709
    %v4396 = vpop.f32.mrb[0].mxu0
    %v4397 = vadd.f32 %v4326, %v4396
    %v4398 = vpop.f32.mrb[0].mxu0
    %v4399 = vadd.f32 %v4328, %v4398
    %4400 = vdwg.mxu0
    %v4401 = vld [vmem:[#allocation16] sm:$0xf]
    %v4403 = vlaneseq
    %v4404 = vshrl.u32 %v4403, 7
    %v4405 = vsub.s32 0, %v4404
    %v4406 = vrot.slane %v4401, %v4405
    %v4407 = vlaneseq
    %v4408 = vshrl.u32 %v4407, 7
    %v4409 = vsub.s32 1, %v4408
    %v4410 = vrot.slane %v4401, %v4409
    %v4411 = vlaneseq
    %v4412 = vshrl.u32 %v4411, 7
    %v4413 = vsub.s32 2, %v4412
    %v4414 = vrot.slane %v4401, %v4413
    %v4415 = vlaneseq
    %v4416 = vshrl.u32 %v4415, 7
    %v4417 = vsub.s32 3, %v4416
    %v4418 = vrot.slane %v4401, %v4417
    %v4423 = vmul.f32 %v4255, %v4406
    %v4424 = vmul.f32 %v4257, %v4410
    %v4425 = vmul.f32 %v4397, %v4414
    %v4426 = vmul.f32 %v4399, %v4418
    %vm4427 = vcmask 1041408
    %v4428 = vsel %vm4427, %v4423, 0.0
    %v4429 = vsel %vm4427, %v4424, 0.0
    %v4430 = vadd.f32 %v4428, %v4429
    %v4431 = vsel %vm4427, %v4425, 0.0
    %v4432 = vadd.f32 %v4430, %v4431
    %v4433 = vsel %vm4427, %v4426, 0.0
    %v4434 = vadd.f32 %v4432, %v4433
    %4435 = vadd.xlane.f32.xlu0 %v4434
    %v4436 = vpop.xlane.xlu0 %4435
    %v4437 = vld [vmem:[#allocation2] sm:$0x1]
    %v4439 = vlaneseq
    %v4440 = vshrl.u32 %v4439, 7
    %v4441 = vsub.s32 0, %v4440
    %v4442 = vrot.slane %v4437, %v4441
    %v4444 = vadd.f32 %v4436, %v4442
    %vm4445 = vcmask 1024
    %4446 = vst.msk [vmem:[%s10] sm:$0x3] %vm4445, %v4444
    // Predicated region
    $region78: #{tpu_custom_call.1} parent=1 // pred_check
      _
    $region79: #{tpu_custom_call.1} parent=1 // pred_check_branch
      %4448 = sbr.rel (0) target = $region81
    $region80: #{tpu_custom_call.1} parent=1 // pred_region
      _
    $region81: #{tpu_custom_call.1} parent=1 // pred_fallthru
      _
    // Predicated region
    $region82: #{tpu_custom_call.1} parent=1 // pred_check
      _
    $region83: #{tpu_custom_call.1} parent=1 // pred_check_branch
      %4450 = sbr.rel (0) target = $region85
    $region84: #{tpu_custom_call.1} parent=1 // pred_region
      _
    $region85: #{tpu_custom_call.1} parent=1 // pred_fallthru
      _
    %4451 = vsyncpa [#allocation4], 1
    %4452 = vsyncpa [#allocation6], 1
    %4453 = vsyncpa [#allocation9], 1
    %4454 = vsyncpa [#allocation12], 1
    %4455 = vsyncpa [#allocation15], 1

</llo_original>
